<compile_context>
chip_gen: v6e
topology: v6e:2x2x1
jax: 0.10.0
libtpu: 0.0.40
codegen_flags: <defaults>
</compile_context>

<pallas_src>
import functools

import jax
import jax.numpy as jnp
import numpy as np
from jax.experimental import pallas as pl
from jax.experimental.pallas import tpu as pltpu


def _conv_kernel(x_ref, w_ref, b_ref, o_ref, patches_ref, *, K, stride, Cin,
                 Ho, Wo):
    # x_ref:       (1, Cin, Hp, Wp)   padded (and upsampled) input tile (NCHW)
    # w_ref:       (Cout, K*K*Cin)    weight, (kh, kw, ci) contraction order
    # b_ref:       (Cout, 1)          bias
    # o_ref:       (1, Cout, Ho*Wo)   lane-dense NCHW output tile
    # patches_ref: (K*K*Cin, Ho*Wo)   im2col scratch (VMEM)
    x = x_ref[0]                                              # (Cin, Hp, Wp)

    # im2col: one (Cin, Ho*Wo) slab per filter tap, stacked along sublanes.
    for kh in range(K):
        for kw in range(K):
            patch = x[:, kh:kh + Ho * stride:stride,
                        kw:kw + Wo * stride:stride]           # (Cin, Ho, Wo)
            patches_ref[pl.ds((kh * K + kw) * Cin, Cin), :] = (
                patch.reshape(Cin, Ho * Wo))

    # Single MXU contraction over all taps * input channels, f32 accumulate.
    acc = jnp.dot(w_ref[...], patches_ref[...],
                  preferred_element_type=jnp.float32)         # (Cout, Ho*Wo)
    acc += b_ref[...].astype(jnp.float32)                     # lane broadcast
    o_ref[0] = acc.astype(o_ref.dtype)


def _pad_upsample_indices(size, upsample, pad):
    """Padded/upsampled coordinate -> source coordinate (nearest + reflect)."""
    u = upsample if upsample else 1
    up = size * u
    assert pad <= up - 1, "reflection pad must be smaller than upsampled size"
    idx = np.arange(up + 2 * pad) - pad
    idx = np.abs(idx)                                    # reflect left edge
    idx = np.where(idx >= up, 2 * (up - 1) - idx, idx)   # reflect right edge
    return (idx // u).astype(np.int32)


def upsample_conv_layer(x_nchw, weight_oihw, bias, *, kernel_size, stride,
                        upsample=None):
    """Forward pass of UpsampleConvLayer. x: (N, Cin, H, W) -> (N, Cout, Ho, Wo)."""
    N, Cin, H, W = x_nchw.shape
    Cout = weight_oihw.shape[0]
    K = kernel_size
    pad = K // 2

    # --- fused nearest-upsample + reflection-pad as ONE static gather ---
    row_idx = _pad_upsample_indices(H, upsample, pad)
    col_idx = _pad_upsample_indices(W, upsample, pad)
    if upsample or pad > 0:
        x_pad = x_nchw[:, :, row_idx[:, None], col_idx[None, :]]
    else:
        x_pad = x_nchw
    _, _, Hp, Wp = x_pad.shape
    Ho = (Hp - K) // stride + 1
    Wo = (Wp - K) // stride + 1

    # Weight: OIHW -> (Cout, K*K*Cin) with (kh, kw, ci) contraction ordering.
    w_flat = jnp.transpose(weight_oihw, (0, 2, 3, 1)).reshape(Cout, K * K * Cin)
    b_2d = bias.reshape(Cout, 1)

    kernel = functools.partial(_conv_kernel, K=K, stride=stride, Cin=Cin,
                               Ho=Ho, Wo=Wo)

    out_flat = pl.pallas_call(
        kernel,
        out_shape=jax.ShapeDtypeStruct((N, Cout, Ho * Wo), x_pad.dtype),
        grid_spec=pltpu.PrefetchScalarGridSpec(
            num_scalar_prefetch=0,
            grid=(N,),
            in_specs=[
                pl.BlockSpec((1, Cin, Hp, Wp), lambda n: (n, 0, 0, 0)),
                pl.BlockSpec((Cout, K * K * Cin), lambda n: (0, 0)),
                pl.BlockSpec((Cout, 1), lambda n: (0, 0)),
            ],
            out_specs=pl.BlockSpec((1, Cout, Ho * Wo), lambda n: (n, 0, 0)),
            scratch_shapes=[pltpu.VMEM((K * K * Cin, Ho * Wo), x_pad.dtype)],
        ),
        compiler_params=pltpu.CompilerParams(
            dimension_semantics=("parallel",)),
    )(x_pad, w_flat, b_2d)

    # Contiguous (free) reshape back to the NCHW spatial layout.
    return out_flat.reshape(N, Cout, Ho, Wo)


def _reference(x_nchw, weight_oihw, bias, *, kernel_size, stride, upsample):
    """Pure-JAX reference (lax.conv) for correctness checking."""
    pad = kernel_size // 2
    x = x_nchw
    if upsample:
        x = jnp.repeat(x, upsample, axis=2)
        x = jnp.repeat(x, upsample, axis=3)
    x = jnp.pad(x, ((0, 0), (0, 0), (pad, pad), (pad, pad)), mode="reflect")
    out = jax.lax.conv_general_dilated(
        x, weight_oihw, window_strides=(stride, stride), padding="VALID",
        dimension_numbers=("NCHW", "OIHW", "NCHW"))
    return out + bias.reshape(1, -1, 1, 1)


if __name__ == "__main__":
    # Module config (small, synthetic): in_ch=4, out_ch=8, kernel=3, stride=1, upsample=2
    in_channels, out_channels = 4, 8
    kernel_size, stride, upsample = 3, 1, 2

    key = jax.random.PRNGKey(0)
    kx, kw, kb = jax.random.split(key, 3)

    # Input: NCHW, batch=2, 4 channels, 16x16 spatial.
    x = jax.random.normal(kx, (2, in_channels, 16, 16), dtype=jnp.float32)

    # Deterministic Conv2d parameter init (OIHW weight, (O,) bias).
    fan_in = in_channels * kernel_size * kernel_size
    bound = 1.0 / np.sqrt(fan_in)
    weight = jax.random.uniform(kw, (out_channels, in_channels, kernel_size, kernel_size),
                                minval=-bound, maxval=bound, dtype=jnp.float32)
    bias = jax.random.uniform(kb, (out_channels,), minval=-bound, maxval=bound,
                              dtype=jnp.float32)

    out = upsample_conv_layer(x, weight, bias, kernel_size=kernel_size,
                              stride=stride, upsample=upsample)
    out = jax.block_until_ready(out)

    ref = _reference(x, weight, bias, kernel_size=kernel_size, stride=stride,
                     upsample=upsample)
    ref = jax.block_until_ready(ref)

    assert out.shape == ref.shape == (2, out_channels, 32, 32), out.shape
    np.testing.assert_allclose(np.asarray(out), np.asarray(ref), atol=1e-5, rtol=1e-5)

    print("KERNEL_OK")
</pallas_src>

<mosaic_0001>
module attributes {stable_mosaic.version = 11 : i64} {
  func.func @_conv_kernel(%arg0: i32, %arg1: memref<1x4x34x34xf32, #tpu.memory_space<vmem>>, %arg2: memref<8x36xf32, #tpu.memory_space<vmem>>, %arg3: memref<8x1xf32, #tpu.memory_space<vmem>>, %arg4: memref<1x8x1024xf32, #tpu.memory_space<vmem>>, %arg5: memref<36x1024xf32, #tpu.memory_space<vmem>>) attributes {dimension_semantics = [#tpu.dimension_semantics<parallel>], iteration_bounds = array<i64: 2>, scalar_prefetch = 0 : i64, scratch_operands = 1 : i64, tpu.core_type = #tpu.core_type<tc>, window_params = [{transform_indices = @transform_0, window_bounds = array<i64: 1, 4, 34, 34>}, {pipeline_mode = #tpu.pipeline_mode<synchronous>, transform_indices = @transform_1, window_bounds = array<i64: 8, 36>}, {pipeline_mode = #tpu.pipeline_mode<synchronous>, transform_indices = @transform_2, window_bounds = array<i64: 8, 1>}, {transform_indices = @transform_3, window_bounds = array<i64: 1, 8, 1024>}]} {
    %c0 = arith.constant 0 : index
    %c0_0 = arith.constant 0 : index
    %c0_1 = arith.constant 0 : index
    %c0_2 = arith.constant 0 : index
    %0 = vector.load %arg1[%c0, %c0_0, %c0_1, %c0_2] : memref<1x4x34x34xf32, #tpu.memory_space<vmem>>, vector<1x4x34x34xf32>
    %1 = vector.shape_cast %0 : vector<1x4x34x34xf32> to vector<4x34x34xf32>
    %2 = vector.extract_strided_slice %1 {offsets = [0, 0, 0], sizes = [4, 32, 32], strides = [1, 1, 1]} : vector<4x34x34xf32> to vector<4x32x32xf32>
    %3 = vector.shape_cast %2 : vector<4x32x32xf32> to vector<4x1024xf32>
    %c0_3 = arith.constant 0 : index
    %c0_4 = arith.constant 0 : index
    %4 = vector.load %arg5[%c0_3, %c0_4] : memref<36x1024xf32, #tpu.memory_space<vmem>>, vector<4x1024xf32>
    tpu.vector_store %arg5[%c0_3, %c0_4], %3 {strides = array<i32>} : memref<36x1024xf32, #tpu.memory_space<vmem>>, vector<4x1024xf32>,
    %5 = vector.extract_strided_slice %1 {offsets = [0, 0, 1], sizes = [4, 32, 32], strides = [1, 1, 1]} : vector<4x34x34xf32> to vector<4x32x32xf32>
    %6 = vector.shape_cast %5 : vector<4x32x32xf32> to vector<4x1024xf32>
    %c4 = arith.constant 4 : index
    %c0_5 = arith.constant 0 : index
    %7 = vector.load %arg5[%c4, %c0_5] : memref<36x1024xf32, #tpu.memory_space<vmem>>, vector<4x1024xf32>
    tpu.vector_store %arg5[%c4, %c0_5], %6 {strides = array<i32>} : memref<36x1024xf32, #tpu.memory_space<vmem>>, vector<4x1024xf32>,
    %8 = vector.extract_strided_slice %1 {offsets = [0, 0, 2], sizes = [4, 32, 32], strides = [1, 1, 1]} : vector<4x34x34xf32> to vector<4x32x32xf32>
    %9 = vector.shape_cast %8 : vector<4x32x32xf32> to vector<4x1024xf32>
    %c8 = arith.constant 8 : index
    %c0_6 = arith.constant 0 : index
    %10 = vector.load %arg5[%c8, %c0_6] : memref<36x1024xf32, #tpu.memory_space<vmem>>, vector<4x1024xf32>
    tpu.vector_store %arg5[%c8, %c0_6], %9 {strides = array<i32>} : memref<36x1024xf32, #tpu.memory_space<vmem>>, vector<4x1024xf32>,
    %11 = vector.extract_strided_slice %1 {offsets = [0, 1, 0], sizes = [4, 32, 32], strides = [1, 1, 1]} : vector<4x34x34xf32> to vector<4x32x32xf32>
    %12 = vector.shape_cast %11 : vector<4x32x32xf32> to vector<4x1024xf32>
    %c12 = arith.constant 12 : index
    %c0_7 = arith.constant 0 : index
    %13 = vector.load %arg5[%c12, %c0_7] : memref<36x1024xf32, #tpu.memory_space<vmem>>, vector<4x1024xf32>
    tpu.vector_store %arg5[%c12, %c0_7], %12 {strides = array<i32>} : memref<36x1024xf32, #tpu.memory_space<vmem>>, vector<4x1024xf32>,
    %14 = vector.extract_strided_slice %1 {offsets = [0, 1, 1], sizes = [4, 32, 32], strides = [1, 1, 1]} : vector<4x34x34xf32> to vector<4x32x32xf32>
    %15 = vector.shape_cast %14 : vector<4x32x32xf32> to vector<4x1024xf32>
    %c16 = arith.constant 16 : index
    %c0_8 = arith.constant 0 : index
    %16 = vector.load %arg5[%c16, %c0_8] : memref<36x1024xf32, #tpu.memory_space<vmem>>, vector<4x1024xf32>
    tpu.vector_store %arg5[%c16, %c0_8], %15 {strides = array<i32>} : memref<36x1024xf32, #tpu.memory_space<vmem>>, vector<4x1024xf32>,
    %17 = vector.extract_strided_slice %1 {offsets = [0, 1, 2], sizes = [4, 32, 32], strides = [1, 1, 1]} : vector<4x34x34xf32> to vector<4x32x32xf32>
    %18 = vector.shape_cast %17 : vector<4x32x32xf32> to vector<4x1024xf32>
    %c20 = arith.constant 20 : index
    %c0_9 = arith.constant 0 : index
    %19 = vector.load %arg5[%c20, %c0_9] : memref<36x1024xf32, #tpu.memory_space<vmem>>, vector<4x1024xf32>
    tpu.vector_store %arg5[%c20, %c0_9], %18 {strides = array<i32>} : memref<36x1024xf32, #tpu.memory_space<vmem>>, vector<4x1024xf32>,
    %20 = vector.extract_strided_slice %1 {offsets = [0, 2, 0], sizes = [4, 32, 32], strides = [1, 1, 1]} : vector<4x34x34xf32> to vector<4x32x32xf32>
    %21 = vector.shape_cast %20 : vector<4x32x32xf32> to vector<4x1024xf32>
    %c24 = arith.constant 24 : index
    %c0_10 = arith.constant 0 : index
    %22 = vector.load %arg5[%c24, %c0_10] : memref<36x1024xf32, #tpu.memory_space<vmem>>, vector<4x1024xf32>
    tpu.vector_store %arg5[%c24, %c0_10], %21 {strides = array<i32>} : memref<36x1024xf32, #tpu.memory_space<vmem>>, vector<4x1024xf32>,
    %23 = vector.extract_strided_slice %1 {offsets = [0, 2, 1], sizes = [4, 32, 32], strides = [1, 1, 1]} : vector<4x34x34xf32> to vector<4x32x32xf32>
    %24 = vector.shape_cast %23 : vector<4x32x32xf32> to vector<4x1024xf32>
    %c28 = arith.constant 28 : index
    %c0_11 = arith.constant 0 : index
    %25 = vector.load %arg5[%c28, %c0_11] : memref<36x1024xf32, #tpu.memory_space<vmem>>, vector<4x1024xf32>
    tpu.vector_store %arg5[%c28, %c0_11], %24 {strides = array<i32>} : memref<36x1024xf32, #tpu.memory_space<vmem>>, vector<4x1024xf32>,
    %26 = vector.extract_strided_slice %1 {offsets = [0, 2, 2], sizes = [4, 32, 32], strides = [1, 1, 1]} : vector<4x34x34xf32> to vector<4x32x32xf32>
    %27 = vector.shape_cast %26 : vector<4x32x32xf32> to vector<4x1024xf32>
    %c32 = arith.constant 32 : index
    %c0_12 = arith.constant 0 : index
    %28 = vector.load %arg5[%c32, %c0_12] : memref<36x1024xf32, #tpu.memory_space<vmem>>, vector<4x1024xf32>
    tpu.vector_store %arg5[%c32, %c0_12], %27 {strides = array<i32>} : memref<36x1024xf32, #tpu.memory_space<vmem>>, vector<4x1024xf32>,
    %c0_13 = arith.constant 0 : index
    %c0_14 = arith.constant 0 : index
    %29 = vector.load %arg2[%c0_13, %c0_14] : memref<8x36xf32, #tpu.memory_space<vmem>>, vector<8x36xf32>
    %c0_15 = arith.constant 0 : index
    %c0_16 = arith.constant 0 : index
    %30 = vector.load %arg5[%c0_15, %c0_16] : memref<36x1024xf32, #tpu.memory_space<vmem>>, vector<36x1024xf32>
    %cst = arith.constant dense<0.000000e+00> : vector<8x1024xf32>
    %31 = tpu.matmul %29, %30, %cst {dimension_numbers = #tpu.dot_dimension_numbers<[1], [0], [0], [1], [0, 0, 1, 1], [], []>} : vector<8x36xf32>, vector<36x1024xf32>, vector<8x1024xf32> -> vector<8x1024xf32>
    %c0_17 = arith.constant 0 : index
    %c0_18 = arith.constant 0 : index
    %32 = vector.load %arg3[%c0_17, %c0_18] : memref<8x1xf32, #tpu.memory_space<vmem>>, vector<8x1xf32>
    %33 = vector.broadcast %32 : vector<8x1xf32> to vector<8x1024xf32>
    %34 = arith.addf %31, %33 : vector<8x1024xf32>
    %c0_19 = arith.constant 0 : index
    %c0_20 = arith.constant 0 : index
    %c0_21 = arith.constant 0 : index
    %35 = vector.load %arg4[%c0_19, %c0_20, %c0_21] : memref<1x8x1024xf32, #tpu.memory_space<vmem>>, vector<1x8x1024xf32>
    %36 = vector.shape_cast %35 : vector<1x8x1024xf32> to vector<8x1024xf32>
    %37 = vector.shape_cast %34 : vector<8x1024xf32> to vector<1x8x1024xf32>
    tpu.vector_store %arg4[%c0_19, %c0_20, %c0_21], %37 {strides = array<i32>} : memref<1x8x1024xf32, #tpu.memory_space<vmem>>, vector<1x8x1024xf32>,
    return
  }
  func.func @transform_0(%arg0: i32) -> (i32, i32, i32, i32) {
    %c0_i32 = arith.constant 0 : i32
    %c0_i32_0 = arith.constant 0 : i32
    %c0_i32_1 = arith.constant 0 : i32
    %c0_i32_2 = arith.constant 0 : i32
    return %arg0, %c0_i32, %c0_i32_0, %c0_i32_1 : i32, i32, i32, i32
  }
  func.func @transform_1(%arg0: i32) -> (i32, i32) {
    %c0_i32 = arith.constant 0 : i32
    %c0_i32_0 = arith.constant 0 : i32
    %c0_i32_1 = arith.constant 0 : i32
    return %c0_i32, %c0_i32_0 : i32, i32
  }
  func.func @transform_2(%arg0: i32) -> (i32, i32) {
    %c0_i32 = arith.constant 0 : i32
    %c0_i32_0 = arith.constant 0 : i32
    %c0_i32_1 = arith.constant 0 : i32
    return %c0_i32, %c0_i32_0 : i32, i32
  }
  func.func @transform_3(%arg0: i32) -> (i32, i32, i32) {
    %c0_i32 = arith.constant 0 : i32
    %c0_i32_0 = arith.constant 0 : i32
    %c0_i32_1 = arith.constant 0 : i32
    return %arg0, %c0_i32, %c0_i32_0 : i32, i32, i32
  }
}

</mosaic_0001>

<llo_original>
// kernel: tpu_custom_call.1
$region0: #{tpu_custom_call.1}
  #allocation0 [shape = 'u32[]', space=smem, size = 0x4, offset = 0x4, fixed_abs, tag = 'smem constant byte address 0x4 - core index']
  #allocation1 [shape = 'u32[144,128]{1,0:T(1,128)}', space=vmem, size = 0x12000, scoped, tag = 'internal scratch']
  #allocation2 [shape = 'f32[36,1024]{1,0:T(8,128)}', space=vmem, size = 0x28000, scoped, tag = 'scratch operand']
  %s0 = inlined_call_operand.vmem [shape: f32[2,4,34,34], index: 0, kind: input, shape index: {}]
  %s1 = inlined_call_operand.vmem [shape: f32[8,36], index: 1, kind: input, shape index: {}]
  %s2 = inlined_call_operand.vmem [shape: f32[8,1], index: 2, kind: input, shape index: {}]
  %s3 = inlined_call_operand.hbm [shape: f32[2,8,1024], index: 3, kind: output, shape index: {}]
  %s4 = sld [smem:[#allocation0]]
  $region45: #{tpu_custom_call.1} parent=0
    _
  %s6 = ssub.s32 1, %s4
  %s7 = scalar_select 0, %s6, %s4
  $region1: #{tpu_custom_call.1} parent=0
    #allocation3 [shape = 'u8[65536]{0}', space=vmem, size = 0x10000, scoped, tag = 'output window, operand 0']
    #allocation4 [shape = 's32[2]{0}', space=sflag, size = 0x8, scoped, tag = 'scoped memory for tpu_custom_call.1']
    %8 = vsyncpa [#allocation4], 0
    %s9 = scalar_lea.sflag [#allocation4], 1
    %10 = vsyncpa %s9, 0
    loop: start=0, step=1, limit=4
    $region2: #{tpu_custom_call.1} parent=1 // loop_pre_header
      _
    $region3: #{tpu_custom_call.1} parent=1 // loop_header
      %s12 = sphi 0, %s16
      %p13 = scmp.ge.s32.totalorder %s12, 4
      %s22 = sphi 0, %s24
      %s25 = sphi 0, %s22
      %s26 = sphi 0, %s25
      %s42 = sphi 0, %s26
      %s46 = sphi 0, %s46
      %s48 = sphi 0, %s46
      %s49 = sphi 0, %s48
      %s63 = sphi 0, %s49
      %s67 = sphi 0, %s67
      %s69 = sphi 0, %s67
      %s70 = sphi 0, %s69
      %s84 = sphi 0, %s70
      %s90 = sphi 0, %s92
      %s93 = sphi 0, %s90
      %s94 = sphi 0, %s93
      %s110 = sphi 0, %s94
    $region4: #{tpu_custom_call.1} parent=1 // loop_header_branch
      %15 = sbr.rel (%p13) target = $region8
    $region5: #{tpu_custom_call.1} parent=1 // loop_body
      %s17 = ssub.s32 %s12, 1
      %s18 = ssub.s32 %s12, 2
      %s19 = sadd.s32 %s12, 1
      %s20 = ssub.s32 %s12, %s19
      %p21 = scmp.eq.s32.totalorder %s20, 0
      %s23 = sadd.s32 %s22, 1
      %s24 = scalar_select %p21, %s22, %s23
      %p27 = pneg %p21
      %p28 = scmp.eq.s32.totalorder %s12, 1
      %p29 = por %p27, %p28
      %p30 = scmp.ne.s32.totalorder %s22, %s25
      %p31 = scmp.eq.s32.totalorder %s12, 0
      %p32 = por %p30, %p31
      %p33 = scmp.ne.s32.totalorder %s22, %s25
      %p34 = scmp.eq.s32.totalorder %s17, 1
      %p35 = por %p33, %p34
      %p36 = scmp.ne.s32.totalorder %s25, %s26
      %p37 = scmp.eq.s32.totalorder %s17, 0
      %p38 = por %p36, %p37
      %p39 = scmp.ne.s32.totalorder %s25, %s26
      %p40 = scmp.eq.s32.totalorder %s18, 1
      %p41 = por %p39, %p40
      %p43 = scmp.ne.s32.totalorder %s26, %s42
      %p44 = scmp.eq.s32.totalorder %s18, 0
      %p45 = por %p43, %p44
      %s47 = sadd.s32 %s46, 1
      %p50 = scmp.eq.s32.totalorder %s12, 1
      %p51 = scmp.ne.s32.totalorder %s46, %s48
      %p52 = scmp.eq.s32.totalorder %s12, 0
      %p53 = por %p51, %p52
      %p54 = scmp.ne.s32.totalorder %s46, %s48
      %p55 = scmp.eq.s32.totalorder %s17, 1
      %p56 = por %p54, %p55
      %p57 = scmp.ne.s32.totalorder %s48, %s49
      %p58 = scmp.eq.s32.totalorder %s17, 0
      %p59 = por %p57, %p58
      %p60 = scmp.ne.s32.totalorder %s48, %s49
      %p61 = scmp.eq.s32.totalorder %s18, 1
      %p62 = por %p60, %p61
      %p64 = scmp.ne.s32.totalorder %s49, %s63
      %p65 = scmp.eq.s32.totalorder %s18, 0
      %p66 = por %p64, %p65
      %s68 = sadd.s32 %s67, 1
      %p71 = scmp.eq.s32.totalorder %s12, 1
      %p72 = scmp.ne.s32.totalorder %s67, %s69
      %p73 = scmp.eq.s32.totalorder %s12, 0
      %p74 = por %p72, %p73
      %p75 = scmp.ne.s32.totalorder %s67, %s69
      %p76 = scmp.eq.s32.totalorder %s17, 1
      %p77 = por %p75, %p76
      %p78 = scmp.ne.s32.totalorder %s69, %s70
      %p79 = scmp.eq.s32.totalorder %s17, 0
      %p80 = por %p78, %p79
      %p81 = scmp.ne.s32.totalorder %s69, %s70
      %p82 = scmp.eq.s32.totalorder %s18, 1
      %p83 = por %p81, %p82
      %p85 = scmp.ne.s32.totalorder %s70, %s84
      %p86 = scmp.eq.s32.totalorder %s18, 0
      %p87 = por %p85, %p86
      %s88 = ssub.s32 %s12, %s19
      %p89 = scmp.eq.s32.totalorder %s88, 0
      %s91 = sadd.s32 %s90, 1
      %s92 = scalar_select %p89, %s90, %s91
      %p95 = pneg %p89
      %p96 = scmp.eq.s32.totalorder %s12, 1
      %p97 = por %p95, %p96
      %p98 = scmp.ne.s32.totalorder %s90, %s93
      %p99 = scmp.eq.s32.totalorder %s12, 0
      %p100 = por %p98, %p99
      %p101 = scmp.ne.s32.totalorder %s90, %s93
      %p102 = scmp.eq.s32.totalorder %s17, 1
      %p103 = por %p101, %p102
      %p104 = scmp.ne.s32.totalorder %s93, %s94
      %p105 = scmp.eq.s32.totalorder %s17, 0
      %p106 = por %p104, %p105
      %p107 = scmp.ne.s32.totalorder %s93, %s94
      %p108 = scmp.eq.s32.totalorder %s18, 1
      %p109 = por %p107, %p108
      %p111 = scmp.ne.s32.totalorder %s94, %s110
      %p112 = scmp.eq.s32.totalorder %s18, 0
      %p113 = por %p111, %p112
      %p114 = scmp.le.s32.totalorder 1, %s12
      %p115 = scmp.lt.s32.totalorder %s12, 3
      %p116 = pnand %p114, %p115
      %p117 = pneg %p116
      // Predicated region
      $region9: #{tpu_custom_call.1} parent=5 // pred_check
        _
      $region10: #{tpu_custom_call.1} parent=5 // pred_check_branch
        %119 = sbr.rel (%p116) target = $region12
      $region11: #{tpu_custom_call.1} parent=5 // pred_region
        %s120 = ssub.s32 %s12, 1
        // Predicated region
        $region13: #{tpu_custom_call.1} parent=11 // pred_check
          %p121 = pneg %p59
        $region14: #{tpu_custom_call.1} parent=11 // pred_check_branch
          %123 = sbr.rel (%p121) target = $region16
        $region15: #{tpu_custom_call.1} parent=11 // pred_region
          _
        $region16: #{tpu_custom_call.1} parent=11 // pred_fallthru
          _
        // Predicated region
        $region17: #{tpu_custom_call.1} parent=11 // pred_check
          %p124 = pneg %p80
        $region18: #{tpu_custom_call.1} parent=11 // pred_check_branch
          %126 = sbr.rel (%p124) target = $region20
        $region19: #{tpu_custom_call.1} parent=11 // pred_region
          _
        $region20: #{tpu_custom_call.1} parent=11 // pred_fallthru
          _
      $region12: #{tpu_custom_call.1} parent=5 // pred_fallthru
        _
      %p127 = scmp.lt.s32.totalorder %s12, 2
      // Predicated region
      $region21: #{tpu_custom_call.1} parent=5 // pred_check
        %p128 = pneg %p127
      $region22: #{tpu_custom_call.1} parent=5 // pred_check_branch
        %130 = sbr.rel (%p128) target = $region24
      $region23: #{tpu_custom_call.1} parent=5 // pred_region
        // Predicated region
        $region25: #{tpu_custom_call.1} parent=23 // pred_check
          %p131 = pneg %p32
        $region26: #{tpu_custom_call.1} parent=23 // pred_check_branch
          %133 = sbr.rel (%p131) target = $region28
        $region27: #{tpu_custom_call.1} parent=23 // pred_region
          %p134 = scmp.lt.s32.totalorder %s12, 1
          %s135 = scalar_select %p134, %s12, 1
          %s136 = smul.addr %s135, 20
          %s137 = smul.addr %s136, 8
          %s138 = scalar_lea.vmem %s0, %s137
        $region28: #{tpu_custom_call.1} parent=23 // pred_fallthru
          _
      $region24: #{tpu_custom_call.1} parent=5 // pred_fallthru
        _
      %p139 = scmp.le.s32.totalorder 1, %s12
      %p140 = scmp.lt.s32.totalorder %s12, 3
      %p141 = pnand %p139, %p140
      %p142 = pneg %p141
      // Predicated region
      $region29: #{tpu_custom_call.1} parent=5 // pred_check
        _
      $region30: #{tpu_custom_call.1} parent=5 // pred_check_branch
        %144 = sbr.rel (%p141) target = $region32
      $region31: #{tpu_custom_call.1} parent=5 // pred_region
        %s145 = ssub.s32 %s12, 1
        %p146 = scmp.lt.s32.totalorder %s17, 1
        %s147 = scalar_select %p146, %s17, 1
        %s148 = smul.addr %s147, 20
        %s149 = smul.addr %s148, 8
        %s150 = scalar_lea.vmem %s0, %s149
        %p151 = pneg %p38
        %p152 = pneg %p35
        %p153 = pneg %p59
        %p154 = pneg %p56
        %p155 = pneg %p80
        %p156 = pneg %p77
        %p157 = pneg %p106
        %p158 = pneg %p103
        %s159 = sand.u32 %s93, 1
        %s160 = scalar_lea.sflag [#allocation4], %s159
        %s161 = sand.u32 %s93, 1
        %s162 = smul.addr %s161, 64
        %s163 = scalar_lea.vmem [#allocation3], %s162
        %p164 = scmp.lt.s32.totalorder %s17, 1
        %s165 = scalar_select %p164, %s17, 1
        %s166 = smul.addr %s165, 20
        %s167 = smul.addr %s166, 8
        %s168 = scalar_lea.vmem %s0, %s167
        %v169 = vld [vmem:[%s168] sm:$0xff]
        %v170 = vld [vmem:[%s168 + $0x8] sm:$0xff]
        %v171 = vld [vmem:[%s168 + $0x10] sm:$0xff]
        %v172 = vld [vmem:[%s168 + $0x18] sm:$0xff]
        %v173 = vld [vmem:[%s168 + $0x20] sm:$0x3]
        %v174 = vld [vmem:[%s168 + $0x28] sm:$0xff]
        %v175 = vld [vmem:[%s168 + $0x30] sm:$0xff]
        %v176 = vld [vmem:[%s168 + $0x38] sm:$0xff]
        %v177 = vld [vmem:[%s168 + $0x40] sm:$0xff]
        %v178 = vld [vmem:[%s168 + $0x48] sm:$0x3]
        %v179 = vld [vmem:[%s168 + $0x50] sm:$0xff]
        %v180 = vld [vmem:[%s168 + $0x58] sm:$0xff]
        %v181 = vld [vmem:[%s168 + $0x60] sm:$0xff]
        %v182 = vld [vmem:[%s168 + $0x68] sm:$0xff]
        %v183 = vld [vmem:[%s168 + $0x70] sm:$0x3]
        %v184 = vld [vmem:[%s168 + $0x78] sm:$0xff]
        %v185 = vld [vmem:[%s168 + $0x80] sm:$0xff]
        %v186 = vld [vmem:[%s168 + $0x88] sm:$0xff]
        %v187 = vld [vmem:[%s168 + $0x90] sm:$0xff]
        %v188 = vld [vmem:[%s168 + $0x98] sm:$0x3]
        %v189 = vcombine.low %v169, %v179
        %v190 = vcombine.high %v169, %v179
        %v192 = vunpack.c.l.s4 1983009808
        %v193 = vunpack.c.0.s8 %v192
        %v194 = vlaneseq
        %v195 = vshrl.u32 %v194, 7
        %v196 = vsub.s32 %v193, %v195
        %v197 = vrot.slane %v189, %v196
        %v199 = vunpack.c.l.s4 1983009808
        %v200 = vunpack.c.0.s8 %v199
        %v201 = vlaneseq
        %v202 = vshrl.u32 %v201, 7
        %v203 = vsub.s32 %v200, %v202
        %v204 = vrot.slane %v190, %v203
        %v205 = vcombine.low %v174, %v184
        %v206 = vcombine.high %v174, %v184
        %v208 = vunpack.c.l.s4 1983009808
        %v209 = vunpack.c.0.s8 %v208
        %v210 = vlaneseq
        %v211 = vshrl.u32 %v210, 7
        %v212 = vsub.s32 %v209, %v211
        %v213 = vrot.slane %v205, %v212
        %v215 = vunpack.c.l.s4 1983009808
        %v216 = vunpack.c.0.s8 %v215
        %v217 = vlaneseq
        %v218 = vshrl.u32 %v217, 7
        %v219 = vsub.s32 %v216, %v218
        %v220 = vrot.slane %v206, %v219
        %v221 = vcombine.low %v197, %v213
        %v222 = vcombine.high %v197, %v213
        %v224 = vunpack.c.l.s4 1934713408
        %v225 = vunpack.c.0.s8 %v224
        %v226 = vlaneseq
        %v227 = vshrl.u32 %v226, 7
        %v228 = vsub.s32 %v225, %v227
        %v229 = vrot.slane %v221, %v228
        %v231 = vunpack.c.l.s4 1934713408
        %v232 = vunpack.c.0.s8 %v231
        %v233 = vlaneseq
        %v234 = vshrl.u32 %v233, 7
        %v235 = vsub.s32 %v232, %v234
        %v236 = vrot.slane %v222, %v235
        %v237 = vcombine.low %v204, %v220
        %v238 = vcombine.high %v204, %v220
        %v240 = vunpack.c.l.s4 1934713408
        %v241 = vunpack.c.0.s8 %v240
        %v242 = vlaneseq
        %v243 = vshrl.u32 %v242, 7
        %v244 = vsub.s32 %v241, %v243
        %v245 = vrot.slane %v237, %v244
        %v247 = vunpack.c.l.s4 1934713408
        %v248 = vunpack.c.0.s8 %v247
        %v249 = vlaneseq
        %v250 = vshrl.u32 %v249, 7
        %v251 = vsub.s32 %v248, %v250
        %v252 = vrot.slane %v238, %v251
        %v253 = vcombine.high %v229, 0.0
        %v254 = vcombine.high %v236, 0.0
        %v255 = vcombine.high %v245, 0.0
        %v256 = vcombine.high %v252, 0.0
        %v257 = vcombine.low %v170, %v180
        %v258 = vcombine.high %v170, %v180
        %v260 = vunpack.c.l.s4 1983009808
        %v261 = vunpack.c.0.s8 %v260
        %v262 = vlaneseq
        %v263 = vshrl.u32 %v262, 7
        %v264 = vsub.s32 %v261, %v263
        %v265 = vrot.slane %v257, %v264
        %v267 = vunpack.c.l.s4 1983009808
        %v268 = vunpack.c.0.s8 %v267
        %v269 = vlaneseq
        %v270 = vshrl.u32 %v269, 7
        %v271 = vsub.s32 %v268, %v270
        %v272 = vrot.slane %v258, %v271
        %v273 = vcombine.low %v175, %v185
        %v274 = vcombine.high %v175, %v185
        %v276 = vunpack.c.l.s4 1983009808
        %v277 = vunpack.c.0.s8 %v276
        %v278 = vlaneseq
        %v279 = vshrl.u32 %v278, 7
        %v280 = vsub.s32 %v277, %v279
        %v281 = vrot.slane %v273, %v280
        %v283 = vunpack.c.l.s4 1983009808
        %v284 = vunpack.c.0.s8 %v283
        %v285 = vlaneseq
        %v286 = vshrl.u32 %v285, 7
        %v287 = vsub.s32 %v284, %v286
        %v288 = vrot.slane %v274, %v287
        %v289 = vcombine.low %v265, %v281
        %v290 = vcombine.high %v265, %v281
        %v292 = vunpack.c.l.s4 1934713408
        %v293 = vunpack.c.0.s8 %v292
        %v294 = vlaneseq
        %v295 = vshrl.u32 %v294, 7
        %v296 = vsub.s32 %v293, %v295
        %v297 = vrot.slane %v289, %v296
        %v299 = vunpack.c.l.s4 1934713408
        %v300 = vunpack.c.0.s8 %v299
        %v301 = vlaneseq
        %v302 = vshrl.u32 %v301, 7
        %v303 = vsub.s32 %v300, %v302
        %v304 = vrot.slane %v290, %v303
        %v305 = vcombine.low %v272, %v288
        %v306 = vcombine.high %v272, %v288
        %v308 = vunpack.c.l.s4 1934713408
        %v309 = vunpack.c.0.s8 %v308
        %v310 = vlaneseq
        %v311 = vshrl.u32 %v310, 7
        %v312 = vsub.s32 %v309, %v311
        %v313 = vrot.slane %v305, %v312
        %v315 = vunpack.c.l.s4 1934713408
        %v316 = vunpack.c.0.s8 %v315
        %v317 = vlaneseq
        %v318 = vshrl.u32 %v317, 7
        %v319 = vsub.s32 %v316, %v318
        %v320 = vrot.slane %v306, %v319
        %v321 = vcombine.high %v297, 0.0
        %v322 = vcombine.high %v304, 0.0
        %v323 = vcombine.high %v313, 0.0
        %v324 = vcombine.high %v320, 0.0
        %v325 = vcombine.low %v171, %v181
        %v326 = vcombine.high %v171, %v181
        %v328 = vunpack.c.l.s4 1983009808
        %v329 = vunpack.c.0.s8 %v328
        %v330 = vlaneseq
        %v331 = vshrl.u32 %v330, 7
        %v332 = vsub.s32 %v329, %v331
        %v333 = vrot.slane %v325, %v332
        %v335 = vunpack.c.l.s4 1983009808
        %v336 = vunpack.c.0.s8 %v335
        %v337 = vlaneseq
        %v338 = vshrl.u32 %v337, 7
        %v339 = vsub.s32 %v336, %v338
        %v340 = vrot.slane %v326, %v339
        %v341 = vcombine.low %v176, %v186
        %v342 = vcombine.high %v176, %v186
        %v344 = vunpack.c.l.s4 1983009808
        %v345 = vunpack.c.0.s8 %v344
        %v346 = vlaneseq
        %v347 = vshrl.u32 %v346, 7
        %v348 = vsub.s32 %v345, %v347
        %v349 = vrot.slane %v341, %v348
        %v351 = vunpack.c.l.s4 1983009808
        %v352 = vunpack.c.0.s8 %v351
        %v353 = vlaneseq
        %v354 = vshrl.u32 %v353, 7
        %v355 = vsub.s32 %v352, %v354
        %v356 = vrot.slane %v342, %v355
        %v357 = vcombine.low %v333, %v349
        %v358 = vcombine.high %v333, %v349
        %v360 = vunpack.c.l.s4 1934713408
        %v361 = vunpack.c.0.s8 %v360
        %v362 = vlaneseq
        %v363 = vshrl.u32 %v362, 7
        %v364 = vsub.s32 %v361, %v363
        %v365 = vrot.slane %v357, %v364
        %v367 = vunpack.c.l.s4 1934713408
        %v368 = vunpack.c.0.s8 %v367
        %v369 = vlaneseq
        %v370 = vshrl.u32 %v369, 7
        %v371 = vsub.s32 %v368, %v370
        %v372 = vrot.slane %v358, %v371
        %v373 = vcombine.low %v340, %v356
        %v374 = vcombine.high %v340, %v356
        %v376 = vunpack.c.l.s4 1934713408
        %v377 = vunpack.c.0.s8 %v376
        %v378 = vlaneseq
        %v379 = vshrl.u32 %v378, 7
        %v380 = vsub.s32 %v377, %v379
        %v381 = vrot.slane %v373, %v380
        %v383 = vunpack.c.l.s4 1934713408
        %v384 = vunpack.c.0.s8 %v383
        %v385 = vlaneseq
        %v386 = vshrl.u32 %v385, 7
        %v387 = vsub.s32 %v384, %v386
        %v388 = vrot.slane %v374, %v387
        %v389 = vcombine.high %v365, 0.0
        %v390 = vcombine.high %v372, 0.0
        %v391 = vcombine.high %v381, 0.0
        %v392 = vcombine.high %v388, 0.0
        %v393 = vcombine.low %v172, %v182
        %v394 = vcombine.high %v172, %v182
        %v396 = vunpack.c.l.s4 1983009808
        %v397 = vunpack.c.0.s8 %v396
        %v398 = vlaneseq
        %v399 = vshrl.u32 %v398, 7
        %v400 = vsub.s32 %v397, %v399
        %v401 = vrot.slane %v393, %v400
        %v403 = vunpack.c.l.s4 1983009808
        %v404 = vunpack.c.0.s8 %v403
        %v405 = vlaneseq
        %v406 = vshrl.u32 %v405, 7
        %v407 = vsub.s32 %v404, %v406
        %v408 = vrot.slane %v394, %v407
        %v409 = vcombine.low %v177, %v187
        %v410 = vcombine.high %v177, %v187
        %v412 = vunpack.c.l.s4 1983009808
        %v413 = vunpack.c.0.s8 %v412
        %v414 = vlaneseq
        %v415 = vshrl.u32 %v414, 7
        %v416 = vsub.s32 %v413, %v415
        %v417 = vrot.slane %v409, %v416
        %v419 = vunpack.c.l.s4 1983009808
        %v420 = vunpack.c.0.s8 %v419
        %v421 = vlaneseq
        %v422 = vshrl.u32 %v421, 7
        %v423 = vsub.s32 %v420, %v422
        %v424 = vrot.slane %v410, %v423
        %v425 = vcombine.low %v401, %v417
        %v426 = vcombine.high %v401, %v417
        %v428 = vunpack.c.l.s4 1934713408
        %v429 = vunpack.c.0.s8 %v428
        %v430 = vlaneseq
        %v431 = vshrl.u32 %v430, 7
        %v432 = vsub.s32 %v429, %v431
        %v433 = vrot.slane %v425, %v432
        %v435 = vunpack.c.l.s4 1934713408
        %v436 = vunpack.c.0.s8 %v435
        %v437 = vlaneseq
        %v438 = vshrl.u32 %v437, 7
        %v439 = vsub.s32 %v436, %v438
        %v440 = vrot.slane %v426, %v439
        %v441 = vcombine.low %v408, %v424
        %v442 = vcombine.high %v408, %v424
        %v444 = vunpack.c.l.s4 1934713408
        %v445 = vunpack.c.0.s8 %v444
        %v446 = vlaneseq
        %v447 = vshrl.u32 %v446, 7
        %v448 = vsub.s32 %v445, %v447
        %v449 = vrot.slane %v441, %v448
        %v451 = vunpack.c.l.s4 1934713408
        %v452 = vunpack.c.0.s8 %v451
        %v453 = vlaneseq
        %v454 = vshrl.u32 %v453, 7
        %v455 = vsub.s32 %v452, %v454
        %v456 = vrot.slane %v442, %v455
        %v457 = vcombine.high %v433, 0.0
        %v458 = vcombine.high %v440, 0.0
        %v459 = vcombine.high %v449, 0.0
        %v460 = vcombine.high %v456, 0.0
        %462 = vrot.lane.b32.xlu0 %v253, 32
        %v463 = vpop.permute.xlu0 %462
        %466 = vrot.lane.b32.xlu0 %v236, 64
        %v467 = vpop.permute.xlu0 %466
        %470 = vrot.lane.b32.xlu0 %v254, 96
        %v471 = vpop.permute.xlu0 %470
        %474 = vrot.lane.b32.xlu0 %v255, 32
        %v475 = vpop.permute.xlu0 %474
        %478 = vrot.lane.b32.xlu0 %v252, 64
        %v479 = vpop.permute.xlu0 %478
        %482 = vrot.lane.b32.xlu0 %v256, 96
        %v483 = vpop.permute.xlu0 %482
        %486 = vrot.lane.b32.xlu0 %v321, 32
        %v487 = vpop.permute.xlu0 %486
        %490 = vrot.lane.b32.xlu0 %v304, 64
        %v491 = vpop.permute.xlu0 %490
        %494 = vrot.lane.b32.xlu0 %v322, 96
        %v495 = vpop.permute.xlu0 %494
        %498 = vrot.lane.b32.xlu0 %v323, 32
        %v499 = vpop.permute.xlu0 %498
        %502 = vrot.lane.b32.xlu0 %v320, 64
        %v503 = vpop.permute.xlu0 %502
        %506 = vrot.lane.b32.xlu0 %v324, 96
        %v507 = vpop.permute.xlu0 %506
        %510 = vrot.lane.b32.xlu0 %v389, 32
        %v511 = vpop.permute.xlu0 %510
        %514 = vrot.lane.b32.xlu0 %v372, 64
        %v515 = vpop.permute.xlu0 %514
        %518 = vrot.lane.b32.xlu0 %v390, 96
        %v519 = vpop.permute.xlu0 %518
        %522 = vrot.lane.b32.xlu0 %v391, 32
        %v523 = vpop.permute.xlu0 %522
        %526 = vrot.lane.b32.xlu0 %v388, 64
        %v527 = vpop.permute.xlu0 %526
        %530 = vrot.lane.b32.xlu0 %v392, 96
        %v531 = vpop.permute.xlu0 %530
        %534 = vrot.lane.b32.xlu0 %v457, 32
        %v535 = vpop.permute.xlu0 %534
        %538 = vrot.lane.b32.xlu0 %v440, 64
        %v539 = vpop.permute.xlu0 %538
        %542 = vrot.lane.b32.xlu0 %v458, 96
        %v543 = vpop.permute.xlu0 %542
        %546 = vrot.lane.b32.xlu0 %v459, 32
        %v547 = vpop.permute.xlu0 %546
        %550 = vrot.lane.b32.xlu0 %v456, 64
        %v551 = vpop.permute.xlu0 %550
        %554 = vrot.lane.b32.xlu0 %v460, 96
        %v555 = vpop.permute.xlu0 %554
        %vm557 = vcmask 261120
        %v558 = vsel %vm557, %v229, %v463
        %vm559 = vcmask 523264
        %v560 = vsel %vm559, %v558, %v467
        %vm561 = vcmask 785408
        %v562 = vsel %vm561, %v560, %v471
        %v563 = vsel %vm557, %v245, %v475
        %v564 = vsel %vm559, %v563, %v479
        %v565 = vsel %vm561, %v564, %v483
        %v566 = vsel %vm557, %v297, %v487
        %v567 = vsel %vm559, %v566, %v491
        %v568 = vsel %vm561, %v567, %v495
        %v569 = vsel %vm557, %v313, %v499
        %v570 = vsel %vm559, %v569, %v503
        %v571 = vsel %vm561, %v570, %v507
        %v572 = vsel %vm557, %v365, %v511
        %v573 = vsel %vm559, %v572, %v515
        %v574 = vsel %vm561, %v573, %v519
        %v575 = vsel %vm557, %v381, %v523
        %v576 = vsel %vm559, %v575, %v527
        %v577 = vsel %vm561, %v576, %v531
        %v578 = vsel %vm557, %v433, %v535
        %v579 = vsel %vm559, %v578, %v539
        %v580 = vsel %vm561, %v579, %v543
        %v581 = vsel %vm557, %v449, %v547
        %v582 = vsel %vm559, %v581, %v551
        %v583 = vsel %vm561, %v582, %v555
        %584 = vst [vmem:[#allocation2] sm:$0xf] %v562
        %585 = vst [vmem:[#allocation2 + $0x8] sm:$0xf] %v565
        %586 = vst [vmem:[#allocation2 + $0x10] sm:$0xf] %v568
        %587 = vst [vmem:[#allocation2 + $0x18] sm:$0xf] %v571
        %588 = vst [vmem:[#allocation2 + $0x20] sm:$0xf] %v574
        %589 = vst [vmem:[#allocation2 + $0x28] sm:$0xf] %v577
        %590 = vst [vmem:[#allocation2 + $0x30] sm:$0xf] %v580
        %591 = vst [vmem:[#allocation2 + $0x38] sm:$0xf] %v583
        %608 = vrot.lane.b32.xlu0 %v169, 127
        %v609 = vpop.permute.xlu0 %608
        %610 = vrot.lane.b32.xlu0 %v170, 127
        %v611 = vpop.permute.xlu0 %610
        %612 = vrot.lane.b32.xlu0 %v171, 127
        %v613 = vpop.permute.xlu0 %612
        %614 = vrot.lane.b32.xlu0 %v172, 127
        %v615 = vpop.permute.xlu0 %614
        %616 = vrot.lane.b32.xlu0 %v174, 127
        %v617 = vpop.permute.xlu0 %616
        %618 = vrot.lane.b32.xlu0 %v175, 127
        %v619 = vpop.permute.xlu0 %618
        %620 = vrot.lane.b32.xlu0 %v176, 127
        %v621 = vpop.permute.xlu0 %620
        %622 = vrot.lane.b32.xlu0 %v177, 127
        %v623 = vpop.permute.xlu0 %622
        %624 = vrot.lane.b32.xlu0 %v179, 127
        %v625 = vpop.permute.xlu0 %624
        %626 = vrot.lane.b32.xlu0 %v180, 127
        %v627 = vpop.permute.xlu0 %626
        %628 = vrot.lane.b32.xlu0 %v181, 127
        %v629 = vpop.permute.xlu0 %628
        %630 = vrot.lane.b32.xlu0 %v182, 127
        %v631 = vpop.permute.xlu0 %630
        %632 = vrot.lane.b32.xlu0 %v184, 127
        %v633 = vpop.permute.xlu0 %632
        %634 = vrot.lane.b32.xlu0 %v185, 127
        %v635 = vpop.permute.xlu0 %634
        %636 = vrot.lane.b32.xlu0 %v186, 127
        %v637 = vpop.permute.xlu0 %636
        %638 = vrot.lane.b32.xlu0 %v187, 127
        %v639 = vpop.permute.xlu0 %638
        %v656 = vcombine.low %v609, %v625
        %v657 = vcombine.high %v609, %v625
        %v659 = vunpack.c.l.s4 1983009808
        %v660 = vunpack.c.0.s8 %v659
        %v661 = vlaneseq
        %v662 = vshrl.u32 %v661, 7
        %v663 = vsub.s32 %v660, %v662
        %v664 = vrot.slane %v656, %v663
        %v666 = vunpack.c.l.s4 1983009808
        %v667 = vunpack.c.0.s8 %v666
        %v668 = vlaneseq
        %v669 = vshrl.u32 %v668, 7
        %v670 = vsub.s32 %v667, %v669
        %v671 = vrot.slane %v657, %v670
        %v672 = vcombine.low %v617, %v633
        %v673 = vcombine.high %v617, %v633
        %v675 = vunpack.c.l.s4 1983009808
        %v676 = vunpack.c.0.s8 %v675
        %v677 = vlaneseq
        %v678 = vshrl.u32 %v677, 7
        %v679 = vsub.s32 %v676, %v678
        %v680 = vrot.slane %v672, %v679
        %v682 = vunpack.c.l.s4 1983009808
        %v683 = vunpack.c.0.s8 %v682
        %v684 = vlaneseq
        %v685 = vshrl.u32 %v684, 7
        %v686 = vsub.s32 %v683, %v685
        %v687 = vrot.slane %v673, %v686
        %v688 = vcombine.low %v664, %v680
        %v689 = vcombine.high %v664, %v680
        %v691 = vunpack.c.l.s4 1934713408
        %v692 = vunpack.c.0.s8 %v691
        %v693 = vlaneseq
        %v694 = vshrl.u32 %v693, 7
        %v695 = vsub.s32 %v692, %v694
        %v696 = vrot.slane %v688, %v695
        %v698 = vunpack.c.l.s4 1934713408
        %v699 = vunpack.c.0.s8 %v698
        %v700 = vlaneseq
        %v701 = vshrl.u32 %v700, 7
        %v702 = vsub.s32 %v699, %v701
        %v703 = vrot.slane %v689, %v702
        %v704 = vcombine.low %v671, %v687
        %v705 = vcombine.high %v671, %v687
        %v707 = vunpack.c.l.s4 1934713408
        %v708 = vunpack.c.0.s8 %v707
        %v709 = vlaneseq
        %v710 = vshrl.u32 %v709, 7
        %v711 = vsub.s32 %v708, %v710
        %v712 = vrot.slane %v704, %v711
        %v714 = vunpack.c.l.s4 1934713408
        %v715 = vunpack.c.0.s8 %v714
        %v716 = vlaneseq
        %v717 = vshrl.u32 %v716, 7
        %v718 = vsub.s32 %v715, %v717
        %v719 = vrot.slane %v705, %v718
        %v720 = vcombine.high %v696, 0.0
        %v721 = vcombine.high %v703, 0.0
        %v722 = vcombine.high %v712, 0.0
        %v723 = vcombine.high %v719, 0.0
        %v724 = vcombine.low %v611, %v627
        %v725 = vcombine.high %v611, %v627
        %v727 = vunpack.c.l.s4 1983009808
        %v728 = vunpack.c.0.s8 %v727
        %v729 = vlaneseq
        %v730 = vshrl.u32 %v729, 7
        %v731 = vsub.s32 %v728, %v730
        %v732 = vrot.slane %v724, %v731
        %v734 = vunpack.c.l.s4 1983009808
        %v735 = vunpack.c.0.s8 %v734
        %v736 = vlaneseq
        %v737 = vshrl.u32 %v736, 7
        %v738 = vsub.s32 %v735, %v737
        %v739 = vrot.slane %v725, %v738
        %v740 = vcombine.low %v619, %v635
        %v741 = vcombine.high %v619, %v635
        %v743 = vunpack.c.l.s4 1983009808
        %v744 = vunpack.c.0.s8 %v743
        %v745 = vlaneseq
        %v746 = vshrl.u32 %v745, 7
        %v747 = vsub.s32 %v744, %v746
        %v748 = vrot.slane %v740, %v747
        %v750 = vunpack.c.l.s4 1983009808
        %v751 = vunpack.c.0.s8 %v750
        %v752 = vlaneseq
        %v753 = vshrl.u32 %v752, 7
        %v754 = vsub.s32 %v751, %v753
        %v755 = vrot.slane %v741, %v754
        %v756 = vcombine.low %v732, %v748
        %v757 = vcombine.high %v732, %v748
        %v759 = vunpack.c.l.s4 1934713408
        %v760 = vunpack.c.0.s8 %v759
        %v761 = vlaneseq
        %v762 = vshrl.u32 %v761, 7
        %v763 = vsub.s32 %v760, %v762
        %v764 = vrot.slane %v756, %v763
        %v766 = vunpack.c.l.s4 1934713408
        %v767 = vunpack.c.0.s8 %v766
        %v768 = vlaneseq
        %v769 = vshrl.u32 %v768, 7
        %v770 = vsub.s32 %v767, %v769
        %v771 = vrot.slane %v757, %v770
        %v772 = vcombine.low %v739, %v755
        %v773 = vcombine.high %v739, %v755
        %v775 = vunpack.c.l.s4 1934713408
        %v776 = vunpack.c.0.s8 %v775
        %v777 = vlaneseq
        %v778 = vshrl.u32 %v777, 7
        %v779 = vsub.s32 %v776, %v778
        %v780 = vrot.slane %v772, %v779
        %v782 = vunpack.c.l.s4 1934713408
        %v783 = vunpack.c.0.s8 %v782
        %v784 = vlaneseq
        %v785 = vshrl.u32 %v784, 7
        %v786 = vsub.s32 %v783, %v785
        %v787 = vrot.slane %v773, %v786
        %v788 = vcombine.high %v764, 0.0
        %v789 = vcombine.high %v771, 0.0
        %v790 = vcombine.high %v780, 0.0
        %v791 = vcombine.high %v787, 0.0
        %v792 = vcombine.low %v613, %v629
        %v793 = vcombine.high %v613, %v629
        %v795 = vunpack.c.l.s4 1983009808
        %v796 = vunpack.c.0.s8 %v795
        %v797 = vlaneseq
        %v798 = vshrl.u32 %v797, 7
        %v799 = vsub.s32 %v796, %v798
        %v800 = vrot.slane %v792, %v799
        %v802 = vunpack.c.l.s4 1983009808
        %v803 = vunpack.c.0.s8 %v802
        %v804 = vlaneseq
        %v805 = vshrl.u32 %v804, 7
        %v806 = vsub.s32 %v803, %v805
        %v807 = vrot.slane %v793, %v806
        %v808 = vcombine.low %v621, %v637
        %v809 = vcombine.high %v621, %v637
        %v811 = vunpack.c.l.s4 1983009808
        %v812 = vunpack.c.0.s8 %v811
        %v813 = vlaneseq
        %v814 = vshrl.u32 %v813, 7
        %v815 = vsub.s32 %v812, %v814
        %v816 = vrot.slane %v808, %v815
        %v818 = vunpack.c.l.s4 1983009808
        %v819 = vunpack.c.0.s8 %v818
        %v820 = vlaneseq
        %v821 = vshrl.u32 %v820, 7
        %v822 = vsub.s32 %v819, %v821
        %v823 = vrot.slane %v809, %v822
        %v824 = vcombine.low %v800, %v816
        %v825 = vcombine.high %v800, %v816
        %v827 = vunpack.c.l.s4 1934713408
        %v828 = vunpack.c.0.s8 %v827
        %v829 = vlaneseq
        %v830 = vshrl.u32 %v829, 7
        %v831 = vsub.s32 %v828, %v830
        %v832 = vrot.slane %v824, %v831
        %v834 = vunpack.c.l.s4 1934713408
        %v835 = vunpack.c.0.s8 %v834
        %v836 = vlaneseq
        %v837 = vshrl.u32 %v836, 7
        %v838 = vsub.s32 %v835, %v837
        %v839 = vrot.slane %v825, %v838
        %v840 = vcombine.low %v807, %v823
        %v841 = vcombine.high %v807, %v823
        %v843 = vunpack.c.l.s4 1934713408
        %v844 = vunpack.c.0.s8 %v843
        %v845 = vlaneseq
        %v846 = vshrl.u32 %v845, 7
        %v847 = vsub.s32 %v844, %v846
        %v848 = vrot.slane %v840, %v847
        %v850 = vunpack.c.l.s4 1934713408
        %v851 = vunpack.c.0.s8 %v850
        %v852 = vlaneseq
        %v853 = vshrl.u32 %v852, 7
        %v854 = vsub.s32 %v851, %v853
        %v855 = vrot.slane %v841, %v854
        %v856 = vcombine.high %v832, 0.0
        %v857 = vcombine.high %v839, 0.0
        %v858 = vcombine.high %v848, 0.0
        %v859 = vcombine.high %v855, 0.0
        %v860 = vcombine.low %v615, %v631
        %v861 = vcombine.high %v615, %v631
        %v863 = vunpack.c.l.s4 1983009808
        %v864 = vunpack.c.0.s8 %v863
        %v865 = vlaneseq
        %v866 = vshrl.u32 %v865, 7
        %v867 = vsub.s32 %v864, %v866
        %v868 = vrot.slane %v860, %v867
        %v870 = vunpack.c.l.s4 1983009808
        %v871 = vunpack.c.0.s8 %v870
        %v872 = vlaneseq
        %v873 = vshrl.u32 %v872, 7
        %v874 = vsub.s32 %v871, %v873
        %v875 = vrot.slane %v861, %v874
        %v876 = vcombine.low %v623, %v639
        %v877 = vcombine.high %v623, %v639
        %v879 = vunpack.c.l.s4 1983009808
        %v880 = vunpack.c.0.s8 %v879
        %v881 = vlaneseq
        %v882 = vshrl.u32 %v881, 7
        %v883 = vsub.s32 %v880, %v882
        %v884 = vrot.slane %v876, %v883
        %v886 = vunpack.c.l.s4 1983009808
        %v887 = vunpack.c.0.s8 %v886
        %v888 = vlaneseq
        %v889 = vshrl.u32 %v888, 7
        %v890 = vsub.s32 %v887, %v889
        %v891 = vrot.slane %v877, %v890
        %v892 = vcombine.low %v868, %v884
        %v893 = vcombine.high %v868, %v884
        %v895 = vunpack.c.l.s4 1934713408
        %v896 = vunpack.c.0.s8 %v895
        %v897 = vlaneseq
        %v898 = vshrl.u32 %v897, 7
        %v899 = vsub.s32 %v896, %v898
        %v900 = vrot.slane %v892, %v899
        %v902 = vunpack.c.l.s4 1934713408
        %v903 = vunpack.c.0.s8 %v902
        %v904 = vlaneseq
        %v905 = vshrl.u32 %v904, 7
        %v906 = vsub.s32 %v903, %v905
        %v907 = vrot.slane %v893, %v906
        %v908 = vcombine.low %v875, %v891
        %v909 = vcombine.high %v875, %v891
        %v911 = vunpack.c.l.s4 1934713408
        %v912 = vunpack.c.0.s8 %v911
        %v913 = vlaneseq
        %v914 = vshrl.u32 %v913, 7
        %v915 = vsub.s32 %v912, %v914
        %v916 = vrot.slane %v908, %v915
        %v918 = vunpack.c.l.s4 1934713408
        %v919 = vunpack.c.0.s8 %v918
        %v920 = vlaneseq
        %v921 = vshrl.u32 %v920, 7
        %v922 = vsub.s32 %v919, %v921
        %v923 = vrot.slane %v909, %v922
        %v924 = vcombine.high %v900, 0.0
        %v925 = vcombine.high %v907, 0.0
        %v926 = vcombine.high %v916, 0.0
        %v927 = vcombine.high %v923, 0.0
        %929 = vrot.lane.b32.xlu0 %v720, 32
        %v930 = vpop.permute.xlu0 %929
        %933 = vrot.lane.b32.xlu0 %v703, 64
        %v934 = vpop.permute.xlu0 %933
        %937 = vrot.lane.b32.xlu0 %v721, 96
        %v938 = vpop.permute.xlu0 %937
        %941 = vrot.lane.b32.xlu0 %v722, 32
        %v942 = vpop.permute.xlu0 %941
        %945 = vrot.lane.b32.xlu0 %v719, 64
        %v946 = vpop.permute.xlu0 %945
        %949 = vrot.lane.b32.xlu0 %v723, 96
        %v950 = vpop.permute.xlu0 %949
        %953 = vrot.lane.b32.xlu0 %v788, 32
        %v954 = vpop.permute.xlu0 %953
        %957 = vrot.lane.b32.xlu0 %v771, 64
        %v958 = vpop.permute.xlu0 %957
        %961 = vrot.lane.b32.xlu0 %v789, 96
        %v962 = vpop.permute.xlu0 %961
        %965 = vrot.lane.b32.xlu0 %v790, 32
        %v966 = vpop.permute.xlu0 %965
        %969 = vrot.lane.b32.xlu0 %v787, 64
        %v970 = vpop.permute.xlu0 %969
        %973 = vrot.lane.b32.xlu0 %v791, 96
        %v974 = vpop.permute.xlu0 %973
        %977 = vrot.lane.b32.xlu0 %v856, 32
        %v978 = vpop.permute.xlu0 %977
        %981 = vrot.lane.b32.xlu0 %v839, 64
        %v982 = vpop.permute.xlu0 %981
        %985 = vrot.lane.b32.xlu0 %v857, 96
        %v986 = vpop.permute.xlu0 %985
        %989 = vrot.lane.b32.xlu0 %v858, 32
        %v990 = vpop.permute.xlu0 %989
        %993 = vrot.lane.b32.xlu0 %v855, 64
        %v994 = vpop.permute.xlu0 %993
        %997 = vrot.lane.b32.xlu0 %v859, 96
        %v998 = vpop.permute.xlu0 %997
        %1001 = vrot.lane.b32.xlu0 %v924, 32
        %v1002 = vpop.permute.xlu0 %1001
        %1005 = vrot.lane.b32.xlu0 %v907, 64
        %v1006 = vpop.permute.xlu0 %1005
        %1009 = vrot.lane.b32.xlu0 %v925, 96
        %v1010 = vpop.permute.xlu0 %1009
        %1013 = vrot.lane.b32.xlu0 %v926, 32
        %v1014 = vpop.permute.xlu0 %1013
        %1017 = vrot.lane.b32.xlu0 %v923, 64
        %v1018 = vpop.permute.xlu0 %1017
        %1021 = vrot.lane.b32.xlu0 %v927, 96
        %v1022 = vpop.permute.xlu0 %1021
        %v1024 = vsel %vm557, %v696, %v930
        %v1025 = vsel %vm559, %v1024, %v934
        %v1026 = vsel %vm561, %v1025, %v938
        %v1027 = vsel %vm557, %v712, %v942
        %v1028 = vsel %vm559, %v1027, %v946
        %v1029 = vsel %vm561, %v1028, %v950
        %v1030 = vsel %vm557, %v764, %v954
        %v1031 = vsel %vm559, %v1030, %v958
        %v1032 = vsel %vm561, %v1031, %v962
        %v1033 = vsel %vm557, %v780, %v966
        %v1034 = vsel %vm559, %v1033, %v970
        %v1035 = vsel %vm561, %v1034, %v974
        %v1036 = vsel %vm557, %v832, %v978
        %v1037 = vsel %vm559, %v1036, %v982
        %v1038 = vsel %vm561, %v1037, %v986
        %v1039 = vsel %vm557, %v848, %v990
        %v1040 = vsel %vm559, %v1039, %v994
        %v1041 = vsel %vm561, %v1040, %v998
        %v1042 = vsel %vm557, %v900, %v1002
        %v1043 = vsel %vm559, %v1042, %v1006
        %v1044 = vsel %vm561, %v1043, %v1010
        %v1045 = vsel %vm557, %v916, %v1014
        %v1046 = vsel %vm559, %v1045, %v1018
        %v1047 = vsel %vm561, %v1046, %v1022
        %v1056 = vrot.slane %v1026, 4
        %v1057 = vrot.slane %v1029, 4
        %v1058 = vrot.slane %v1032, 4
        %v1059 = vrot.slane %v1035, 4
        %v1060 = vrot.slane %v1038, 4
        %v1061 = vrot.slane %v1041, 4
        %v1062 = vrot.slane %v1044, 4
        %v1063 = vrot.slane %v1047, 4
        %1072 = vst [vmem:[#allocation2] sm:$0xf0] %v1056
        %1073 = vst [vmem:[#allocation2 + $0x8] sm:$0xf0] %v1057
        %1074 = vst [vmem:[#allocation2 + $0x10] sm:$0xf0] %v1058
        %1075 = vst [vmem:[#allocation2 + $0x18] sm:$0xf0] %v1059
        %1076 = vst [vmem:[#allocation2 + $0x20] sm:$0xf0] %v1060
        %1077 = vst [vmem:[#allocation2 + $0x28] sm:$0xf0] %v1061
        %1078 = vst [vmem:[#allocation2 + $0x30] sm:$0xf0] %v1062
        %1079 = vst [vmem:[#allocation2 + $0x38] sm:$0xf0] %v1063
        %1080 = vrot.lane.b32.xlu0 %v169, 126
        %v1081 = vpop.permute.xlu0 %1080
        %1082 = vrot.lane.b32.xlu0 %v170, 126
        %v1083 = vpop.permute.xlu0 %1082
        %1084 = vrot.lane.b32.xlu0 %v171, 126
        %v1085 = vpop.permute.xlu0 %1084
        %1086 = vrot.lane.b32.xlu0 %v172, 126
        %v1087 = vpop.permute.xlu0 %1086
        %1088 = vrot.lane.b32.xlu0 %v174, 126
        %v1089 = vpop.permute.xlu0 %1088
        %1090 = vrot.lane.b32.xlu0 %v175, 126
        %v1091 = vpop.permute.xlu0 %1090
        %1092 = vrot.lane.b32.xlu0 %v176, 126
        %v1093 = vpop.permute.xlu0 %1092
        %1094 = vrot.lane.b32.xlu0 %v177, 126
        %v1095 = vpop.permute.xlu0 %1094
        %1096 = vrot.lane.b32.xlu0 %v179, 126
        %v1097 = vpop.permute.xlu0 %1096
        %1098 = vrot.lane.b32.xlu0 %v180, 126
        %v1099 = vpop.permute.xlu0 %1098
        %1100 = vrot.lane.b32.xlu0 %v181, 126
        %v1101 = vpop.permute.xlu0 %1100
        %1102 = vrot.lane.b32.xlu0 %v182, 126
        %v1103 = vpop.permute.xlu0 %1102
        %1104 = vrot.lane.b32.xlu0 %v184, 126
        %v1105 = vpop.permute.xlu0 %1104
        %1106 = vrot.lane.b32.xlu0 %v185, 126
        %v1107 = vpop.permute.xlu0 %1106
        %1108 = vrot.lane.b32.xlu0 %v186, 126
        %v1109 = vpop.permute.xlu0 %1108
        %1110 = vrot.lane.b32.xlu0 %v187, 126
        %v1111 = vpop.permute.xlu0 %1110
        %v1128 = vcombine.low %v1081, %v1097
        %v1129 = vcombine.high %v1081, %v1097
        %v1131 = vunpack.c.l.s4 1983009808
        %v1132 = vunpack.c.0.s8 %v1131
        %v1133 = vlaneseq
        %v1134 = vshrl.u32 %v1133, 7
        %v1135 = vsub.s32 %v1132, %v1134
        %v1136 = vrot.slane %v1128, %v1135
        %v1138 = vunpack.c.l.s4 1983009808
        %v1139 = vunpack.c.0.s8 %v1138
        %v1140 = vlaneseq
        %v1141 = vshrl.u32 %v1140, 7
        %v1142 = vsub.s32 %v1139, %v1141
        %v1143 = vrot.slane %v1129, %v1142
        %v1144 = vcombine.low %v1089, %v1105
        %v1145 = vcombine.high %v1089, %v1105
        %v1147 = vunpack.c.l.s4 1983009808
        %v1148 = vunpack.c.0.s8 %v1147
        %v1149 = vlaneseq
        %v1150 = vshrl.u32 %v1149, 7
        %v1151 = vsub.s32 %v1148, %v1150
        %v1152 = vrot.slane %v1144, %v1151
        %v1154 = vunpack.c.l.s4 1983009808
        %v1155 = vunpack.c.0.s8 %v1154
        %v1156 = vlaneseq
        %v1157 = vshrl.u32 %v1156, 7
        %v1158 = vsub.s32 %v1155, %v1157
        %v1159 = vrot.slane %v1145, %v1158
        %v1160 = vcombine.low %v1136, %v1152
        %v1161 = vcombine.high %v1136, %v1152
        %v1163 = vunpack.c.l.s4 1934713408
        %v1164 = vunpack.c.0.s8 %v1163
        %v1165 = vlaneseq
        %v1166 = vshrl.u32 %v1165, 7
        %v1167 = vsub.s32 %v1164, %v1166
        %v1168 = vrot.slane %v1160, %v1167
        %v1170 = vunpack.c.l.s4 1934713408
        %v1171 = vunpack.c.0.s8 %v1170
        %v1172 = vlaneseq
        %v1173 = vshrl.u32 %v1172, 7
        %v1174 = vsub.s32 %v1171, %v1173
        %v1175 = vrot.slane %v1161, %v1174
        %v1176 = vcombine.low %v1143, %v1159
        %v1177 = vcombine.high %v1143, %v1159
        %v1179 = vunpack.c.l.s4 1934713408
        %v1180 = vunpack.c.0.s8 %v1179
        %v1181 = vlaneseq
        %v1182 = vshrl.u32 %v1181, 7
        %v1183 = vsub.s32 %v1180, %v1182
        %v1184 = vrot.slane %v1176, %v1183
        %v1186 = vunpack.c.l.s4 1934713408
        %v1187 = vunpack.c.0.s8 %v1186
        %v1188 = vlaneseq
        %v1189 = vshrl.u32 %v1188, 7
        %v1190 = vsub.s32 %v1187, %v1189
        %v1191 = vrot.slane %v1177, %v1190
        %v1192 = vcombine.high %v1168, 0.0
        %v1193 = vcombine.high %v1175, 0.0
        %v1194 = vcombine.high %v1184, 0.0
        %v1195 = vcombine.high %v1191, 0.0
        %v1196 = vcombine.low %v1083, %v1099
        %v1197 = vcombine.high %v1083, %v1099
        %v1199 = vunpack.c.l.s4 1983009808
        %v1200 = vunpack.c.0.s8 %v1199
        %v1201 = vlaneseq
        %v1202 = vshrl.u32 %v1201, 7
        %v1203 = vsub.s32 %v1200, %v1202
        %v1204 = vrot.slane %v1196, %v1203
        %v1206 = vunpack.c.l.s4 1983009808
        %v1207 = vunpack.c.0.s8 %v1206
        %v1208 = vlaneseq
        %v1209 = vshrl.u32 %v1208, 7
        %v1210 = vsub.s32 %v1207, %v1209
        %v1211 = vrot.slane %v1197, %v1210
        %v1212 = vcombine.low %v1091, %v1107
        %v1213 = vcombine.high %v1091, %v1107
        %v1215 = vunpack.c.l.s4 1983009808
        %v1216 = vunpack.c.0.s8 %v1215
        %v1217 = vlaneseq
        %v1218 = vshrl.u32 %v1217, 7
        %v1219 = vsub.s32 %v1216, %v1218
        %v1220 = vrot.slane %v1212, %v1219
        %v1222 = vunpack.c.l.s4 1983009808
        %v1223 = vunpack.c.0.s8 %v1222
        %v1224 = vlaneseq
        %v1225 = vshrl.u32 %v1224, 7
        %v1226 = vsub.s32 %v1223, %v1225
        %v1227 = vrot.slane %v1213, %v1226
        %v1228 = vcombine.low %v1204, %v1220
        %v1229 = vcombine.high %v1204, %v1220
        %v1231 = vunpack.c.l.s4 1934713408
        %v1232 = vunpack.c.0.s8 %v1231
        %v1233 = vlaneseq
        %v1234 = vshrl.u32 %v1233, 7
        %v1235 = vsub.s32 %v1232, %v1234
        %v1236 = vrot.slane %v1228, %v1235
        %v1238 = vunpack.c.l.s4 1934713408
        %v1239 = vunpack.c.0.s8 %v1238
        %v1240 = vlaneseq
        %v1241 = vshrl.u32 %v1240, 7
        %v1242 = vsub.s32 %v1239, %v1241
        %v1243 = vrot.slane %v1229, %v1242
        %v1244 = vcombine.low %v1211, %v1227
        %v1245 = vcombine.high %v1211, %v1227
        %v1247 = vunpack.c.l.s4 1934713408
        %v1248 = vunpack.c.0.s8 %v1247
        %v1249 = vlaneseq
        %v1250 = vshrl.u32 %v1249, 7
        %v1251 = vsub.s32 %v1248, %v1250
        %v1252 = vrot.slane %v1244, %v1251
        %v1254 = vunpack.c.l.s4 1934713408
        %v1255 = vunpack.c.0.s8 %v1254
        %v1256 = vlaneseq
        %v1257 = vshrl.u32 %v1256, 7
        %v1258 = vsub.s32 %v1255, %v1257
        %v1259 = vrot.slane %v1245, %v1258
        %v1260 = vcombine.high %v1236, 0.0
        %v1261 = vcombine.high %v1243, 0.0
        %v1262 = vcombine.high %v1252, 0.0
        %v1263 = vcombine.high %v1259, 0.0
        %v1264 = vcombine.low %v1085, %v1101
        %v1265 = vcombine.high %v1085, %v1101
        %v1267 = vunpack.c.l.s4 1983009808
        %v1268 = vunpack.c.0.s8 %v1267
        %v1269 = vlaneseq
        %v1270 = vshrl.u32 %v1269, 7
        %v1271 = vsub.s32 %v1268, %v1270
        %v1272 = vrot.slane %v1264, %v1271
        %v1274 = vunpack.c.l.s4 1983009808
        %v1275 = vunpack.c.0.s8 %v1274
        %v1276 = vlaneseq
        %v1277 = vshrl.u32 %v1276, 7
        %v1278 = vsub.s32 %v1275, %v1277
        %v1279 = vrot.slane %v1265, %v1278
        %v1280 = vcombine.low %v1093, %v1109
        %v1281 = vcombine.high %v1093, %v1109
        %v1283 = vunpack.c.l.s4 1983009808
        %v1284 = vunpack.c.0.s8 %v1283
        %v1285 = vlaneseq
        %v1286 = vshrl.u32 %v1285, 7
        %v1287 = vsub.s32 %v1284, %v1286
        %v1288 = vrot.slane %v1280, %v1287
        %v1290 = vunpack.c.l.s4 1983009808
        %v1291 = vunpack.c.0.s8 %v1290
        %v1292 = vlaneseq
        %v1293 = vshrl.u32 %v1292, 7
        %v1294 = vsub.s32 %v1291, %v1293
        %v1295 = vrot.slane %v1281, %v1294
        %v1296 = vcombine.low %v1272, %v1288
        %v1297 = vcombine.high %v1272, %v1288
        %v1299 = vunpack.c.l.s4 1934713408
        %v1300 = vunpack.c.0.s8 %v1299
        %v1301 = vlaneseq
        %v1302 = vshrl.u32 %v1301, 7
        %v1303 = vsub.s32 %v1300, %v1302
        %v1304 = vrot.slane %v1296, %v1303
        %v1306 = vunpack.c.l.s4 1934713408
        %v1307 = vunpack.c.0.s8 %v1306
        %v1308 = vlaneseq
        %v1309 = vshrl.u32 %v1308, 7
        %v1310 = vsub.s32 %v1307, %v1309
        %v1311 = vrot.slane %v1297, %v1310
        %v1312 = vcombine.low %v1279, %v1295
        %v1313 = vcombine.high %v1279, %v1295
        %v1315 = vunpack.c.l.s4 1934713408
        %v1316 = vunpack.c.0.s8 %v1315
        %v1317 = vlaneseq
        %v1318 = vshrl.u32 %v1317, 7
        %v1319 = vsub.s32 %v1316, %v1318
        %v1320 = vrot.slane %v1312, %v1319
        %v1322 = vunpack.c.l.s4 1934713408
        %v1323 = vunpack.c.0.s8 %v1322
        %v1324 = vlaneseq
        %v1325 = vshrl.u32 %v1324, 7
        %v1326 = vsub.s32 %v1323, %v1325
        %v1327 = vrot.slane %v1313, %v1326
        %v1328 = vcombine.high %v1304, 0.0
        %v1329 = vcombine.high %v1311, 0.0
        %v1330 = vcombine.high %v1320, 0.0
        %v1331 = vcombine.high %v1327, 0.0
        %v1332 = vcombine.low %v1087, %v1103
        %v1333 = vcombine.high %v1087, %v1103
        %v1335 = vunpack.c.l.s4 1983009808
        %v1336 = vunpack.c.0.s8 %v1335
        %v1337 = vlaneseq
        %v1338 = vshrl.u32 %v1337, 7
        %v1339 = vsub.s32 %v1336, %v1338
        %v1340 = vrot.slane %v1332, %v1339
        %v1342 = vunpack.c.l.s4 1983009808
        %v1343 = vunpack.c.0.s8 %v1342
        %v1344 = vlaneseq
        %v1345 = vshrl.u32 %v1344, 7
        %v1346 = vsub.s32 %v1343, %v1345
        %v1347 = vrot.slane %v1333, %v1346
        %v1348 = vcombine.low %v1095, %v1111
        %v1349 = vcombine.high %v1095, %v1111
        %v1351 = vunpack.c.l.s4 1983009808
        %v1352 = vunpack.c.0.s8 %v1351
        %v1353 = vlaneseq
        %v1354 = vshrl.u32 %v1353, 7
        %v1355 = vsub.s32 %v1352, %v1354
        %v1356 = vrot.slane %v1348, %v1355
        %v1358 = vunpack.c.l.s4 1983009808
        %v1359 = vunpack.c.0.s8 %v1358
        %v1360 = vlaneseq
        %v1361 = vshrl.u32 %v1360, 7
        %v1362 = vsub.s32 %v1359, %v1361
        %v1363 = vrot.slane %v1349, %v1362
        %v1364 = vcombine.low %v1340, %v1356
        %v1365 = vcombine.high %v1340, %v1356
        %v1367 = vunpack.c.l.s4 1934713408
        %v1368 = vunpack.c.0.s8 %v1367
        %v1369 = vlaneseq
        %v1370 = vshrl.u32 %v1369, 7
        %v1371 = vsub.s32 %v1368, %v1370
        %v1372 = vrot.slane %v1364, %v1371
        %v1374 = vunpack.c.l.s4 1934713408
        %v1375 = vunpack.c.0.s8 %v1374
        %v1376 = vlaneseq
        %v1377 = vshrl.u32 %v1376, 7
        %v1378 = vsub.s32 %v1375, %v1377
        %v1379 = vrot.slane %v1365, %v1378
        %v1380 = vcombine.low %v1347, %v1363
        %v1381 = vcombine.high %v1347, %v1363
        %v1383 = vunpack.c.l.s4 1934713408
        %v1384 = vunpack.c.0.s8 %v1383
        %v1385 = vlaneseq
        %v1386 = vshrl.u32 %v1385, 7
        %v1387 = vsub.s32 %v1384, %v1386
        %v1388 = vrot.slane %v1380, %v1387
        %v1390 = vunpack.c.l.s4 1934713408
        %v1391 = vunpack.c.0.s8 %v1390
        %v1392 = vlaneseq
        %v1393 = vshrl.u32 %v1392, 7
        %v1394 = vsub.s32 %v1391, %v1393
        %v1395 = vrot.slane %v1381, %v1394
        %v1396 = vcombine.high %v1372, 0.0
        %v1397 = vcombine.high %v1379, 0.0
        %v1398 = vcombine.high %v1388, 0.0
        %v1399 = vcombine.high %v1395, 0.0
        %1401 = vrot.lane.b32.xlu0 %v1192, 32
        %v1402 = vpop.permute.xlu0 %1401
        %1405 = vrot.lane.b32.xlu0 %v1175, 64
        %v1406 = vpop.permute.xlu0 %1405
        %1409 = vrot.lane.b32.xlu0 %v1193, 96
        %v1410 = vpop.permute.xlu0 %1409
        %1413 = vrot.lane.b32.xlu0 %v1194, 32
        %v1414 = vpop.permute.xlu0 %1413
        %1417 = vrot.lane.b32.xlu0 %v1191, 64
        %v1418 = vpop.permute.xlu0 %1417
        %1421 = vrot.lane.b32.xlu0 %v1195, 96
        %v1422 = vpop.permute.xlu0 %1421
        %1425 = vrot.lane.b32.xlu0 %v1260, 32
        %v1426 = vpop.permute.xlu0 %1425
        %1429 = vrot.lane.b32.xlu0 %v1243, 64
        %v1430 = vpop.permute.xlu0 %1429
        %1433 = vrot.lane.b32.xlu0 %v1261, 96
        %v1434 = vpop.permute.xlu0 %1433
        %1437 = vrot.lane.b32.xlu0 %v1262, 32
        %v1438 = vpop.permute.xlu0 %1437
        %1441 = vrot.lane.b32.xlu0 %v1259, 64
        %v1442 = vpop.permute.xlu0 %1441
        %1445 = vrot.lane.b32.xlu0 %v1263, 96
        %v1446 = vpop.permute.xlu0 %1445
        %1449 = vrot.lane.b32.xlu0 %v1328, 32
        %v1450 = vpop.permute.xlu0 %1449
        %1453 = vrot.lane.b32.xlu0 %v1311, 64
        %v1454 = vpop.permute.xlu0 %1453
        %1457 = vrot.lane.b32.xlu0 %v1329, 96
        %v1458 = vpop.permute.xlu0 %1457
        %1461 = vrot.lane.b32.xlu0 %v1330, 32
        %v1462 = vpop.permute.xlu0 %1461
        %1465 = vrot.lane.b32.xlu0 %v1327, 64
        %v1466 = vpop.permute.xlu0 %1465
        %1469 = vrot.lane.b32.xlu0 %v1331, 96
        %v1470 = vpop.permute.xlu0 %1469
        %1473 = vrot.lane.b32.xlu0 %v1396, 32
        %v1474 = vpop.permute.xlu0 %1473
        %1477 = vrot.lane.b32.xlu0 %v1379, 64
        %v1478 = vpop.permute.xlu0 %1477
        %1481 = vrot.lane.b32.xlu0 %v1397, 96
        %v1482 = vpop.permute.xlu0 %1481
        %1485 = vrot.lane.b32.xlu0 %v1398, 32
        %v1486 = vpop.permute.xlu0 %1485
        %1489 = vrot.lane.b32.xlu0 %v1395, 64
        %v1490 = vpop.permute.xlu0 %1489
        %1493 = vrot.lane.b32.xlu0 %v1399, 96
        %v1494 = vpop.permute.xlu0 %1493
        %v1496 = vsel %vm557, %v1168, %v1402
        %v1497 = vsel %vm559, %v1496, %v1406
        %v1498 = vsel %vm561, %v1497, %v1410
        %v1499 = vsel %vm557, %v1184, %v1414
        %v1500 = vsel %vm559, %v1499, %v1418
        %v1501 = vsel %vm561, %v1500, %v1422
        %v1502 = vsel %vm557, %v1236, %v1426
        %v1503 = vsel %vm559, %v1502, %v1430
        %v1504 = vsel %vm561, %v1503, %v1434
        %v1505 = vsel %vm557, %v1252, %v1438
        %v1506 = vsel %vm559, %v1505, %v1442
        %v1507 = vsel %vm561, %v1506, %v1446
        %v1508 = vsel %vm557, %v1304, %v1450
        %v1509 = vsel %vm559, %v1508, %v1454
        %v1510 = vsel %vm561, %v1509, %v1458
        %v1511 = vsel %vm557, %v1320, %v1462
        %v1512 = vsel %vm559, %v1511, %v1466
        %v1513 = vsel %vm561, %v1512, %v1470
        %v1514 = vsel %vm557, %v1372, %v1474
        %v1515 = vsel %vm559, %v1514, %v1478
        %v1516 = vsel %vm561, %v1515, %v1482
        %v1517 = vsel %vm557, %v1388, %v1486
        %v1518 = vsel %vm559, %v1517, %v1490
        %v1519 = vsel %vm561, %v1518, %v1494
        %1520 = vst [vmem:[#allocation2 + $0x40] sm:$0xf] %v1498
        %1521 = vst [vmem:[#allocation2 + $0x48] sm:$0xf] %v1501
        %1522 = vst [vmem:[#allocation2 + $0x50] sm:$0xf] %v1504
        %1523 = vst [vmem:[#allocation2 + $0x58] sm:$0xf] %v1507
        %1524 = vst [vmem:[#allocation2 + $0x60] sm:$0xf] %v1510
        %1525 = vst [vmem:[#allocation2 + $0x68] sm:$0xf] %v1513
        %1526 = vst [vmem:[#allocation2 + $0x70] sm:$0xf] %v1516
        %1527 = vst [vmem:[#allocation2 + $0x78] sm:$0xf] %v1519
        %vm1532 = vcmask 1046528
        %v1533 = vrot.slane %v169, 1
        %v1534 = vrot.slane %v170, 1
        %v1535 = vsel %vm1532, %v1533, %v1534
        %v1536 = vrot.slane %v171, 1
        %v1537 = vsel %vm1532, %v1534, %v1536
        %v1538 = vrot.slane %v172, 1
        %v1539 = vsel %vm1532, %v1536, %v1538
        %v1540 = vrot.slane %v173, 1
        %v1541 = vsel %vm1532, %v1538, %v1540
        %v1542 = vrot.slane %v174, 1
        %v1543 = vrot.slane %v175, 1
        %v1544 = vsel %vm1532, %v1542, %v1543
        %v1545 = vrot.slane %v176, 1
        %v1546 = vsel %vm1532, %v1543, %v1545
        %v1547 = vrot.slane %v177, 1
        %v1548 = vsel %vm1532, %v1545, %v1547
        %v1549 = vrot.slane %v178, 1
        %v1550 = vsel %vm1532, %v1547, %v1549
        %v1551 = vrot.slane %v179, 1
        %v1552 = vrot.slane %v180, 1
        %v1553 = vsel %vm1532, %v1551, %v1552
        %v1554 = vrot.slane %v181, 1
        %v1555 = vsel %vm1532, %v1552, %v1554
        %v1556 = vrot.slane %v182, 1
        %v1557 = vsel %vm1532, %v1554, %v1556
        %v1558 = vrot.slane %v183, 1
        %v1559 = vsel %vm1532, %v1556, %v1558
        %v1560 = vrot.slane %v184, 1
        %v1561 = vrot.slane %v185, 1
        %v1562 = vsel %vm1532, %v1560, %v1561
        %v1563 = vrot.slane %v186, 1
        %v1564 = vsel %vm1532, %v1561, %v1563
        %v1565 = vrot.slane %v187, 1
        %v1566 = vsel %vm1532, %v1563, %v1565
        %v1567 = vrot.slane %v188, 1
        %v1568 = vsel %vm1532, %v1565, %v1567
        %v1585 = vcombine.low %v1535, %v1553
        %v1586 = vcombine.high %v1535, %v1553
        %v1588 = vunpack.c.l.s4 1983009808
        %v1589 = vunpack.c.0.s8 %v1588
        %v1590 = vlaneseq
        %v1591 = vshrl.u32 %v1590, 7
        %v1592 = vsub.s32 %v1589, %v1591
        %v1593 = vrot.slane %v1585, %v1592
        %v1595 = vunpack.c.l.s4 1983009808
        %v1596 = vunpack.c.0.s8 %v1595
        %v1597 = vlaneseq
        %v1598 = vshrl.u32 %v1597, 7
        %v1599 = vsub.s32 %v1596, %v1598
        %v1600 = vrot.slane %v1586, %v1599
        %v1601 = vcombine.low %v1544, %v1562
        %v1602 = vcombine.high %v1544, %v1562
        %v1604 = vunpack.c.l.s4 1983009808
        %v1605 = vunpack.c.0.s8 %v1604
        %v1606 = vlaneseq
        %v1607 = vshrl.u32 %v1606, 7
        %v1608 = vsub.s32 %v1605, %v1607
        %v1609 = vrot.slane %v1601, %v1608
        %v1611 = vunpack.c.l.s4 1983009808
        %v1612 = vunpack.c.0.s8 %v1611
        %v1613 = vlaneseq
        %v1614 = vshrl.u32 %v1613, 7
        %v1615 = vsub.s32 %v1612, %v1614
        %v1616 = vrot.slane %v1602, %v1615
        %v1617 = vcombine.low %v1593, %v1609
        %v1618 = vcombine.high %v1593, %v1609
        %v1620 = vunpack.c.l.s4 1934713408
        %v1621 = vunpack.c.0.s8 %v1620
        %v1622 = vlaneseq
        %v1623 = vshrl.u32 %v1622, 7
        %v1624 = vsub.s32 %v1621, %v1623
        %v1625 = vrot.slane %v1617, %v1624
        %v1627 = vunpack.c.l.s4 1934713408
        %v1628 = vunpack.c.0.s8 %v1627
        %v1629 = vlaneseq
        %v1630 = vshrl.u32 %v1629, 7
        %v1631 = vsub.s32 %v1628, %v1630
        %v1632 = vrot.slane %v1618, %v1631
        %v1633 = vcombine.low %v1600, %v1616
        %v1634 = vcombine.high %v1600, %v1616
        %v1636 = vunpack.c.l.s4 1934713408
        %v1637 = vunpack.c.0.s8 %v1636
        %v1638 = vlaneseq
        %v1639 = vshrl.u32 %v1638, 7
        %v1640 = vsub.s32 %v1637, %v1639
        %v1641 = vrot.slane %v1633, %v1640
        %v1643 = vunpack.c.l.s4 1934713408
        %v1644 = vunpack.c.0.s8 %v1643
        %v1645 = vlaneseq
        %v1646 = vshrl.u32 %v1645, 7
        %v1647 = vsub.s32 %v1644, %v1646
        %v1648 = vrot.slane %v1634, %v1647
        %v1649 = vcombine.high %v1625, 0.0
        %v1650 = vcombine.high %v1632, 0.0
        %v1651 = vcombine.high %v1641, 0.0
        %v1652 = vcombine.high %v1648, 0.0
        %v1653 = vcombine.low %v1537, %v1555
        %v1654 = vcombine.high %v1537, %v1555
        %v1656 = vunpack.c.l.s4 1983009808
        %v1657 = vunpack.c.0.s8 %v1656
        %v1658 = vlaneseq
        %v1659 = vshrl.u32 %v1658, 7
        %v1660 = vsub.s32 %v1657, %v1659
        %v1661 = vrot.slane %v1653, %v1660
        %v1663 = vunpack.c.l.s4 1983009808
        %v1664 = vunpack.c.0.s8 %v1663
        %v1665 = vlaneseq
        %v1666 = vshrl.u32 %v1665, 7
        %v1667 = vsub.s32 %v1664, %v1666
        %v1668 = vrot.slane %v1654, %v1667
        %v1669 = vcombine.low %v1546, %v1564
        %v1670 = vcombine.high %v1546, %v1564
        %v1672 = vunpack.c.l.s4 1983009808
        %v1673 = vunpack.c.0.s8 %v1672
        %v1674 = vlaneseq
        %v1675 = vshrl.u32 %v1674, 7
        %v1676 = vsub.s32 %v1673, %v1675
        %v1677 = vrot.slane %v1669, %v1676
        %v1679 = vunpack.c.l.s4 1983009808
        %v1680 = vunpack.c.0.s8 %v1679
        %v1681 = vlaneseq
        %v1682 = vshrl.u32 %v1681, 7
        %v1683 = vsub.s32 %v1680, %v1682
        %v1684 = vrot.slane %v1670, %v1683
        %v1685 = vcombine.low %v1661, %v1677
        %v1686 = vcombine.high %v1661, %v1677
        %v1688 = vunpack.c.l.s4 1934713408
        %v1689 = vunpack.c.0.s8 %v1688
        %v1690 = vlaneseq
        %v1691 = vshrl.u32 %v1690, 7
        %v1692 = vsub.s32 %v1689, %v1691
        %v1693 = vrot.slane %v1685, %v1692
        %v1695 = vunpack.c.l.s4 1934713408
        %v1696 = vunpack.c.0.s8 %v1695
        %v1697 = vlaneseq
        %v1698 = vshrl.u32 %v1697, 7
        %v1699 = vsub.s32 %v1696, %v1698
        %v1700 = vrot.slane %v1686, %v1699
        %v1701 = vcombine.low %v1668, %v1684
        %v1702 = vcombine.high %v1668, %v1684
        %v1704 = vunpack.c.l.s4 1934713408
        %v1705 = vunpack.c.0.s8 %v1704
        %v1706 = vlaneseq
        %v1707 = vshrl.u32 %v1706, 7
        %v1708 = vsub.s32 %v1705, %v1707
        %v1709 = vrot.slane %v1701, %v1708
        %v1711 = vunpack.c.l.s4 1934713408
        %v1712 = vunpack.c.0.s8 %v1711
        %v1713 = vlaneseq
        %v1714 = vshrl.u32 %v1713, 7
        %v1715 = vsub.s32 %v1712, %v1714
        %v1716 = vrot.slane %v1702, %v1715
        %v1717 = vcombine.high %v1693, 0.0
        %v1718 = vcombine.high %v1700, 0.0
        %v1719 = vcombine.high %v1709, 0.0
        %v1720 = vcombine.high %v1716, 0.0
        %v1721 = vcombine.low %v1539, %v1557
        %v1722 = vcombine.high %v1539, %v1557
        %v1724 = vunpack.c.l.s4 1983009808
        %v1725 = vunpack.c.0.s8 %v1724
        %v1726 = vlaneseq
        %v1727 = vshrl.u32 %v1726, 7
        %v1728 = vsub.s32 %v1725, %v1727
        %v1729 = vrot.slane %v1721, %v1728
        %v1731 = vunpack.c.l.s4 1983009808
        %v1732 = vunpack.c.0.s8 %v1731
        %v1733 = vlaneseq
        %v1734 = vshrl.u32 %v1733, 7
        %v1735 = vsub.s32 %v1732, %v1734
        %v1736 = vrot.slane %v1722, %v1735
        %v1737 = vcombine.low %v1548, %v1566
        %v1738 = vcombine.high %v1548, %v1566
        %v1740 = vunpack.c.l.s4 1983009808
        %v1741 = vunpack.c.0.s8 %v1740
        %v1742 = vlaneseq
        %v1743 = vshrl.u32 %v1742, 7
        %v1744 = vsub.s32 %v1741, %v1743
        %v1745 = vrot.slane %v1737, %v1744
        %v1747 = vunpack.c.l.s4 1983009808
        %v1748 = vunpack.c.0.s8 %v1747
        %v1749 = vlaneseq
        %v1750 = vshrl.u32 %v1749, 7
        %v1751 = vsub.s32 %v1748, %v1750
        %v1752 = vrot.slane %v1738, %v1751
        %v1753 = vcombine.low %v1729, %v1745
        %v1754 = vcombine.high %v1729, %v1745
        %v1756 = vunpack.c.l.s4 1934713408
        %v1757 = vunpack.c.0.s8 %v1756
        %v1758 = vlaneseq
        %v1759 = vshrl.u32 %v1758, 7
        %v1760 = vsub.s32 %v1757, %v1759
        %v1761 = vrot.slane %v1753, %v1760
        %v1763 = vunpack.c.l.s4 1934713408
        %v1764 = vunpack.c.0.s8 %v1763
        %v1765 = vlaneseq
        %v1766 = vshrl.u32 %v1765, 7
        %v1767 = vsub.s32 %v1764, %v1766
        %v1768 = vrot.slane %v1754, %v1767
        %v1769 = vcombine.low %v1736, %v1752
        %v1770 = vcombine.high %v1736, %v1752
        %v1772 = vunpack.c.l.s4 1934713408
        %v1773 = vunpack.c.0.s8 %v1772
        %v1774 = vlaneseq
        %v1775 = vshrl.u32 %v1774, 7
        %v1776 = vsub.s32 %v1773, %v1775
        %v1777 = vrot.slane %v1769, %v1776
        %v1779 = vunpack.c.l.s4 1934713408
        %v1780 = vunpack.c.0.s8 %v1779
        %v1781 = vlaneseq
        %v1782 = vshrl.u32 %v1781, 7
        %v1783 = vsub.s32 %v1780, %v1782
        %v1784 = vrot.slane %v1770, %v1783
        %v1785 = vcombine.high %v1761, 0.0
        %v1786 = vcombine.high %v1768, 0.0
        %v1787 = vcombine.high %v1777, 0.0
        %v1788 = vcombine.high %v1784, 0.0
        %v1789 = vcombine.low %v1541, %v1559
        %v1790 = vcombine.high %v1541, %v1559
        %v1792 = vunpack.c.l.s4 1983009808
        %v1793 = vunpack.c.0.s8 %v1792
        %v1794 = vlaneseq
        %v1795 = vshrl.u32 %v1794, 7
        %v1796 = vsub.s32 %v1793, %v1795
        %v1797 = vrot.slane %v1789, %v1796
        %v1799 = vunpack.c.l.s4 1983009808
        %v1800 = vunpack.c.0.s8 %v1799
        %v1801 = vlaneseq
        %v1802 = vshrl.u32 %v1801, 7
        %v1803 = vsub.s32 %v1800, %v1802
        %v1804 = vrot.slane %v1790, %v1803
        %v1805 = vcombine.low %v1550, %v1568
        %v1806 = vcombine.high %v1550, %v1568
        %v1808 = vunpack.c.l.s4 1983009808
        %v1809 = vunpack.c.0.s8 %v1808
        %v1810 = vlaneseq
        %v1811 = vshrl.u32 %v1810, 7
        %v1812 = vsub.s32 %v1809, %v1811
        %v1813 = vrot.slane %v1805, %v1812
        %v1815 = vunpack.c.l.s4 1983009808
        %v1816 = vunpack.c.0.s8 %v1815
        %v1817 = vlaneseq
        %v1818 = vshrl.u32 %v1817, 7
        %v1819 = vsub.s32 %v1816, %v1818
        %v1820 = vrot.slane %v1806, %v1819
        %v1821 = vcombine.low %v1797, %v1813
        %v1822 = vcombine.high %v1797, %v1813
        %v1824 = vunpack.c.l.s4 1934713408
        %v1825 = vunpack.c.0.s8 %v1824
        %v1826 = vlaneseq
        %v1827 = vshrl.u32 %v1826, 7
        %v1828 = vsub.s32 %v1825, %v1827
        %v1829 = vrot.slane %v1821, %v1828
        %v1831 = vunpack.c.l.s4 1934713408
        %v1832 = vunpack.c.0.s8 %v1831
        %v1833 = vlaneseq
        %v1834 = vshrl.u32 %v1833, 7
        %v1835 = vsub.s32 %v1832, %v1834
        %v1836 = vrot.slane %v1822, %v1835
        %v1837 = vcombine.low %v1804, %v1820
        %v1838 = vcombine.high %v1804, %v1820
        %v1840 = vunpack.c.l.s4 1934713408
        %v1841 = vunpack.c.0.s8 %v1840
        %v1842 = vlaneseq
        %v1843 = vshrl.u32 %v1842, 7
        %v1844 = vsub.s32 %v1841, %v1843
        %v1845 = vrot.slane %v1837, %v1844
        %v1847 = vunpack.c.l.s4 1934713408
        %v1848 = vunpack.c.0.s8 %v1847
        %v1849 = vlaneseq
        %v1850 = vshrl.u32 %v1849, 7
        %v1851 = vsub.s32 %v1848, %v1850
        %v1852 = vrot.slane %v1838, %v1851
        %v1853 = vcombine.high %v1829, 0.0
        %v1854 = vcombine.high %v1836, 0.0
        %v1855 = vcombine.high %v1845, 0.0
        %v1856 = vcombine.high %v1852, 0.0
        %1858 = vrot.lane.b32.xlu0 %v1649, 32
        %v1859 = vpop.permute.xlu0 %1858
        %1862 = vrot.lane.b32.xlu0 %v1632, 64
        %v1863 = vpop.permute.xlu0 %1862
        %1866 = vrot.lane.b32.xlu0 %v1650, 96
        %v1867 = vpop.permute.xlu0 %1866
        %1870 = vrot.lane.b32.xlu0 %v1651, 32
        %v1871 = vpop.permute.xlu0 %1870
        %1874 = vrot.lane.b32.xlu0 %v1648, 64
        %v1875 = vpop.permute.xlu0 %1874
        %1878 = vrot.lane.b32.xlu0 %v1652, 96
        %v1879 = vpop.permute.xlu0 %1878
        %1882 = vrot.lane.b32.xlu0 %v1717, 32
        %v1883 = vpop.permute.xlu0 %1882
        %1886 = vrot.lane.b32.xlu0 %v1700, 64
        %v1887 = vpop.permute.xlu0 %1886
        %1890 = vrot.lane.b32.xlu0 %v1718, 96
        %v1891 = vpop.permute.xlu0 %1890
        %1894 = vrot.lane.b32.xlu0 %v1719, 32
        %v1895 = vpop.permute.xlu0 %1894
        %1898 = vrot.lane.b32.xlu0 %v1716, 64
        %v1899 = vpop.permute.xlu0 %1898
        %1902 = vrot.lane.b32.xlu0 %v1720, 96
        %v1903 = vpop.permute.xlu0 %1902
        %1906 = vrot.lane.b32.xlu0 %v1785, 32
        %v1907 = vpop.permute.xlu0 %1906
        %1910 = vrot.lane.b32.xlu0 %v1768, 64
        %v1911 = vpop.permute.xlu0 %1910
        %1914 = vrot.lane.b32.xlu0 %v1786, 96
        %v1915 = vpop.permute.xlu0 %1914
        %1918 = vrot.lane.b32.xlu0 %v1787, 32
        %v1919 = vpop.permute.xlu0 %1918
        %1922 = vrot.lane.b32.xlu0 %v1784, 64
        %v1923 = vpop.permute.xlu0 %1922
        %1926 = vrot.lane.b32.xlu0 %v1788, 96
        %v1927 = vpop.permute.xlu0 %1926
        %1930 = vrot.lane.b32.xlu0 %v1853, 32
        %v1931 = vpop.permute.xlu0 %1930
        %1934 = vrot.lane.b32.xlu0 %v1836, 64
        %v1935 = vpop.permute.xlu0 %1934
        %1938 = vrot.lane.b32.xlu0 %v1854, 96
        %v1939 = vpop.permute.xlu0 %1938
        %1942 = vrot.lane.b32.xlu0 %v1855, 32
        %v1943 = vpop.permute.xlu0 %1942
        %1946 = vrot.lane.b32.xlu0 %v1852, 64
        %v1947 = vpop.permute.xlu0 %1946
        %1950 = vrot.lane.b32.xlu0 %v1856, 96
        %v1951 = vpop.permute.xlu0 %1950
        %v1953 = vsel %vm557, %v1625, %v1859
        %v1954 = vsel %vm559, %v1953, %v1863
        %v1955 = vsel %vm561, %v1954, %v1867
        %v1956 = vsel %vm557, %v1641, %v1871
        %v1957 = vsel %vm559, %v1956, %v1875
        %v1958 = vsel %vm561, %v1957, %v1879
        %v1959 = vsel %vm557, %v1693, %v1883
        %v1960 = vsel %vm559, %v1959, %v1887
        %v1961 = vsel %vm561, %v1960, %v1891
        %v1962 = vsel %vm557, %v1709, %v1895
        %v1963 = vsel %vm559, %v1962, %v1899
        %v1964 = vsel %vm561, %v1963, %v1903
        %v1965 = vsel %vm557, %v1761, %v1907
        %v1966 = vsel %vm559, %v1965, %v1911
        %v1967 = vsel %vm561, %v1966, %v1915
        %v1968 = vsel %vm557, %v1777, %v1919
        %v1969 = vsel %vm559, %v1968, %v1923
        %v1970 = vsel %vm561, %v1969, %v1927
        %v1971 = vsel %vm557, %v1829, %v1931
        %v1972 = vsel %vm559, %v1971, %v1935
        %v1973 = vsel %vm561, %v1972, %v1939
        %v1974 = vsel %vm557, %v1845, %v1943
        %v1975 = vsel %vm559, %v1974, %v1947
        %v1976 = vsel %vm561, %v1975, %v1951
        %v1985 = vrot.slane %v1955, 4
        %v1986 = vrot.slane %v1958, 4
        %v1987 = vrot.slane %v1961, 4
        %v1988 = vrot.slane %v1964, 4
        %v1989 = vrot.slane %v1967, 4
        %v1990 = vrot.slane %v1970, 4
        %v1991 = vrot.slane %v1973, 4
        %v1992 = vrot.slane %v1976, 4
        %2001 = vst [vmem:[#allocation2 + $0x40] sm:$0xf0] %v1985
        %2002 = vst [vmem:[#allocation2 + $0x48] sm:$0xf0] %v1986
        %2003 = vst [vmem:[#allocation2 + $0x50] sm:$0xf0] %v1987
        %2004 = vst [vmem:[#allocation2 + $0x58] sm:$0xf0] %v1988
        %2005 = vst [vmem:[#allocation2 + $0x60] sm:$0xf0] %v1989
        %2006 = vst [vmem:[#allocation2 + $0x68] sm:$0xf0] %v1990
        %2007 = vst [vmem:[#allocation2 + $0x70] sm:$0xf0] %v1991
        %2008 = vst [vmem:[#allocation2 + $0x78] sm:$0xf0] %v1992
        %2009 = vrot.lane.b32.xlu0 %v1535, 127
        %v2010 = vpop.permute.xlu0 %2009
        %2011 = vrot.lane.b32.xlu0 %v1537, 127
        %v2012 = vpop.permute.xlu0 %2011
        %2013 = vrot.lane.b32.xlu0 %v1539, 127
        %v2014 = vpop.permute.xlu0 %2013
        %2015 = vrot.lane.b32.xlu0 %v1541, 127
        %v2016 = vpop.permute.xlu0 %2015
        %2017 = vrot.lane.b32.xlu0 %v1544, 127
        %v2018 = vpop.permute.xlu0 %2017
        %2019 = vrot.lane.b32.xlu0 %v1546, 127
        %v2020 = vpop.permute.xlu0 %2019
        %2021 = vrot.lane.b32.xlu0 %v1548, 127
        %v2022 = vpop.permute.xlu0 %2021
        %2023 = vrot.lane.b32.xlu0 %v1550, 127
        %v2024 = vpop.permute.xlu0 %2023
        %2025 = vrot.lane.b32.xlu0 %v1553, 127
        %v2026 = vpop.permute.xlu0 %2025
        %2027 = vrot.lane.b32.xlu0 %v1555, 127
        %v2028 = vpop.permute.xlu0 %2027
        %2029 = vrot.lane.b32.xlu0 %v1557, 127
        %v2030 = vpop.permute.xlu0 %2029
        %2031 = vrot.lane.b32.xlu0 %v1559, 127
        %v2032 = vpop.permute.xlu0 %2031
        %2033 = vrot.lane.b32.xlu0 %v1562, 127
        %v2034 = vpop.permute.xlu0 %2033
        %2035 = vrot.lane.b32.xlu0 %v1564, 127
        %v2036 = vpop.permute.xlu0 %2035
        %2037 = vrot.lane.b32.xlu0 %v1566, 127
        %v2038 = vpop.permute.xlu0 %2037
        %2039 = vrot.lane.b32.xlu0 %v1568, 127
        %v2040 = vpop.permute.xlu0 %2039
        %v2057 = vcombine.low %v2010, %v2026
        %v2058 = vcombine.high %v2010, %v2026
        %v2060 = vunpack.c.l.s4 1983009808
        %v2061 = vunpack.c.0.s8 %v2060
        %v2062 = vlaneseq
        %v2063 = vshrl.u32 %v2062, 7
        %v2064 = vsub.s32 %v2061, %v2063
        %v2065 = vrot.slane %v2057, %v2064
        %v2067 = vunpack.c.l.s4 1983009808
        %v2068 = vunpack.c.0.s8 %v2067
        %v2069 = vlaneseq
        %v2070 = vshrl.u32 %v2069, 7
        %v2071 = vsub.s32 %v2068, %v2070
        %v2072 = vrot.slane %v2058, %v2071
        %v2073 = vcombine.low %v2018, %v2034
        %v2074 = vcombine.high %v2018, %v2034
        %v2076 = vunpack.c.l.s4 1983009808
        %v2077 = vunpack.c.0.s8 %v2076
        %v2078 = vlaneseq
        %v2079 = vshrl.u32 %v2078, 7
        %v2080 = vsub.s32 %v2077, %v2079
        %v2081 = vrot.slane %v2073, %v2080
        %v2083 = vunpack.c.l.s4 1983009808
        %v2084 = vunpack.c.0.s8 %v2083
        %v2085 = vlaneseq
        %v2086 = vshrl.u32 %v2085, 7
        %v2087 = vsub.s32 %v2084, %v2086
        %v2088 = vrot.slane %v2074, %v2087
        %v2089 = vcombine.low %v2065, %v2081
        %v2090 = vcombine.high %v2065, %v2081
        %v2092 = vunpack.c.l.s4 1934713408
        %v2093 = vunpack.c.0.s8 %v2092
        %v2094 = vlaneseq
        %v2095 = vshrl.u32 %v2094, 7
        %v2096 = vsub.s32 %v2093, %v2095
        %v2097 = vrot.slane %v2089, %v2096
        %v2099 = vunpack.c.l.s4 1934713408
        %v2100 = vunpack.c.0.s8 %v2099
        %v2101 = vlaneseq
        %v2102 = vshrl.u32 %v2101, 7
        %v2103 = vsub.s32 %v2100, %v2102
        %v2104 = vrot.slane %v2090, %v2103
        %v2105 = vcombine.low %v2072, %v2088
        %v2106 = vcombine.high %v2072, %v2088
        %v2108 = vunpack.c.l.s4 1934713408
        %v2109 = vunpack.c.0.s8 %v2108
        %v2110 = vlaneseq
        %v2111 = vshrl.u32 %v2110, 7
        %v2112 = vsub.s32 %v2109, %v2111
        %v2113 = vrot.slane %v2105, %v2112
        %v2115 = vunpack.c.l.s4 1934713408
        %v2116 = vunpack.c.0.s8 %v2115
        %v2117 = vlaneseq
        %v2118 = vshrl.u32 %v2117, 7
        %v2119 = vsub.s32 %v2116, %v2118
        %v2120 = vrot.slane %v2106, %v2119
        %v2121 = vcombine.high %v2097, 0.0
        %v2122 = vcombine.high %v2104, 0.0
        %v2123 = vcombine.high %v2113, 0.0
        %v2124 = vcombine.high %v2120, 0.0
        %v2125 = vcombine.low %v2012, %v2028
        %v2126 = vcombine.high %v2012, %v2028
        %v2128 = vunpack.c.l.s4 1983009808
        %v2129 = vunpack.c.0.s8 %v2128
        %v2130 = vlaneseq
        %v2131 = vshrl.u32 %v2130, 7
        %v2132 = vsub.s32 %v2129, %v2131
        %v2133 = vrot.slane %v2125, %v2132
        %v2135 = vunpack.c.l.s4 1983009808
        %v2136 = vunpack.c.0.s8 %v2135
        %v2137 = vlaneseq
        %v2138 = vshrl.u32 %v2137, 7
        %v2139 = vsub.s32 %v2136, %v2138
        %v2140 = vrot.slane %v2126, %v2139
        %v2141 = vcombine.low %v2020, %v2036
        %v2142 = vcombine.high %v2020, %v2036
        %v2144 = vunpack.c.l.s4 1983009808
        %v2145 = vunpack.c.0.s8 %v2144
        %v2146 = vlaneseq
        %v2147 = vshrl.u32 %v2146, 7
        %v2148 = vsub.s32 %v2145, %v2147
        %v2149 = vrot.slane %v2141, %v2148
        %v2151 = vunpack.c.l.s4 1983009808
        %v2152 = vunpack.c.0.s8 %v2151
        %v2153 = vlaneseq
        %v2154 = vshrl.u32 %v2153, 7
        %v2155 = vsub.s32 %v2152, %v2154
        %v2156 = vrot.slane %v2142, %v2155
        %v2157 = vcombine.low %v2133, %v2149
        %v2158 = vcombine.high %v2133, %v2149
        %v2160 = vunpack.c.l.s4 1934713408
        %v2161 = vunpack.c.0.s8 %v2160
        %v2162 = vlaneseq
        %v2163 = vshrl.u32 %v2162, 7
        %v2164 = vsub.s32 %v2161, %v2163
        %v2165 = vrot.slane %v2157, %v2164
        %v2167 = vunpack.c.l.s4 1934713408
        %v2168 = vunpack.c.0.s8 %v2167
        %v2169 = vlaneseq
        %v2170 = vshrl.u32 %v2169, 7
        %v2171 = vsub.s32 %v2168, %v2170
        %v2172 = vrot.slane %v2158, %v2171
        %v2173 = vcombine.low %v2140, %v2156
        %v2174 = vcombine.high %v2140, %v2156
        %v2176 = vunpack.c.l.s4 1934713408
        %v2177 = vunpack.c.0.s8 %v2176
        %v2178 = vlaneseq
        %v2179 = vshrl.u32 %v2178, 7
        %v2180 = vsub.s32 %v2177, %v2179
        %v2181 = vrot.slane %v2173, %v2180
        %v2183 = vunpack.c.l.s4 1934713408
        %v2184 = vunpack.c.0.s8 %v2183
        %v2185 = vlaneseq
        %v2186 = vshrl.u32 %v2185, 7
        %v2187 = vsub.s32 %v2184, %v2186
        %v2188 = vrot.slane %v2174, %v2187
        %v2189 = vcombine.high %v2165, 0.0
        %v2190 = vcombine.high %v2172, 0.0
        %v2191 = vcombine.high %v2181, 0.0
        %v2192 = vcombine.high %v2188, 0.0
        %v2193 = vcombine.low %v2014, %v2030
        %v2194 = vcombine.high %v2014, %v2030
        %v2196 = vunpack.c.l.s4 1983009808
        %v2197 = vunpack.c.0.s8 %v2196
        %v2198 = vlaneseq
        %v2199 = vshrl.u32 %v2198, 7
        %v2200 = vsub.s32 %v2197, %v2199
        %v2201 = vrot.slane %v2193, %v2200
        %v2203 = vunpack.c.l.s4 1983009808
        %v2204 = vunpack.c.0.s8 %v2203
        %v2205 = vlaneseq
        %v2206 = vshrl.u32 %v2205, 7
        %v2207 = vsub.s32 %v2204, %v2206
        %v2208 = vrot.slane %v2194, %v2207
        %v2209 = vcombine.low %v2022, %v2038
        %v2210 = vcombine.high %v2022, %v2038
        %v2212 = vunpack.c.l.s4 1983009808
        %v2213 = vunpack.c.0.s8 %v2212
        %v2214 = vlaneseq
        %v2215 = vshrl.u32 %v2214, 7
        %v2216 = vsub.s32 %v2213, %v2215
        %v2217 = vrot.slane %v2209, %v2216
        %v2219 = vunpack.c.l.s4 1983009808
        %v2220 = vunpack.c.0.s8 %v2219
        %v2221 = vlaneseq
        %v2222 = vshrl.u32 %v2221, 7
        %v2223 = vsub.s32 %v2220, %v2222
        %v2224 = vrot.slane %v2210, %v2223
        %v2225 = vcombine.low %v2201, %v2217
        %v2226 = vcombine.high %v2201, %v2217
        %v2228 = vunpack.c.l.s4 1934713408
        %v2229 = vunpack.c.0.s8 %v2228
        %v2230 = vlaneseq
        %v2231 = vshrl.u32 %v2230, 7
        %v2232 = vsub.s32 %v2229, %v2231
        %v2233 = vrot.slane %v2225, %v2232
        %v2235 = vunpack.c.l.s4 1934713408
        %v2236 = vunpack.c.0.s8 %v2235
        %v2237 = vlaneseq
        %v2238 = vshrl.u32 %v2237, 7
        %v2239 = vsub.s32 %v2236, %v2238
        %v2240 = vrot.slane %v2226, %v2239
        %v2241 = vcombine.low %v2208, %v2224
        %v2242 = vcombine.high %v2208, %v2224
        %v2244 = vunpack.c.l.s4 1934713408
        %v2245 = vunpack.c.0.s8 %v2244
        %v2246 = vlaneseq
        %v2247 = vshrl.u32 %v2246, 7
        %v2248 = vsub.s32 %v2245, %v2247
        %v2249 = vrot.slane %v2241, %v2248
        %v2251 = vunpack.c.l.s4 1934713408
        %v2252 = vunpack.c.0.s8 %v2251
        %v2253 = vlaneseq
        %v2254 = vshrl.u32 %v2253, 7
        %v2255 = vsub.s32 %v2252, %v2254
        %v2256 = vrot.slane %v2242, %v2255
        %v2257 = vcombine.high %v2233, 0.0
        %v2258 = vcombine.high %v2240, 0.0
        %v2259 = vcombine.high %v2249, 0.0
        %v2260 = vcombine.high %v2256, 0.0
        %v2261 = vcombine.low %v2016, %v2032
        %v2262 = vcombine.high %v2016, %v2032
        %v2264 = vunpack.c.l.s4 1983009808
        %v2265 = vunpack.c.0.s8 %v2264
        %v2266 = vlaneseq
        %v2267 = vshrl.u32 %v2266, 7
        %v2268 = vsub.s32 %v2265, %v2267
        %v2269 = vrot.slane %v2261, %v2268
        %v2271 = vunpack.c.l.s4 1983009808
        %v2272 = vunpack.c.0.s8 %v2271
        %v2273 = vlaneseq
        %v2274 = vshrl.u32 %v2273, 7
        %v2275 = vsub.s32 %v2272, %v2274
        %v2276 = vrot.slane %v2262, %v2275
        %v2277 = vcombine.low %v2024, %v2040
        %v2278 = vcombine.high %v2024, %v2040
        %v2280 = vunpack.c.l.s4 1983009808
        %v2281 = vunpack.c.0.s8 %v2280
        %v2282 = vlaneseq
        %v2283 = vshrl.u32 %v2282, 7
        %v2284 = vsub.s32 %v2281, %v2283
        %v2285 = vrot.slane %v2277, %v2284
        %v2287 = vunpack.c.l.s4 1983009808
        %v2288 = vunpack.c.0.s8 %v2287
        %v2289 = vlaneseq
        %v2290 = vshrl.u32 %v2289, 7
        %v2291 = vsub.s32 %v2288, %v2290
        %v2292 = vrot.slane %v2278, %v2291
        %v2293 = vcombine.low %v2269, %v2285
        %v2294 = vcombine.high %v2269, %v2285
        %v2296 = vunpack.c.l.s4 1934713408
        %v2297 = vunpack.c.0.s8 %v2296
        %v2298 = vlaneseq
        %v2299 = vshrl.u32 %v2298, 7
        %v2300 = vsub.s32 %v2297, %v2299
        %v2301 = vrot.slane %v2293, %v2300
        %v2303 = vunpack.c.l.s4 1934713408
        %v2304 = vunpack.c.0.s8 %v2303
        %v2305 = vlaneseq
        %v2306 = vshrl.u32 %v2305, 7
        %v2307 = vsub.s32 %v2304, %v2306
        %v2308 = vrot.slane %v2294, %v2307
        %v2309 = vcombine.low %v2276, %v2292
        %v2310 = vcombine.high %v2276, %v2292
        %v2312 = vunpack.c.l.s4 1934713408
        %v2313 = vunpack.c.0.s8 %v2312
        %v2314 = vlaneseq
        %v2315 = vshrl.u32 %v2314, 7
        %v2316 = vsub.s32 %v2313, %v2315
        %v2317 = vrot.slane %v2309, %v2316
        %v2319 = vunpack.c.l.s4 1934713408
        %v2320 = vunpack.c.0.s8 %v2319
        %v2321 = vlaneseq
        %v2322 = vshrl.u32 %v2321, 7
        %v2323 = vsub.s32 %v2320, %v2322
        %v2324 = vrot.slane %v2310, %v2323
        %v2325 = vcombine.high %v2301, 0.0
        %v2326 = vcombine.high %v2308, 0.0
        %v2327 = vcombine.high %v2317, 0.0
        %v2328 = vcombine.high %v2324, 0.0
        %2330 = vrot.lane.b32.xlu0 %v2121, 32
        %v2331 = vpop.permute.xlu0 %2330
        %2334 = vrot.lane.b32.xlu0 %v2104, 64
        %v2335 = vpop.permute.xlu0 %2334
        %2338 = vrot.lane.b32.xlu0 %v2122, 96
        %v2339 = vpop.permute.xlu0 %2338
        %2342 = vrot.lane.b32.xlu0 %v2123, 32
        %v2343 = vpop.permute.xlu0 %2342
        %2346 = vrot.lane.b32.xlu0 %v2120, 64
        %v2347 = vpop.permute.xlu0 %2346
        %2350 = vrot.lane.b32.xlu0 %v2124, 96
        %v2351 = vpop.permute.xlu0 %2350
        %2354 = vrot.lane.b32.xlu0 %v2189, 32
        %v2355 = vpop.permute.xlu0 %2354
        %2358 = vrot.lane.b32.xlu0 %v2172, 64
        %v2359 = vpop.permute.xlu0 %2358
        %2362 = vrot.lane.b32.xlu0 %v2190, 96
        %v2363 = vpop.permute.xlu0 %2362
        %2366 = vrot.lane.b32.xlu0 %v2191, 32
        %v2367 = vpop.permute.xlu0 %2366
        %2370 = vrot.lane.b32.xlu0 %v2188, 64
        %v2371 = vpop.permute.xlu0 %2370
        %2374 = vrot.lane.b32.xlu0 %v2192, 96
        %v2375 = vpop.permute.xlu0 %2374
        %2378 = vrot.lane.b32.xlu0 %v2257, 32
        %v2379 = vpop.permute.xlu0 %2378
        %2382 = vrot.lane.b32.xlu0 %v2240, 64
        %v2383 = vpop.permute.xlu0 %2382
        %2386 = vrot.lane.b32.xlu0 %v2258, 96
        %v2387 = vpop.permute.xlu0 %2386
        %2390 = vrot.lane.b32.xlu0 %v2259, 32
        %v2391 = vpop.permute.xlu0 %2390
        %2394 = vrot.lane.b32.xlu0 %v2256, 64
        %v2395 = vpop.permute.xlu0 %2394
        %2398 = vrot.lane.b32.xlu0 %v2260, 96
        %v2399 = vpop.permute.xlu0 %2398
        %2402 = vrot.lane.b32.xlu0 %v2325, 32
        %v2403 = vpop.permute.xlu0 %2402
        %2406 = vrot.lane.b32.xlu0 %v2308, 64
        %v2407 = vpop.permute.xlu0 %2406
        %2410 = vrot.lane.b32.xlu0 %v2326, 96
        %v2411 = vpop.permute.xlu0 %2410
        %2414 = vrot.lane.b32.xlu0 %v2327, 32
        %v2415 = vpop.permute.xlu0 %2414
        %2418 = vrot.lane.b32.xlu0 %v2324, 64
        %v2419 = vpop.permute.xlu0 %2418
        %2422 = vrot.lane.b32.xlu0 %v2328, 96
        %v2423 = vpop.permute.xlu0 %2422
        %v2425 = vsel %vm557, %v2097, %v2331
        %v2426 = vsel %vm559, %v2425, %v2335
        %v2427 = vsel %vm561, %v2426, %v2339
        %v2428 = vsel %vm557, %v2113, %v2343
        %v2429 = vsel %vm559, %v2428, %v2347
        %v2430 = vsel %vm561, %v2429, %v2351
        %v2431 = vsel %vm557, %v2165, %v2355
        %v2432 = vsel %vm559, %v2431, %v2359
        %v2433 = vsel %vm561, %v2432, %v2363
        %v2434 = vsel %vm557, %v2181, %v2367
        %v2435 = vsel %vm559, %v2434, %v2371
        %v2436 = vsel %vm561, %v2435, %v2375
        %v2437 = vsel %vm557, %v2233, %v2379
        %v2438 = vsel %vm559, %v2437, %v2383
        %v2439 = vsel %vm561, %v2438, %v2387
        %v2440 = vsel %vm557, %v2249, %v2391
        %v2441 = vsel %vm559, %v2440, %v2395
        %v2442 = vsel %vm561, %v2441, %v2399
        %v2443 = vsel %vm557, %v2301, %v2403
        %v2444 = vsel %vm559, %v2443, %v2407
        %v2445 = vsel %vm561, %v2444, %v2411
        %v2446 = vsel %vm557, %v2317, %v2415
        %v2447 = vsel %vm559, %v2446, %v2419
        %v2448 = vsel %vm561, %v2447, %v2423
        %2449 = vst [vmem:[#allocation2 + $0x80] sm:$0xf] %v2427
        %2450 = vst [vmem:[#allocation2 + $0x88] sm:$0xf] %v2430
        %2451 = vst [vmem:[#allocation2 + $0x90] sm:$0xf] %v2433
        %2452 = vst [vmem:[#allocation2 + $0x98] sm:$0xf] %v2436
        %2453 = vst [vmem:[#allocation2 + $0xa0] sm:$0xf] %v2439
        %2454 = vst [vmem:[#allocation2 + $0xa8] sm:$0xf] %v2442
        %2455 = vst [vmem:[#allocation2 + $0xb0] sm:$0xf] %v2445
        %2456 = vst [vmem:[#allocation2 + $0xb8] sm:$0xf] %v2448
        %2457 = vrot.lane.b32.xlu0 %v1535, 126
        %v2458 = vpop.permute.xlu0 %2457
        %2459 = vrot.lane.b32.xlu0 %v1537, 126
        %v2460 = vpop.permute.xlu0 %2459
        %2461 = vrot.lane.b32.xlu0 %v1539, 126
        %v2462 = vpop.permute.xlu0 %2461
        %2463 = vrot.lane.b32.xlu0 %v1541, 126
        %v2464 = vpop.permute.xlu0 %2463
        %2465 = vrot.lane.b32.xlu0 %v1544, 126
        %v2466 = vpop.permute.xlu0 %2465
        %2467 = vrot.lane.b32.xlu0 %v1546, 126
        %v2468 = vpop.permute.xlu0 %2467
        %2469 = vrot.lane.b32.xlu0 %v1548, 126
        %v2470 = vpop.permute.xlu0 %2469
        %2471 = vrot.lane.b32.xlu0 %v1550, 126
        %v2472 = vpop.permute.xlu0 %2471
        %2473 = vrot.lane.b32.xlu0 %v1553, 126
        %v2474 = vpop.permute.xlu0 %2473
        %2475 = vrot.lane.b32.xlu0 %v1555, 126
        %v2476 = vpop.permute.xlu0 %2475
        %2477 = vrot.lane.b32.xlu0 %v1557, 126
        %v2478 = vpop.permute.xlu0 %2477
        %2479 = vrot.lane.b32.xlu0 %v1559, 126
        %v2480 = vpop.permute.xlu0 %2479
        %2481 = vrot.lane.b32.xlu0 %v1562, 126
        %v2482 = vpop.permute.xlu0 %2481
        %2483 = vrot.lane.b32.xlu0 %v1564, 126
        %v2484 = vpop.permute.xlu0 %2483
        %2485 = vrot.lane.b32.xlu0 %v1566, 126
        %v2486 = vpop.permute.xlu0 %2485
        %2487 = vrot.lane.b32.xlu0 %v1568, 126
        %v2488 = vpop.permute.xlu0 %2487
        %v2505 = vcombine.low %v2458, %v2474
        %v2506 = vcombine.high %v2458, %v2474
        %v2508 = vunpack.c.l.s4 1983009808
        %v2509 = vunpack.c.0.s8 %v2508
        %v2510 = vlaneseq
        %v2511 = vshrl.u32 %v2510, 7
        %v2512 = vsub.s32 %v2509, %v2511
        %v2513 = vrot.slane %v2505, %v2512
        %v2515 = vunpack.c.l.s4 1983009808
        %v2516 = vunpack.c.0.s8 %v2515
        %v2517 = vlaneseq
        %v2518 = vshrl.u32 %v2517, 7
        %v2519 = vsub.s32 %v2516, %v2518
        %v2520 = vrot.slane %v2506, %v2519
        %v2521 = vcombine.low %v2466, %v2482
        %v2522 = vcombine.high %v2466, %v2482
        %v2524 = vunpack.c.l.s4 1983009808
        %v2525 = vunpack.c.0.s8 %v2524
        %v2526 = vlaneseq
        %v2527 = vshrl.u32 %v2526, 7
        %v2528 = vsub.s32 %v2525, %v2527
        %v2529 = vrot.slane %v2521, %v2528
        %v2531 = vunpack.c.l.s4 1983009808
        %v2532 = vunpack.c.0.s8 %v2531
        %v2533 = vlaneseq
        %v2534 = vshrl.u32 %v2533, 7
        %v2535 = vsub.s32 %v2532, %v2534
        %v2536 = vrot.slane %v2522, %v2535
        %v2537 = vcombine.low %v2513, %v2529
        %v2538 = vcombine.high %v2513, %v2529
        %v2540 = vunpack.c.l.s4 1934713408
        %v2541 = vunpack.c.0.s8 %v2540
        %v2542 = vlaneseq
        %v2543 = vshrl.u32 %v2542, 7
        %v2544 = vsub.s32 %v2541, %v2543
        %v2545 = vrot.slane %v2537, %v2544
        %v2547 = vunpack.c.l.s4 1934713408
        %v2548 = vunpack.c.0.s8 %v2547
        %v2549 = vlaneseq
        %v2550 = vshrl.u32 %v2549, 7
        %v2551 = vsub.s32 %v2548, %v2550
        %v2552 = vrot.slane %v2538, %v2551
        %v2553 = vcombine.low %v2520, %v2536
        %v2554 = vcombine.high %v2520, %v2536
        %v2556 = vunpack.c.l.s4 1934713408
        %v2557 = vunpack.c.0.s8 %v2556
        %v2558 = vlaneseq
        %v2559 = vshrl.u32 %v2558, 7
        %v2560 = vsub.s32 %v2557, %v2559
        %v2561 = vrot.slane %v2553, %v2560
        %v2563 = vunpack.c.l.s4 1934713408
        %v2564 = vunpack.c.0.s8 %v2563
        %v2565 = vlaneseq
        %v2566 = vshrl.u32 %v2565, 7
        %v2567 = vsub.s32 %v2564, %v2566
        %v2568 = vrot.slane %v2554, %v2567
        %v2569 = vcombine.high %v2545, 0.0
        %v2570 = vcombine.high %v2552, 0.0
        %v2571 = vcombine.high %v2561, 0.0
        %v2572 = vcombine.high %v2568, 0.0
        %v2573 = vcombine.low %v2460, %v2476
        %v2574 = vcombine.high %v2460, %v2476
        %v2576 = vunpack.c.l.s4 1983009808
        %v2577 = vunpack.c.0.s8 %v2576
        %v2578 = vlaneseq
        %v2579 = vshrl.u32 %v2578, 7
        %v2580 = vsub.s32 %v2577, %v2579
        %v2581 = vrot.slane %v2573, %v2580
        %v2583 = vunpack.c.l.s4 1983009808
        %v2584 = vunpack.c.0.s8 %v2583
        %v2585 = vlaneseq
        %v2586 = vshrl.u32 %v2585, 7
        %v2587 = vsub.s32 %v2584, %v2586
        %v2588 = vrot.slane %v2574, %v2587
        %v2589 = vcombine.low %v2468, %v2484
        %v2590 = vcombine.high %v2468, %v2484
        %v2592 = vunpack.c.l.s4 1983009808
        %v2593 = vunpack.c.0.s8 %v2592
        %v2594 = vlaneseq
        %v2595 = vshrl.u32 %v2594, 7
        %v2596 = vsub.s32 %v2593, %v2595
        %v2597 = vrot.slane %v2589, %v2596
        %v2599 = vunpack.c.l.s4 1983009808
        %v2600 = vunpack.c.0.s8 %v2599
        %v2601 = vlaneseq
        %v2602 = vshrl.u32 %v2601, 7
        %v2603 = vsub.s32 %v2600, %v2602
        %v2604 = vrot.slane %v2590, %v2603
        %v2605 = vcombine.low %v2581, %v2597
        %v2606 = vcombine.high %v2581, %v2597
        %v2608 = vunpack.c.l.s4 1934713408
        %v2609 = vunpack.c.0.s8 %v2608
        %v2610 = vlaneseq
        %v2611 = vshrl.u32 %v2610, 7
        %v2612 = vsub.s32 %v2609, %v2611
        %v2613 = vrot.slane %v2605, %v2612
        %v2615 = vunpack.c.l.s4 1934713408
        %v2616 = vunpack.c.0.s8 %v2615
        %v2617 = vlaneseq
        %v2618 = vshrl.u32 %v2617, 7
        %v2619 = vsub.s32 %v2616, %v2618
        %v2620 = vrot.slane %v2606, %v2619
        %v2621 = vcombine.low %v2588, %v2604
        %v2622 = vcombine.high %v2588, %v2604
        %v2624 = vunpack.c.l.s4 1934713408
        %v2625 = vunpack.c.0.s8 %v2624
        %v2626 = vlaneseq
        %v2627 = vshrl.u32 %v2626, 7
        %v2628 = vsub.s32 %v2625, %v2627
        %v2629 = vrot.slane %v2621, %v2628
        %v2631 = vunpack.c.l.s4 1934713408
        %v2632 = vunpack.c.0.s8 %v2631
        %v2633 = vlaneseq
        %v2634 = vshrl.u32 %v2633, 7
        %v2635 = vsub.s32 %v2632, %v2634
        %v2636 = vrot.slane %v2622, %v2635
        %v2637 = vcombine.high %v2613, 0.0
        %v2638 = vcombine.high %v2620, 0.0
        %v2639 = vcombine.high %v2629, 0.0
        %v2640 = vcombine.high %v2636, 0.0
        %v2641 = vcombine.low %v2462, %v2478
        %v2642 = vcombine.high %v2462, %v2478
        %v2644 = vunpack.c.l.s4 1983009808
        %v2645 = vunpack.c.0.s8 %v2644
        %v2646 = vlaneseq
        %v2647 = vshrl.u32 %v2646, 7
        %v2648 = vsub.s32 %v2645, %v2647
        %v2649 = vrot.slane %v2641, %v2648
        %v2651 = vunpack.c.l.s4 1983009808
        %v2652 = vunpack.c.0.s8 %v2651
        %v2653 = vlaneseq
        %v2654 = vshrl.u32 %v2653, 7
        %v2655 = vsub.s32 %v2652, %v2654
        %v2656 = vrot.slane %v2642, %v2655
        %v2657 = vcombine.low %v2470, %v2486
        %v2658 = vcombine.high %v2470, %v2486
        %v2660 = vunpack.c.l.s4 1983009808
        %v2661 = vunpack.c.0.s8 %v2660
        %v2662 = vlaneseq
        %v2663 = vshrl.u32 %v2662, 7
        %v2664 = vsub.s32 %v2661, %v2663
        %v2665 = vrot.slane %v2657, %v2664
        %v2667 = vunpack.c.l.s4 1983009808
        %v2668 = vunpack.c.0.s8 %v2667
        %v2669 = vlaneseq
        %v2670 = vshrl.u32 %v2669, 7
        %v2671 = vsub.s32 %v2668, %v2670
        %v2672 = vrot.slane %v2658, %v2671
        %v2673 = vcombine.low %v2649, %v2665
        %v2674 = vcombine.high %v2649, %v2665
        %v2676 = vunpack.c.l.s4 1934713408
        %v2677 = vunpack.c.0.s8 %v2676
        %v2678 = vlaneseq
        %v2679 = vshrl.u32 %v2678, 7
        %v2680 = vsub.s32 %v2677, %v2679
        %v2681 = vrot.slane %v2673, %v2680
        %v2683 = vunpack.c.l.s4 1934713408
        %v2684 = vunpack.c.0.s8 %v2683
        %v2685 = vlaneseq
        %v2686 = vshrl.u32 %v2685, 7
        %v2687 = vsub.s32 %v2684, %v2686
        %v2688 = vrot.slane %v2674, %v2687
        %v2689 = vcombine.low %v2656, %v2672
        %v2690 = vcombine.high %v2656, %v2672
        %v2692 = vunpack.c.l.s4 1934713408
        %v2693 = vunpack.c.0.s8 %v2692
        %v2694 = vlaneseq
        %v2695 = vshrl.u32 %v2694, 7
        %v2696 = vsub.s32 %v2693, %v2695
        %v2697 = vrot.slane %v2689, %v2696
        %v2699 = vunpack.c.l.s4 1934713408
        %v2700 = vunpack.c.0.s8 %v2699
        %v2701 = vlaneseq
        %v2702 = vshrl.u32 %v2701, 7
        %v2703 = vsub.s32 %v2700, %v2702
        %v2704 = vrot.slane %v2690, %v2703
        %v2705 = vcombine.high %v2681, 0.0
        %v2706 = vcombine.high %v2688, 0.0
        %v2707 = vcombine.high %v2697, 0.0
        %v2708 = vcombine.high %v2704, 0.0
        %v2709 = vcombine.low %v2464, %v2480
        %v2710 = vcombine.high %v2464, %v2480
        %v2712 = vunpack.c.l.s4 1983009808
        %v2713 = vunpack.c.0.s8 %v2712
        %v2714 = vlaneseq
        %v2715 = vshrl.u32 %v2714, 7
        %v2716 = vsub.s32 %v2713, %v2715
        %v2717 = vrot.slane %v2709, %v2716
        %v2719 = vunpack.c.l.s4 1983009808
        %v2720 = vunpack.c.0.s8 %v2719
        %v2721 = vlaneseq
        %v2722 = vshrl.u32 %v2721, 7
        %v2723 = vsub.s32 %v2720, %v2722
        %v2724 = vrot.slane %v2710, %v2723
        %v2725 = vcombine.low %v2472, %v2488
        %v2726 = vcombine.high %v2472, %v2488
        %v2728 = vunpack.c.l.s4 1983009808
        %v2729 = vunpack.c.0.s8 %v2728
        %v2730 = vlaneseq
        %v2731 = vshrl.u32 %v2730, 7
        %v2732 = vsub.s32 %v2729, %v2731
        %v2733 = vrot.slane %v2725, %v2732
        %v2735 = vunpack.c.l.s4 1983009808
        %v2736 = vunpack.c.0.s8 %v2735
        %v2737 = vlaneseq
        %v2738 = vshrl.u32 %v2737, 7
        %v2739 = vsub.s32 %v2736, %v2738
        %v2740 = vrot.slane %v2726, %v2739
        %v2741 = vcombine.low %v2717, %v2733
        %v2742 = vcombine.high %v2717, %v2733
        %v2744 = vunpack.c.l.s4 1934713408
        %v2745 = vunpack.c.0.s8 %v2744
        %v2746 = vlaneseq
        %v2747 = vshrl.u32 %v2746, 7
        %v2748 = vsub.s32 %v2745, %v2747
        %v2749 = vrot.slane %v2741, %v2748
        %v2751 = vunpack.c.l.s4 1934713408
        %v2752 = vunpack.c.0.s8 %v2751
        %v2753 = vlaneseq
        %v2754 = vshrl.u32 %v2753, 7
        %v2755 = vsub.s32 %v2752, %v2754
        %v2756 = vrot.slane %v2742, %v2755
        %v2757 = vcombine.low %v2724, %v2740
        %v2758 = vcombine.high %v2724, %v2740
        %v2760 = vunpack.c.l.s4 1934713408
        %v2761 = vunpack.c.0.s8 %v2760
        %v2762 = vlaneseq
        %v2763 = vshrl.u32 %v2762, 7
        %v2764 = vsub.s32 %v2761, %v2763
        %v2765 = vrot.slane %v2757, %v2764
        %v2767 = vunpack.c.l.s4 1934713408
        %v2768 = vunpack.c.0.s8 %v2767
        %v2769 = vlaneseq
        %v2770 = vshrl.u32 %v2769, 7
        %v2771 = vsub.s32 %v2768, %v2770
        %v2772 = vrot.slane %v2758, %v2771
        %v2773 = vcombine.high %v2749, 0.0
        %v2774 = vcombine.high %v2756, 0.0
        %v2775 = vcombine.high %v2765, 0.0
        %v2776 = vcombine.high %v2772, 0.0
        %2778 = vrot.lane.b32.xlu0 %v2569, 32
        %v2779 = vpop.permute.xlu0 %2778
        %2782 = vrot.lane.b32.xlu0 %v2552, 64
        %v2783 = vpop.permute.xlu0 %2782
        %2786 = vrot.lane.b32.xlu0 %v2570, 96
        %v2787 = vpop.permute.xlu0 %2786
        %2790 = vrot.lane.b32.xlu0 %v2571, 32
        %v2791 = vpop.permute.xlu0 %2790
        %2794 = vrot.lane.b32.xlu0 %v2568, 64
        %v2795 = vpop.permute.xlu0 %2794
        %2798 = vrot.lane.b32.xlu0 %v2572, 96
        %v2799 = vpop.permute.xlu0 %2798
        %2802 = vrot.lane.b32.xlu0 %v2637, 32
        %v2803 = vpop.permute.xlu0 %2802
        %2806 = vrot.lane.b32.xlu0 %v2620, 64
        %v2807 = vpop.permute.xlu0 %2806
        %2810 = vrot.lane.b32.xlu0 %v2638, 96
        %v2811 = vpop.permute.xlu0 %2810
        %2814 = vrot.lane.b32.xlu0 %v2639, 32
        %v2815 = vpop.permute.xlu0 %2814
        %2818 = vrot.lane.b32.xlu0 %v2636, 64
        %v2819 = vpop.permute.xlu0 %2818
        %2822 = vrot.lane.b32.xlu0 %v2640, 96
        %v2823 = vpop.permute.xlu0 %2822
        %2826 = vrot.lane.b32.xlu0 %v2705, 32
        %v2827 = vpop.permute.xlu0 %2826
        %2830 = vrot.lane.b32.xlu0 %v2688, 64
        %v2831 = vpop.permute.xlu0 %2830
        %2834 = vrot.lane.b32.xlu0 %v2706, 96
        %v2835 = vpop.permute.xlu0 %2834
        %2838 = vrot.lane.b32.xlu0 %v2707, 32
        %v2839 = vpop.permute.xlu0 %2838
        %2842 = vrot.lane.b32.xlu0 %v2704, 64
        %v2843 = vpop.permute.xlu0 %2842
        %2846 = vrot.lane.b32.xlu0 %v2708, 96
        %v2847 = vpop.permute.xlu0 %2846
        %2850 = vrot.lane.b32.xlu0 %v2773, 32
        %v2851 = vpop.permute.xlu0 %2850
        %2854 = vrot.lane.b32.xlu0 %v2756, 64
        %v2855 = vpop.permute.xlu0 %2854
        %2858 = vrot.lane.b32.xlu0 %v2774, 96
        %v2859 = vpop.permute.xlu0 %2858
        %2862 = vrot.lane.b32.xlu0 %v2775, 32
        %v2863 = vpop.permute.xlu0 %2862
        %2866 = vrot.lane.b32.xlu0 %v2772, 64
        %v2867 = vpop.permute.xlu0 %2866
        %2870 = vrot.lane.b32.xlu0 %v2776, 96
        %v2871 = vpop.permute.xlu0 %2870
        %v2873 = vsel %vm557, %v2545, %v2779
        %v2874 = vsel %vm559, %v2873, %v2783
        %v2875 = vsel %vm561, %v2874, %v2787
        %v2876 = vsel %vm557, %v2561, %v2791
        %v2877 = vsel %vm559, %v2876, %v2795
        %v2878 = vsel %vm561, %v2877, %v2799
        %v2879 = vsel %vm557, %v2613, %v2803
        %v2880 = vsel %vm559, %v2879, %v2807
        %v2881 = vsel %vm561, %v2880, %v2811
        %v2882 = vsel %vm557, %v2629, %v2815
        %v2883 = vsel %vm559, %v2882, %v2819
        %v2884 = vsel %vm561, %v2883, %v2823
        %v2885 = vsel %vm557, %v2681, %v2827
        %v2886 = vsel %vm559, %v2885, %v2831
        %v2887 = vsel %vm561, %v2886, %v2835
        %v2888 = vsel %vm557, %v2697, %v2839
        %v2889 = vsel %vm559, %v2888, %v2843
        %v2890 = vsel %vm561, %v2889, %v2847
        %v2891 = vsel %vm557, %v2749, %v2851
        %v2892 = vsel %vm559, %v2891, %v2855
        %v2893 = vsel %vm561, %v2892, %v2859
        %v2894 = vsel %vm557, %v2765, %v2863
        %v2895 = vsel %vm559, %v2894, %v2867
        %v2896 = vsel %vm561, %v2895, %v2871
        %v2905 = vrot.slane %v2875, 4
        %v2906 = vrot.slane %v2878, 4
        %v2907 = vrot.slane %v2881, 4
        %v2908 = vrot.slane %v2884, 4
        %v2909 = vrot.slane %v2887, 4
        %v2910 = vrot.slane %v2890, 4
        %v2911 = vrot.slane %v2893, 4
        %v2912 = vrot.slane %v2896, 4
        %2921 = vst [vmem:[#allocation2 + $0x80] sm:$0xf0] %v2905
        %2922 = vst [vmem:[#allocation2 + $0x88] sm:$0xf0] %v2906
        %2923 = vst [vmem:[#allocation2 + $0x90] sm:$0xf0] %v2907
        %2924 = vst [vmem:[#allocation2 + $0x98] sm:$0xf0] %v2908
        %2925 = vst [vmem:[#allocation2 + $0xa0] sm:$0xf0] %v2909
        %2926 = vst [vmem:[#allocation2 + $0xa8] sm:$0xf0] %v2910
        %2927 = vst [vmem:[#allocation2 + $0xb0] sm:$0xf0] %v2911
        %2928 = vst [vmem:[#allocation2 + $0xb8] sm:$0xf0] %v2912
        %vm2929 = vcmask 1045504
        %v2930 = vrot.slane %v169, 2
        %v2931 = vrot.slane %v170, 2
        %v2932 = vsel %vm2929, %v2930, %v2931
        %v2933 = vrot.slane %v171, 2
        %v2934 = vsel %vm2929, %v2931, %v2933
        %v2935 = vrot.slane %v172, 2
        %v2936 = vsel %vm2929, %v2933, %v2935
        %v2937 = vrot.slane %v173, 2
        %v2938 = vsel %vm2929, %v2935, %v2937
        %v2939 = vrot.slane %v174, 2
        %v2940 = vrot.slane %v175, 2
        %v2941 = vsel %vm2929, %v2939, %v2940
        %v2942 = vrot.slane %v176, 2
        %v2943 = vsel %vm2929, %v2940, %v2942
        %v2944 = vrot.slane %v177, 2
        %v2945 = vsel %vm2929, %v2942, %v2944
        %v2946 = vrot.slane %v178, 2
        %v2947 = vsel %vm2929, %v2944, %v2946
        %v2948 = vrot.slane %v179, 2
        %v2949 = vrot.slane %v180, 2
        %v2950 = vsel %vm2929, %v2948, %v2949
        %v2951 = vrot.slane %v181, 2
        %v2952 = vsel %vm2929, %v2949, %v2951
        %v2953 = vrot.slane %v182, 2
        %v2954 = vsel %vm2929, %v2951, %v2953
        %v2955 = vrot.slane %v183, 2
        %v2956 = vsel %vm2929, %v2953, %v2955
        %v2957 = vrot.slane %v184, 2
        %v2958 = vrot.slane %v185, 2
        %v2959 = vsel %vm2929, %v2957, %v2958
        %v2960 = vrot.slane %v186, 2
        %v2961 = vsel %vm2929, %v2958, %v2960
        %v2962 = vrot.slane %v187, 2
        %v2963 = vsel %vm2929, %v2960, %v2962
        %v2964 = vrot.slane %v188, 2
        %v2965 = vsel %vm2929, %v2962, %v2964
        %v2982 = vcombine.low %v2932, %v2950
        %v2983 = vcombine.high %v2932, %v2950
        %v2985 = vunpack.c.l.s4 1983009808
        %v2986 = vunpack.c.0.s8 %v2985
        %v2987 = vlaneseq
        %v2988 = vshrl.u32 %v2987, 7
        %v2989 = vsub.s32 %v2986, %v2988
        %v2990 = vrot.slane %v2982, %v2989
        %v2992 = vunpack.c.l.s4 1983009808
        %v2993 = vunpack.c.0.s8 %v2992
        %v2994 = vlaneseq
        %v2995 = vshrl.u32 %v2994, 7
        %v2996 = vsub.s32 %v2993, %v2995
        %v2997 = vrot.slane %v2983, %v2996
        %v2998 = vcombine.low %v2941, %v2959
        %v2999 = vcombine.high %v2941, %v2959
        %v3001 = vunpack.c.l.s4 1983009808
        %v3002 = vunpack.c.0.s8 %v3001
        %v3003 = vlaneseq
        %v3004 = vshrl.u32 %v3003, 7
        %v3005 = vsub.s32 %v3002, %v3004
        %v3006 = vrot.slane %v2998, %v3005
        %v3008 = vunpack.c.l.s4 1983009808
        %v3009 = vunpack.c.0.s8 %v3008
        %v3010 = vlaneseq
        %v3011 = vshrl.u32 %v3010, 7
        %v3012 = vsub.s32 %v3009, %v3011
        %v3013 = vrot.slane %v2999, %v3012
        %v3014 = vcombine.low %v2990, %v3006
        %v3015 = vcombine.high %v2990, %v3006
        %v3017 = vunpack.c.l.s4 1934713408
        %v3018 = vunpack.c.0.s8 %v3017
        %v3019 = vlaneseq
        %v3020 = vshrl.u32 %v3019, 7
        %v3021 = vsub.s32 %v3018, %v3020
        %v3022 = vrot.slane %v3014, %v3021
        %v3024 = vunpack.c.l.s4 1934713408
        %v3025 = vunpack.c.0.s8 %v3024
        %v3026 = vlaneseq
        %v3027 = vshrl.u32 %v3026, 7
        %v3028 = vsub.s32 %v3025, %v3027
        %v3029 = vrot.slane %v3015, %v3028
        %v3030 = vcombine.low %v2997, %v3013
        %v3031 = vcombine.high %v2997, %v3013
        %v3033 = vunpack.c.l.s4 1934713408
        %v3034 = vunpack.c.0.s8 %v3033
        %v3035 = vlaneseq
        %v3036 = vshrl.u32 %v3035, 7
        %v3037 = vsub.s32 %v3034, %v3036
        %v3038 = vrot.slane %v3030, %v3037
        %v3040 = vunpack.c.l.s4 1934713408
        %v3041 = vunpack.c.0.s8 %v3040
        %v3042 = vlaneseq
        %v3043 = vshrl.u32 %v3042, 7
        %v3044 = vsub.s32 %v3041, %v3043
        %v3045 = vrot.slane %v3031, %v3044
        %v3046 = vcombine.high %v3022, 0.0
        %v3047 = vcombine.high %v3029, 0.0
        %v3048 = vcombine.high %v3038, 0.0
        %v3049 = vcombine.high %v3045, 0.0
        %v3050 = vcombine.low %v2934, %v2952
        %v3051 = vcombine.high %v2934, %v2952
        %v3053 = vunpack.c.l.s4 1983009808
        %v3054 = vunpack.c.0.s8 %v3053
        %v3055 = vlaneseq
        %v3056 = vshrl.u32 %v3055, 7
        %v3057 = vsub.s32 %v3054, %v3056
        %v3058 = vrot.slane %v3050, %v3057
        %v3060 = vunpack.c.l.s4 1983009808
        %v3061 = vunpack.c.0.s8 %v3060
        %v3062 = vlaneseq
        %v3063 = vshrl.u32 %v3062, 7
        %v3064 = vsub.s32 %v3061, %v3063
        %v3065 = vrot.slane %v3051, %v3064
        %v3066 = vcombine.low %v2943, %v2961
        %v3067 = vcombine.high %v2943, %v2961
        %v3069 = vunpack.c.l.s4 1983009808
        %v3070 = vunpack.c.0.s8 %v3069
        %v3071 = vlaneseq
        %v3072 = vshrl.u32 %v3071, 7
        %v3073 = vsub.s32 %v3070, %v3072
        %v3074 = vrot.slane %v3066, %v3073
        %v3076 = vunpack.c.l.s4 1983009808
        %v3077 = vunpack.c.0.s8 %v3076
        %v3078 = vlaneseq
        %v3079 = vshrl.u32 %v3078, 7
        %v3080 = vsub.s32 %v3077, %v3079
        %v3081 = vrot.slane %v3067, %v3080
        %v3082 = vcombine.low %v3058, %v3074
        %v3083 = vcombine.high %v3058, %v3074
        %v3085 = vunpack.c.l.s4 1934713408
        %v3086 = vunpack.c.0.s8 %v3085
        %v3087 = vlaneseq
        %v3088 = vshrl.u32 %v3087, 7
        %v3089 = vsub.s32 %v3086, %v3088
        %v3090 = vrot.slane %v3082, %v3089
        %v3092 = vunpack.c.l.s4 1934713408
        %v3093 = vunpack.c.0.s8 %v3092
        %v3094 = vlaneseq
        %v3095 = vshrl.u32 %v3094, 7
        %v3096 = vsub.s32 %v3093, %v3095
        %v3097 = vrot.slane %v3083, %v3096
        %v3098 = vcombine.low %v3065, %v3081
        %v3099 = vcombine.high %v3065, %v3081
        %v3101 = vunpack.c.l.s4 1934713408
        %v3102 = vunpack.c.0.s8 %v3101
        %v3103 = vlaneseq
        %v3104 = vshrl.u32 %v3103, 7
        %v3105 = vsub.s32 %v3102, %v3104
        %v3106 = vrot.slane %v3098, %v3105
        %v3108 = vunpack.c.l.s4 1934713408
        %v3109 = vunpack.c.0.s8 %v3108
        %v3110 = vlaneseq
        %v3111 = vshrl.u32 %v3110, 7
        %v3112 = vsub.s32 %v3109, %v3111
        %v3113 = vrot.slane %v3099, %v3112
        %v3114 = vcombine.high %v3090, 0.0
        %v3115 = vcombine.high %v3097, 0.0
        %v3116 = vcombine.high %v3106, 0.0
        %v3117 = vcombine.high %v3113, 0.0
        %v3118 = vcombine.low %v2936, %v2954
        %v3119 = vcombine.high %v2936, %v2954
        %v3121 = vunpack.c.l.s4 1983009808
        %v3122 = vunpack.c.0.s8 %v3121
        %v3123 = vlaneseq
        %v3124 = vshrl.u32 %v3123, 7
        %v3125 = vsub.s32 %v3122, %v3124
        %v3126 = vrot.slane %v3118, %v3125
        %v3128 = vunpack.c.l.s4 1983009808
        %v3129 = vunpack.c.0.s8 %v3128
        %v3130 = vlaneseq
        %v3131 = vshrl.u32 %v3130, 7
        %v3132 = vsub.s32 %v3129, %v3131
        %v3133 = vrot.slane %v3119, %v3132
        %v3134 = vcombine.low %v2945, %v2963
        %v3135 = vcombine.high %v2945, %v2963
        %v3137 = vunpack.c.l.s4 1983009808
        %v3138 = vunpack.c.0.s8 %v3137
        %v3139 = vlaneseq
        %v3140 = vshrl.u32 %v3139, 7
        %v3141 = vsub.s32 %v3138, %v3140
        %v3142 = vrot.slane %v3134, %v3141
        %v3144 = vunpack.c.l.s4 1983009808
        %v3145 = vunpack.c.0.s8 %v3144
        %v3146 = vlaneseq
        %v3147 = vshrl.u32 %v3146, 7
        %v3148 = vsub.s32 %v3145, %v3147
        %v3149 = vrot.slane %v3135, %v3148
        %v3150 = vcombine.low %v3126, %v3142
        %v3151 = vcombine.high %v3126, %v3142
        %v3153 = vunpack.c.l.s4 1934713408
        %v3154 = vunpack.c.0.s8 %v3153
        %v3155 = vlaneseq
        %v3156 = vshrl.u32 %v3155, 7
        %v3157 = vsub.s32 %v3154, %v3156
        %v3158 = vrot.slane %v3150, %v3157
        %v3160 = vunpack.c.l.s4 1934713408
        %v3161 = vunpack.c.0.s8 %v3160
        %v3162 = vlaneseq
        %v3163 = vshrl.u32 %v3162, 7
        %v3164 = vsub.s32 %v3161, %v3163
        %v3165 = vrot.slane %v3151, %v3164
        %v3166 = vcombine.low %v3133, %v3149
        %v3167 = vcombine.high %v3133, %v3149
        %v3169 = vunpack.c.l.s4 1934713408
        %v3170 = vunpack.c.0.s8 %v3169
        %v3171 = vlaneseq
        %v3172 = vshrl.u32 %v3171, 7
        %v3173 = vsub.s32 %v3170, %v3172
        %v3174 = vrot.slane %v3166, %v3173
        %v3176 = vunpack.c.l.s4 1934713408
        %v3177 = vunpack.c.0.s8 %v3176
        %v3178 = vlaneseq
        %v3179 = vshrl.u32 %v3178, 7
        %v3180 = vsub.s32 %v3177, %v3179
        %v3181 = vrot.slane %v3167, %v3180
        %v3182 = vcombine.high %v3158, 0.0
        %v3183 = vcombine.high %v3165, 0.0
        %v3184 = vcombine.high %v3174, 0.0
        %v3185 = vcombine.high %v3181, 0.0
        %v3186 = vcombine.low %v2938, %v2956
        %v3187 = vcombine.high %v2938, %v2956
        %v3189 = vunpack.c.l.s4 1983009808
        %v3190 = vunpack.c.0.s8 %v3189
        %v3191 = vlaneseq
        %v3192 = vshrl.u32 %v3191, 7
        %v3193 = vsub.s32 %v3190, %v3192
        %v3194 = vrot.slane %v3186, %v3193
        %v3196 = vunpack.c.l.s4 1983009808
        %v3197 = vunpack.c.0.s8 %v3196
        %v3198 = vlaneseq
        %v3199 = vshrl.u32 %v3198, 7
        %v3200 = vsub.s32 %v3197, %v3199
        %v3201 = vrot.slane %v3187, %v3200
        %v3202 = vcombine.low %v2947, %v2965
        %v3203 = vcombine.high %v2947, %v2965
        %v3205 = vunpack.c.l.s4 1983009808
        %v3206 = vunpack.c.0.s8 %v3205
        %v3207 = vlaneseq
        %v3208 = vshrl.u32 %v3207, 7
        %v3209 = vsub.s32 %v3206, %v3208
        %v3210 = vrot.slane %v3202, %v3209
        %v3212 = vunpack.c.l.s4 1983009808
        %v3213 = vunpack.c.0.s8 %v3212
        %v3214 = vlaneseq
        %v3215 = vshrl.u32 %v3214, 7
        %v3216 = vsub.s32 %v3213, %v3215
        %v3217 = vrot.slane %v3203, %v3216
        %v3218 = vcombine.low %v3194, %v3210
        %v3219 = vcombine.high %v3194, %v3210
        %v3221 = vunpack.c.l.s4 1934713408
        %v3222 = vunpack.c.0.s8 %v3221
        %v3223 = vlaneseq
        %v3224 = vshrl.u32 %v3223, 7
        %v3225 = vsub.s32 %v3222, %v3224
        %v3226 = vrot.slane %v3218, %v3225
        %v3228 = vunpack.c.l.s4 1934713408
        %v3229 = vunpack.c.0.s8 %v3228
        %v3230 = vlaneseq
        %v3231 = vshrl.u32 %v3230, 7
        %v3232 = vsub.s32 %v3229, %v3231
        %v3233 = vrot.slane %v3219, %v3232
        %v3234 = vcombine.low %v3201, %v3217
        %v3235 = vcombine.high %v3201, %v3217
        %v3237 = vunpack.c.l.s4 1934713408
        %v3238 = vunpack.c.0.s8 %v3237
        %v3239 = vlaneseq
        %v3240 = vshrl.u32 %v3239, 7
        %v3241 = vsub.s32 %v3238, %v3240
        %v3242 = vrot.slane %v3234, %v3241
        %v3244 = vunpack.c.l.s4 1934713408
        %v3245 = vunpack.c.0.s8 %v3244
        %v3246 = vlaneseq
        %v3247 = vshrl.u32 %v3246, 7
        %v3248 = vsub.s32 %v3245, %v3247
        %v3249 = vrot.slane %v3235, %v3248
        %v3250 = vcombine.high %v3226, 0.0
        %v3251 = vcombine.high %v3233, 0.0
        %v3252 = vcombine.high %v3242, 0.0
        %v3253 = vcombine.high %v3249, 0.0
        %3255 = vrot.lane.b32.xlu0 %v3046, 32
        %v3256 = vpop.permute.xlu0 %3255
        %3259 = vrot.lane.b32.xlu0 %v3029, 64
        %v3260 = vpop.permute.xlu0 %3259
        %3263 = vrot.lane.b32.xlu0 %v3047, 96
        %v3264 = vpop.permute.xlu0 %3263
        %3267 = vrot.lane.b32.xlu0 %v3048, 32
        %v3268 = vpop.permute.xlu0 %3267
        %3271 = vrot.lane.b32.xlu0 %v3045, 64
        %v3272 = vpop.permute.xlu0 %3271
        %3275 = vrot.lane.b32.xlu0 %v3049, 96
        %v3276 = vpop.permute.xlu0 %3275
        %3279 = vrot.lane.b32.xlu0 %v3114, 32
        %v3280 = vpop.permute.xlu0 %3279
        %3283 = vrot.lane.b32.xlu0 %v3097, 64
        %v3284 = vpop.permute.xlu0 %3283
        %3287 = vrot.lane.b32.xlu0 %v3115, 96
        %v3288 = vpop.permute.xlu0 %3287
        %3291 = vrot.lane.b32.xlu0 %v3116, 32
        %v3292 = vpop.permute.xlu0 %3291
        %3295 = vrot.lane.b32.xlu0 %v3113, 64
        %v3296 = vpop.permute.xlu0 %3295
        %3299 = vrot.lane.b32.xlu0 %v3117, 96
        %v3300 = vpop.permute.xlu0 %3299
        %3303 = vrot.lane.b32.xlu0 %v3182, 32
        %v3304 = vpop.permute.xlu0 %3303
        %3307 = vrot.lane.b32.xlu0 %v3165, 64
        %v3308 = vpop.permute.xlu0 %3307
        %3311 = vrot.lane.b32.xlu0 %v3183, 96
        %v3312 = vpop.permute.xlu0 %3311
        %3315 = vrot.lane.b32.xlu0 %v3184, 32
        %v3316 = vpop.permute.xlu0 %3315
        %3319 = vrot.lane.b32.xlu0 %v3181, 64
        %v3320 = vpop.permute.xlu0 %3319
        %3323 = vrot.lane.b32.xlu0 %v3185, 96
        %v3324 = vpop.permute.xlu0 %3323
        %3327 = vrot.lane.b32.xlu0 %v3250, 32
        %v3328 = vpop.permute.xlu0 %3327
        %3331 = vrot.lane.b32.xlu0 %v3233, 64
        %v3332 = vpop.permute.xlu0 %3331
        %3335 = vrot.lane.b32.xlu0 %v3251, 96
        %v3336 = vpop.permute.xlu0 %3335
        %3339 = vrot.lane.b32.xlu0 %v3252, 32
        %v3340 = vpop.permute.xlu0 %3339
        %3343 = vrot.lane.b32.xlu0 %v3249, 64
        %v3344 = vpop.permute.xlu0 %3343
        %3347 = vrot.lane.b32.xlu0 %v3253, 96
        %v3348 = vpop.permute.xlu0 %3347
        %v3350 = vsel %vm557, %v3022, %v3256
        %v3351 = vsel %vm559, %v3350, %v3260
        %v3352 = vsel %vm561, %v3351, %v3264
        %v3353 = vsel %vm557, %v3038, %v3268
        %v3354 = vsel %vm559, %v3353, %v3272
        %v3355 = vsel %vm561, %v3354, %v3276
        %v3356 = vsel %vm557, %v3090, %v3280
        %v3357 = vsel %vm559, %v3356, %v3284
        %v3358 = vsel %vm561, %v3357, %v3288
        %v3359 = vsel %vm557, %v3106, %v3292
        %v3360 = vsel %vm559, %v3359, %v3296
        %v3361 = vsel %vm561, %v3360, %v3300
        %v3362 = vsel %vm557, %v3158, %v3304
        %v3363 = vsel %vm559, %v3362, %v3308
        %v3364 = vsel %vm561, %v3363, %v3312
        %v3365 = vsel %vm557, %v3174, %v3316
        %v3366 = vsel %vm559, %v3365, %v3320
        %v3367 = vsel %vm561, %v3366, %v3324
        %v3368 = vsel %vm557, %v3226, %v3328
        %v3369 = vsel %vm559, %v3368, %v3332
        %v3370 = vsel %vm561, %v3369, %v3336
        %v3371 = vsel %vm557, %v3242, %v3340
        %v3372 = vsel %vm559, %v3371, %v3344
        %v3373 = vsel %vm561, %v3372, %v3348
        %3374 = vst [vmem:[#allocation2 + $0xc0] sm:$0xf] %v3352
        %3375 = vst [vmem:[#allocation2 + $0xc8] sm:$0xf] %v3355
        %3376 = vst [vmem:[#allocation2 + $0xd0] sm:$0xf] %v3358
        %3377 = vst [vmem:[#allocation2 + $0xd8] sm:$0xf] %v3361
        %3378 = vst [vmem:[#allocation2 + $0xe0] sm:$0xf] %v3364
        %3379 = vst [vmem:[#allocation2 + $0xe8] sm:$0xf] %v3367
        %3380 = vst [vmem:[#allocation2 + $0xf0] sm:$0xf] %v3370
        %3381 = vst [vmem:[#allocation2 + $0xf8] sm:$0xf] %v3373
        %3382 = vrot.lane.b32.xlu0 %v2932, 127
        %v3383 = vpop.permute.xlu0 %3382
        %3384 = vrot.lane.b32.xlu0 %v2934, 127
        %v3385 = vpop.permute.xlu0 %3384
        %3386 = vrot.lane.b32.xlu0 %v2936, 127
        %v3387 = vpop.permute.xlu0 %3386
        %3388 = vrot.lane.b32.xlu0 %v2938, 127
        %v3389 = vpop.permute.xlu0 %3388
        %3390 = vrot.lane.b32.xlu0 %v2941, 127
        %v3391 = vpop.permute.xlu0 %3390
        %3392 = vrot.lane.b32.xlu0 %v2943, 127
        %v3393 = vpop.permute.xlu0 %3392
        %3394 = vrot.lane.b32.xlu0 %v2945, 127
        %v3395 = vpop.permute.xlu0 %3394
        %3396 = vrot.lane.b32.xlu0 %v2947, 127
        %v3397 = vpop.permute.xlu0 %3396
        %3398 = vrot.lane.b32.xlu0 %v2950, 127
        %v3399 = vpop.permute.xlu0 %3398
        %3400 = vrot.lane.b32.xlu0 %v2952, 127
        %v3401 = vpop.permute.xlu0 %3400
        %3402 = vrot.lane.b32.xlu0 %v2954, 127
        %v3403 = vpop.permute.xlu0 %3402
        %3404 = vrot.lane.b32.xlu0 %v2956, 127
        %v3405 = vpop.permute.xlu0 %3404
        %3406 = vrot.lane.b32.xlu0 %v2959, 127
        %v3407 = vpop.permute.xlu0 %3406
        %3408 = vrot.lane.b32.xlu0 %v2961, 127
        %v3409 = vpop.permute.xlu0 %3408
        %3410 = vrot.lane.b32.xlu0 %v2963, 127
        %v3411 = vpop.permute.xlu0 %3410
        %3412 = vrot.lane.b32.xlu0 %v2965, 127
        %v3413 = vpop.permute.xlu0 %3412
        %v3430 = vcombine.low %v3383, %v3399
        %v3431 = vcombine.high %v3383, %v3399
        %v3433 = vunpack.c.l.s4 1983009808
        %v3434 = vunpack.c.0.s8 %v3433
        %v3435 = vlaneseq
        %v3436 = vshrl.u32 %v3435, 7
        %v3437 = vsub.s32 %v3434, %v3436
        %v3438 = vrot.slane %v3430, %v3437
        %v3440 = vunpack.c.l.s4 1983009808
        %v3441 = vunpack.c.0.s8 %v3440
        %v3442 = vlaneseq
        %v3443 = vshrl.u32 %v3442, 7
        %v3444 = vsub.s32 %v3441, %v3443
        %v3445 = vrot.slane %v3431, %v3444
        %v3446 = vcombine.low %v3391, %v3407
        %v3447 = vcombine.high %v3391, %v3407
        %v3449 = vunpack.c.l.s4 1983009808
        %v3450 = vunpack.c.0.s8 %v3449
        %v3451 = vlaneseq
        %v3452 = vshrl.u32 %v3451, 7
        %v3453 = vsub.s32 %v3450, %v3452
        %v3454 = vrot.slane %v3446, %v3453
        %v3456 = vunpack.c.l.s4 1983009808
        %v3457 = vunpack.c.0.s8 %v3456
        %v3458 = vlaneseq
        %v3459 = vshrl.u32 %v3458, 7
        %v3460 = vsub.s32 %v3457, %v3459
        %v3461 = vrot.slane %v3447, %v3460
        %v3462 = vcombine.low %v3438, %v3454
        %v3463 = vcombine.high %v3438, %v3454
        %v3465 = vunpack.c.l.s4 1934713408
        %v3466 = vunpack.c.0.s8 %v3465
        %v3467 = vlaneseq
        %v3468 = vshrl.u32 %v3467, 7
        %v3469 = vsub.s32 %v3466, %v3468
        %v3470 = vrot.slane %v3462, %v3469
        %v3472 = vunpack.c.l.s4 1934713408
        %v3473 = vunpack.c.0.s8 %v3472
        %v3474 = vlaneseq
        %v3475 = vshrl.u32 %v3474, 7
        %v3476 = vsub.s32 %v3473, %v3475
        %v3477 = vrot.slane %v3463, %v3476
        %v3478 = vcombine.low %v3445, %v3461
        %v3479 = vcombine.high %v3445, %v3461
        %v3481 = vunpack.c.l.s4 1934713408
        %v3482 = vunpack.c.0.s8 %v3481
        %v3483 = vlaneseq
        %v3484 = vshrl.u32 %v3483, 7
        %v3485 = vsub.s32 %v3482, %v3484
        %v3486 = vrot.slane %v3478, %v3485
        %v3488 = vunpack.c.l.s4 1934713408
        %v3489 = vunpack.c.0.s8 %v3488
        %v3490 = vlaneseq
        %v3491 = vshrl.u32 %v3490, 7
        %v3492 = vsub.s32 %v3489, %v3491
        %v3493 = vrot.slane %v3479, %v3492
        %v3494 = vcombine.high %v3470, 0.0
        %v3495 = vcombine.high %v3477, 0.0
        %v3496 = vcombine.high %v3486, 0.0
        %v3497 = vcombine.high %v3493, 0.0
        %v3498 = vcombine.low %v3385, %v3401
        %v3499 = vcombine.high %v3385, %v3401
        %v3501 = vunpack.c.l.s4 1983009808
        %v3502 = vunpack.c.0.s8 %v3501
        %v3503 = vlaneseq
        %v3504 = vshrl.u32 %v3503, 7
        %v3505 = vsub.s32 %v3502, %v3504
        %v3506 = vrot.slane %v3498, %v3505
        %v3508 = vunpack.c.l.s4 1983009808
        %v3509 = vunpack.c.0.s8 %v3508
        %v3510 = vlaneseq
        %v3511 = vshrl.u32 %v3510, 7
        %v3512 = vsub.s32 %v3509, %v3511
        %v3513 = vrot.slane %v3499, %v3512
        %v3514 = vcombine.low %v3393, %v3409
        %v3515 = vcombine.high %v3393, %v3409
        %v3517 = vunpack.c.l.s4 1983009808
        %v3518 = vunpack.c.0.s8 %v3517
        %v3519 = vlaneseq
        %v3520 = vshrl.u32 %v3519, 7
        %v3521 = vsub.s32 %v3518, %v3520
        %v3522 = vrot.slane %v3514, %v3521
        %v3524 = vunpack.c.l.s4 1983009808
        %v3525 = vunpack.c.0.s8 %v3524
        %v3526 = vlaneseq
        %v3527 = vshrl.u32 %v3526, 7
        %v3528 = vsub.s32 %v3525, %v3527
        %v3529 = vrot.slane %v3515, %v3528
        %v3530 = vcombine.low %v3506, %v3522
        %v3531 = vcombine.high %v3506, %v3522
        %v3533 = vunpack.c.l.s4 1934713408
        %v3534 = vunpack.c.0.s8 %v3533
        %v3535 = vlaneseq
        %v3536 = vshrl.u32 %v3535, 7
        %v3537 = vsub.s32 %v3534, %v3536
        %v3538 = vrot.slane %v3530, %v3537
        %v3540 = vunpack.c.l.s4 1934713408
        %v3541 = vunpack.c.0.s8 %v3540
        %v3542 = vlaneseq
        %v3543 = vshrl.u32 %v3542, 7
        %v3544 = vsub.s32 %v3541, %v3543
        %v3545 = vrot.slane %v3531, %v3544
        %v3546 = vcombine.low %v3513, %v3529
        %v3547 = vcombine.high %v3513, %v3529
        %v3549 = vunpack.c.l.s4 1934713408
        %v3550 = vunpack.c.0.s8 %v3549
        %v3551 = vlaneseq
        %v3552 = vshrl.u32 %v3551, 7
        %v3553 = vsub.s32 %v3550, %v3552
        %v3554 = vrot.slane %v3546, %v3553
        %v3556 = vunpack.c.l.s4 1934713408
        %v3557 = vunpack.c.0.s8 %v3556
        %v3558 = vlaneseq
        %v3559 = vshrl.u32 %v3558, 7
        %v3560 = vsub.s32 %v3557, %v3559
        %v3561 = vrot.slane %v3547, %v3560
        %v3562 = vcombine.high %v3538, 0.0
        %v3563 = vcombine.high %v3545, 0.0
        %v3564 = vcombine.high %v3554, 0.0
        %v3565 = vcombine.high %v3561, 0.0
        %v3566 = vcombine.low %v3387, %v3403
        %v3567 = vcombine.high %v3387, %v3403
        %v3569 = vunpack.c.l.s4 1983009808
        %v3570 = vunpack.c.0.s8 %v3569
        %v3571 = vlaneseq
        %v3572 = vshrl.u32 %v3571, 7
        %v3573 = vsub.s32 %v3570, %v3572
        %v3574 = vrot.slane %v3566, %v3573
        %v3576 = vunpack.c.l.s4 1983009808
        %v3577 = vunpack.c.0.s8 %v3576
        %v3578 = vlaneseq
        %v3579 = vshrl.u32 %v3578, 7
        %v3580 = vsub.s32 %v3577, %v3579
        %v3581 = vrot.slane %v3567, %v3580
        %v3582 = vcombine.low %v3395, %v3411
        %v3583 = vcombine.high %v3395, %v3411
        %v3585 = vunpack.c.l.s4 1983009808
        %v3586 = vunpack.c.0.s8 %v3585
        %v3587 = vlaneseq
        %v3588 = vshrl.u32 %v3587, 7
        %v3589 = vsub.s32 %v3586, %v3588
        %v3590 = vrot.slane %v3582, %v3589
        %v3592 = vunpack.c.l.s4 1983009808
        %v3593 = vunpack.c.0.s8 %v3592
        %v3594 = vlaneseq
        %v3595 = vshrl.u32 %v3594, 7
        %v3596 = vsub.s32 %v3593, %v3595
        %v3597 = vrot.slane %v3583, %v3596
        %v3598 = vcombine.low %v3574, %v3590
        %v3599 = vcombine.high %v3574, %v3590
        %v3601 = vunpack.c.l.s4 1934713408
        %v3602 = vunpack.c.0.s8 %v3601
        %v3603 = vlaneseq
        %v3604 = vshrl.u32 %v3603, 7
        %v3605 = vsub.s32 %v3602, %v3604
        %v3606 = vrot.slane %v3598, %v3605
        %v3608 = vunpack.c.l.s4 1934713408
        %v3609 = vunpack.c.0.s8 %v3608
        %v3610 = vlaneseq
        %v3611 = vshrl.u32 %v3610, 7
        %v3612 = vsub.s32 %v3609, %v3611
        %v3613 = vrot.slane %v3599, %v3612
        %v3614 = vcombine.low %v3581, %v3597
        %v3615 = vcombine.high %v3581, %v3597
        %v3617 = vunpack.c.l.s4 1934713408
        %v3618 = vunpack.c.0.s8 %v3617
        %v3619 = vlaneseq
        %v3620 = vshrl.u32 %v3619, 7
        %v3621 = vsub.s32 %v3618, %v3620
        %v3622 = vrot.slane %v3614, %v3621
        %v3624 = vunpack.c.l.s4 1934713408
        %v3625 = vunpack.c.0.s8 %v3624
        %v3626 = vlaneseq
        %v3627 = vshrl.u32 %v3626, 7
        %v3628 = vsub.s32 %v3625, %v3627
        %v3629 = vrot.slane %v3615, %v3628
        %v3630 = vcombine.high %v3606, 0.0
        %v3631 = vcombine.high %v3613, 0.0
        %v3632 = vcombine.high %v3622, 0.0
        %v3633 = vcombine.high %v3629, 0.0
        %v3634 = vcombine.low %v3389, %v3405
        %v3635 = vcombine.high %v3389, %v3405
        %v3637 = vunpack.c.l.s4 1983009808
        %v3638 = vunpack.c.0.s8 %v3637
        %v3639 = vlaneseq
        %v3640 = vshrl.u32 %v3639, 7
        %v3641 = vsub.s32 %v3638, %v3640
        %v3642 = vrot.slane %v3634, %v3641
        %v3644 = vunpack.c.l.s4 1983009808
        %v3645 = vunpack.c.0.s8 %v3644
        %v3646 = vlaneseq
        %v3647 = vshrl.u32 %v3646, 7
        %v3648 = vsub.s32 %v3645, %v3647
        %v3649 = vrot.slane %v3635, %v3648
        %v3650 = vcombine.low %v3397, %v3413
        %v3651 = vcombine.high %v3397, %v3413
        %v3653 = vunpack.c.l.s4 1983009808
        %v3654 = vunpack.c.0.s8 %v3653
        %v3655 = vlaneseq
        %v3656 = vshrl.u32 %v3655, 7
        %v3657 = vsub.s32 %v3654, %v3656
        %v3658 = vrot.slane %v3650, %v3657
        %v3660 = vunpack.c.l.s4 1983009808
        %v3661 = vunpack.c.0.s8 %v3660
        %v3662 = vlaneseq
        %v3663 = vshrl.u32 %v3662, 7
        %v3664 = vsub.s32 %v3661, %v3663
        %v3665 = vrot.slane %v3651, %v3664
        %v3666 = vcombine.low %v3642, %v3658
        %v3667 = vcombine.high %v3642, %v3658
        %v3669 = vunpack.c.l.s4 1934713408
        %v3670 = vunpack.c.0.s8 %v3669
        %v3671 = vlaneseq
        %v3672 = vshrl.u32 %v3671, 7
        %v3673 = vsub.s32 %v3670, %v3672
        %v3674 = vrot.slane %v3666, %v3673
        %v3676 = vunpack.c.l.s4 1934713408
        %v3677 = vunpack.c.0.s8 %v3676
        %v3678 = vlaneseq
        %v3679 = vshrl.u32 %v3678, 7
        %v3680 = vsub.s32 %v3677, %v3679
        %v3681 = vrot.slane %v3667, %v3680
        %v3682 = vcombine.low %v3649, %v3665
        %v3683 = vcombine.high %v3649, %v3665
        %v3685 = vunpack.c.l.s4 1934713408
        %v3686 = vunpack.c.0.s8 %v3685
        %v3687 = vlaneseq
        %v3688 = vshrl.u32 %v3687, 7
        %v3689 = vsub.s32 %v3686, %v3688
        %v3690 = vrot.slane %v3682, %v3689
        %v3692 = vunpack.c.l.s4 1934713408
        %v3693 = vunpack.c.0.s8 %v3692
        %v3694 = vlaneseq
        %v3695 = vshrl.u32 %v3694, 7
        %v3696 = vsub.s32 %v3693, %v3695
        %v3697 = vrot.slane %v3683, %v3696
        %v3698 = vcombine.high %v3674, 0.0
        %v3699 = vcombine.high %v3681, 0.0
        %v3700 = vcombine.high %v3690, 0.0
        %v3701 = vcombine.high %v3697, 0.0
        %3703 = vrot.lane.b32.xlu0 %v3494, 32
        %v3704 = vpop.permute.xlu0 %3703
        %3707 = vrot.lane.b32.xlu0 %v3477, 64
        %v3708 = vpop.permute.xlu0 %3707
        %3711 = vrot.lane.b32.xlu0 %v3495, 96
        %v3712 = vpop.permute.xlu0 %3711
        %3715 = vrot.lane.b32.xlu0 %v3496, 32
        %v3716 = vpop.permute.xlu0 %3715
        %3719 = vrot.lane.b32.xlu0 %v3493, 64
        %v3720 = vpop.permute.xlu0 %3719
        %3723 = vrot.lane.b32.xlu0 %v3497, 96
        %v3724 = vpop.permute.xlu0 %3723
        %3727 = vrot.lane.b32.xlu0 %v3562, 32
        %v3728 = vpop.permute.xlu0 %3727
        %3731 = vrot.lane.b32.xlu0 %v3545, 64
        %v3732 = vpop.permute.xlu0 %3731
        %3735 = vrot.lane.b32.xlu0 %v3563, 96
        %v3736 = vpop.permute.xlu0 %3735
        %3739 = vrot.lane.b32.xlu0 %v3564, 32
        %v3740 = vpop.permute.xlu0 %3739
        %3743 = vrot.lane.b32.xlu0 %v3561, 64
        %v3744 = vpop.permute.xlu0 %3743
        %3747 = vrot.lane.b32.xlu0 %v3565, 96
        %v3748 = vpop.permute.xlu0 %3747
        %3751 = vrot.lane.b32.xlu0 %v3630, 32
        %v3752 = vpop.permute.xlu0 %3751
        %3755 = vrot.lane.b32.xlu0 %v3613, 64
        %v3756 = vpop.permute.xlu0 %3755
        %3759 = vrot.lane.b32.xlu0 %v3631, 96
        %v3760 = vpop.permute.xlu0 %3759
        %3763 = vrot.lane.b32.xlu0 %v3632, 32
        %v3764 = vpop.permute.xlu0 %3763
        %3767 = vrot.lane.b32.xlu0 %v3629, 64
        %v3768 = vpop.permute.xlu0 %3767
        %3771 = vrot.lane.b32.xlu0 %v3633, 96
        %v3772 = vpop.permute.xlu0 %3771
        %3775 = vrot.lane.b32.xlu0 %v3698, 32
        %v3776 = vpop.permute.xlu0 %3775
        %3779 = vrot.lane.b32.xlu0 %v3681, 64
        %v3780 = vpop.permute.xlu0 %3779
        %3783 = vrot.lane.b32.xlu0 %v3699, 96
        %v3784 = vpop.permute.xlu0 %3783
        %3787 = vrot.lane.b32.xlu0 %v3700, 32
        %v3788 = vpop.permute.xlu0 %3787
        %3791 = vrot.lane.b32.xlu0 %v3697, 64
        %v3792 = vpop.permute.xlu0 %3791
        %3795 = vrot.lane.b32.xlu0 %v3701, 96
        %v3796 = vpop.permute.xlu0 %3795
        %v3798 = vsel %vm557, %v3470, %v3704
        %v3799 = vsel %vm559, %v3798, %v3708
        %v3800 = vsel %vm561, %v3799, %v3712
        %v3801 = vsel %vm557, %v3486, %v3716
        %v3802 = vsel %vm559, %v3801, %v3720
        %v3803 = vsel %vm561, %v3802, %v3724
        %v3804 = vsel %vm557, %v3538, %v3728
        %v3805 = vsel %vm559, %v3804, %v3732
        %v3806 = vsel %vm561, %v3805, %v3736
        %v3807 = vsel %vm557, %v3554, %v3740
        %v3808 = vsel %vm559, %v3807, %v3744
        %v3809 = vsel %vm561, %v3808, %v3748
        %v3810 = vsel %vm557, %v3606, %v3752
        %v3811 = vsel %vm559, %v3810, %v3756
        %v3812 = vsel %vm561, %v3811, %v3760
        %v3813 = vsel %vm557, %v3622, %v3764
        %v3814 = vsel %vm559, %v3813, %v3768
        %v3815 = vsel %vm561, %v3814, %v3772
        %v3816 = vsel %vm557, %v3674, %v3776
        %v3817 = vsel %vm559, %v3816, %v3780
        %v3818 = vsel %vm561, %v3817, %v3784
        %v3819 = vsel %vm557, %v3690, %v3788
        %v3820 = vsel %vm559, %v3819, %v3792
        %v3821 = vsel %vm561, %v3820, %v3796
        %v3830 = vrot.slane %v3800, 4
        %v3831 = vrot.slane %v3803, 4
        %v3832 = vrot.slane %v3806, 4
        %v3833 = vrot.slane %v3809, 4
        %v3834 = vrot.slane %v3812, 4
        %v3835 = vrot.slane %v3815, 4
        %v3836 = vrot.slane %v3818, 4
        %v3837 = vrot.slane %v3821, 4
        %3846 = vst [vmem:[#allocation2 + $0xc0] sm:$0xf0] %v3830
        %3847 = vst [vmem:[#allocation2 + $0xc8] sm:$0xf0] %v3831
        %3848 = vst [vmem:[#allocation2 + $0xd0] sm:$0xf0] %v3832
        %3849 = vst [vmem:[#allocation2 + $0xd8] sm:$0xf0] %v3833
        %3850 = vst [vmem:[#allocation2 + $0xe0] sm:$0xf0] %v3834
        %3851 = vst [vmem:[#allocation2 + $0xe8] sm:$0xf0] %v3835
        %3852 = vst [vmem:[#allocation2 + $0xf0] sm:$0xf0] %v3836
        %3853 = vst [vmem:[#allocation2 + $0xf8] sm:$0xf0] %v3837
        %3854 = vrot.lane.b32.xlu0 %v2932, 126
        %v3855 = vpop.permute.xlu0 %3854
        %3856 = vrot.lane.b32.xlu0 %v2934, 126
        %v3857 = vpop.permute.xlu0 %3856
        %3858 = vrot.lane.b32.xlu0 %v2936, 126
        %v3859 = vpop.permute.xlu0 %3858
        %3860 = vrot.lane.b32.xlu0 %v2938, 126
        %v3861 = vpop.permute.xlu0 %3860
        %3862 = vrot.lane.b32.xlu0 %v2941, 126
        %v3863 = vpop.permute.xlu0 %3862
        %3864 = vrot.lane.b32.xlu0 %v2943, 126
        %v3865 = vpop.permute.xlu0 %3864
        %3866 = vrot.lane.b32.xlu0 %v2945, 126
        %v3867 = vpop.permute.xlu0 %3866
        %3868 = vrot.lane.b32.xlu0 %v2947, 126
        %v3869 = vpop.permute.xlu0 %3868
        %3870 = vrot.lane.b32.xlu0 %v2950, 126
        %v3871 = vpop.permute.xlu0 %3870
        %3872 = vrot.lane.b32.xlu0 %v2952, 126
        %v3873 = vpop.permute.xlu0 %3872
        %3874 = vrot.lane.b32.xlu0 %v2954, 126
        %v3875 = vpop.permute.xlu0 %3874
        %3876 = vrot.lane.b32.xlu0 %v2956, 126
        %v3877 = vpop.permute.xlu0 %3876
        %3878 = vrot.lane.b32.xlu0 %v2959, 126
        %v3879 = vpop.permute.xlu0 %3878
        %3880 = vrot.lane.b32.xlu0 %v2961, 126
        %v3881 = vpop.permute.xlu0 %3880
        %3882 = vrot.lane.b32.xlu0 %v2963, 126
        %v3883 = vpop.permute.xlu0 %3882
        %3884 = vrot.lane.b32.xlu0 %v2965, 126
        %v3885 = vpop.permute.xlu0 %3884
        %v3902 = vcombine.low %v3855, %v3871
        %v3903 = vcombine.high %v3855, %v3871
        %v3905 = vunpack.c.l.s4 1983009808
        %v3906 = vunpack.c.0.s8 %v3905
        %v3907 = vlaneseq
        %v3908 = vshrl.u32 %v3907, 7
        %v3909 = vsub.s32 %v3906, %v3908
        %v3910 = vrot.slane %v3902, %v3909
        %v3912 = vunpack.c.l.s4 1983009808
        %v3913 = vunpack.c.0.s8 %v3912
        %v3914 = vlaneseq
        %v3915 = vshrl.u32 %v3914, 7
        %v3916 = vsub.s32 %v3913, %v3915
        %v3917 = vrot.slane %v3903, %v3916
        %v3918 = vcombine.low %v3863, %v3879
        %v3919 = vcombine.high %v3863, %v3879
        %v3921 = vunpack.c.l.s4 1983009808
        %v3922 = vunpack.c.0.s8 %v3921
        %v3923 = vlaneseq
        %v3924 = vshrl.u32 %v3923, 7
        %v3925 = vsub.s32 %v3922, %v3924
        %v3926 = vrot.slane %v3918, %v3925
        %v3928 = vunpack.c.l.s4 1983009808
        %v3929 = vunpack.c.0.s8 %v3928
        %v3930 = vlaneseq
        %v3931 = vshrl.u32 %v3930, 7
        %v3932 = vsub.s32 %v3929, %v3931
        %v3933 = vrot.slane %v3919, %v3932
        %v3934 = vcombine.low %v3910, %v3926
        %v3935 = vcombine.high %v3910, %v3926
        %v3937 = vunpack.c.l.s4 1934713408
        %v3938 = vunpack.c.0.s8 %v3937
        %v3939 = vlaneseq
        %v3940 = vshrl.u32 %v3939, 7
        %v3941 = vsub.s32 %v3938, %v3940
        %v3942 = vrot.slane %v3934, %v3941
        %v3944 = vunpack.c.l.s4 1934713408
        %v3945 = vunpack.c.0.s8 %v3944
        %v3946 = vlaneseq
        %v3947 = vshrl.u32 %v3946, 7
        %v3948 = vsub.s32 %v3945, %v3947
        %v3949 = vrot.slane %v3935, %v3948
        %v3950 = vcombine.low %v3917, %v3933
        %v3951 = vcombine.high %v3917, %v3933
        %v3953 = vunpack.c.l.s4 1934713408
        %v3954 = vunpack.c.0.s8 %v3953
        %v3955 = vlaneseq
        %v3956 = vshrl.u32 %v3955, 7
        %v3957 = vsub.s32 %v3954, %v3956
        %v3958 = vrot.slane %v3950, %v3957
        %v3960 = vunpack.c.l.s4 1934713408
        %v3961 = vunpack.c.0.s8 %v3960
        %v3962 = vlaneseq
        %v3963 = vshrl.u32 %v3962, 7
        %v3964 = vsub.s32 %v3961, %v3963
        %v3965 = vrot.slane %v3951, %v3964
        %v3966 = vcombine.high %v3942, 0.0
        %v3967 = vcombine.high %v3949, 0.0
        %v3968 = vcombine.high %v3958, 0.0
        %v3969 = vcombine.high %v3965, 0.0
        %v3970 = vcombine.low %v3857, %v3873
        %v3971 = vcombine.high %v3857, %v3873
        %v3973 = vunpack.c.l.s4 1983009808
        %v3974 = vunpack.c.0.s8 %v3973
        %v3975 = vlaneseq
        %v3976 = vshrl.u32 %v3975, 7
        %v3977 = vsub.s32 %v3974, %v3976
        %v3978 = vrot.slane %v3970, %v3977
        %v3980 = vunpack.c.l.s4 1983009808
        %v3981 = vunpack.c.0.s8 %v3980
        %v3982 = vlaneseq
        %v3983 = vshrl.u32 %v3982, 7
        %v3984 = vsub.s32 %v3981, %v3983
        %v3985 = vrot.slane %v3971, %v3984
        %v3986 = vcombine.low %v3865, %v3881
        %v3987 = vcombine.high %v3865, %v3881
        %v3989 = vunpack.c.l.s4 1983009808
        %v3990 = vunpack.c.0.s8 %v3989
        %v3991 = vlaneseq
        %v3992 = vshrl.u32 %v3991, 7
        %v3993 = vsub.s32 %v3990, %v3992
        %v3994 = vrot.slane %v3986, %v3993
        %v3996 = vunpack.c.l.s4 1983009808
        %v3997 = vunpack.c.0.s8 %v3996
        %v3998 = vlaneseq
        %v3999 = vshrl.u32 %v3998, 7
        %v4000 = vsub.s32 %v3997, %v3999
        %v4001 = vrot.slane %v3987, %v4000
        %v4002 = vcombine.low %v3978, %v3994
        %v4003 = vcombine.high %v3978, %v3994
        %v4005 = vunpack.c.l.s4 1934713408
        %v4006 = vunpack.c.0.s8 %v4005
        %v4007 = vlaneseq
        %v4008 = vshrl.u32 %v4007, 7
        %v4009 = vsub.s32 %v4006, %v4008
        %v4010 = vrot.slane %v4002, %v4009
        %v4012 = vunpack.c.l.s4 1934713408
        %v4013 = vunpack.c.0.s8 %v4012
        %v4014 = vlaneseq
        %v4015 = vshrl.u32 %v4014, 7
        %v4016 = vsub.s32 %v4013, %v4015
        %v4017 = vrot.slane %v4003, %v4016
        %v4018 = vcombine.low %v3985, %v4001
        %v4019 = vcombine.high %v3985, %v4001
        %v4021 = vunpack.c.l.s4 1934713408
        %v4022 = vunpack.c.0.s8 %v4021
        %v4023 = vlaneseq
        %v4024 = vshrl.u32 %v4023, 7
        %v4025 = vsub.s32 %v4022, %v4024
        %v4026 = vrot.slane %v4018, %v4025
        %v4028 = vunpack.c.l.s4 1934713408
        %v4029 = vunpack.c.0.s8 %v4028
        %v4030 = vlaneseq
        %v4031 = vshrl.u32 %v4030, 7
        %v4032 = vsub.s32 %v4029, %v4031
        %v4033 = vrot.slane %v4019, %v4032
        %v4034 = vcombine.high %v4010, 0.0
        %v4035 = vcombine.high %v4017, 0.0
        %v4036 = vcombine.high %v4026, 0.0
        %v4037 = vcombine.high %v4033, 0.0
        %v4038 = vcombine.low %v3859, %v3875
        %v4039 = vcombine.high %v3859, %v3875
        %v4041 = vunpack.c.l.s4 1983009808
        %v4042 = vunpack.c.0.s8 %v4041
        %v4043 = vlaneseq
        %v4044 = vshrl.u32 %v4043, 7
        %v4045 = vsub.s32 %v4042, %v4044
        %v4046 = vrot.slane %v4038, %v4045
        %v4048 = vunpack.c.l.s4 1983009808
        %v4049 = vunpack.c.0.s8 %v4048
        %v4050 = vlaneseq
        %v4051 = vshrl.u32 %v4050, 7
        %v4052 = vsub.s32 %v4049, %v4051
        %v4053 = vrot.slane %v4039, %v4052
        %v4054 = vcombine.low %v3867, %v3883
        %v4055 = vcombine.high %v3867, %v3883
        %v4057 = vunpack.c.l.s4 1983009808
        %v4058 = vunpack.c.0.s8 %v4057
        %v4059 = vlaneseq
        %v4060 = vshrl.u32 %v4059, 7
        %v4061 = vsub.s32 %v4058, %v4060
        %v4062 = vrot.slane %v4054, %v4061
        %v4064 = vunpack.c.l.s4 1983009808
        %v4065 = vunpack.c.0.s8 %v4064
        %v4066 = vlaneseq
        %v4067 = vshrl.u32 %v4066, 7
        %v4068 = vsub.s32 %v4065, %v4067
        %v4069 = vrot.slane %v4055, %v4068
        %v4070 = vcombine.low %v4046, %v4062
        %v4071 = vcombine.high %v4046, %v4062
        %v4073 = vunpack.c.l.s4 1934713408
        %v4074 = vunpack.c.0.s8 %v4073
        %v4075 = vlaneseq
        %v4076 = vshrl.u32 %v4075, 7
        %v4077 = vsub.s32 %v4074, %v4076
        %v4078 = vrot.slane %v4070, %v4077
        %v4080 = vunpack.c.l.s4 1934713408
        %v4081 = vunpack.c.0.s8 %v4080
        %v4082 = vlaneseq
        %v4083 = vshrl.u32 %v4082, 7
        %v4084 = vsub.s32 %v4081, %v4083
        %v4085 = vrot.slane %v4071, %v4084
        %v4086 = vcombine.low %v4053, %v4069
        %v4087 = vcombine.high %v4053, %v4069
        %v4089 = vunpack.c.l.s4 1934713408
        %v4090 = vunpack.c.0.s8 %v4089
        %v4091 = vlaneseq
        %v4092 = vshrl.u32 %v4091, 7
        %v4093 = vsub.s32 %v4090, %v4092
        %v4094 = vrot.slane %v4086, %v4093
        %v4096 = vunpack.c.l.s4 1934713408
        %v4097 = vunpack.c.0.s8 %v4096
        %v4098 = vlaneseq
        %v4099 = vshrl.u32 %v4098, 7
        %v4100 = vsub.s32 %v4097, %v4099
        %v4101 = vrot.slane %v4087, %v4100
        %v4102 = vcombine.high %v4078, 0.0
        %v4103 = vcombine.high %v4085, 0.0
        %v4104 = vcombine.high %v4094, 0.0
        %v4105 = vcombine.high %v4101, 0.0
        %v4106 = vcombine.low %v3861, %v3877
        %v4107 = vcombine.high %v3861, %v3877
        %v4109 = vunpack.c.l.s4 1983009808
        %v4110 = vunpack.c.0.s8 %v4109
        %v4111 = vlaneseq
        %v4112 = vshrl.u32 %v4111, 7
        %v4113 = vsub.s32 %v4110, %v4112
        %v4114 = vrot.slane %v4106, %v4113
        %v4116 = vunpack.c.l.s4 1983009808
        %v4117 = vunpack.c.0.s8 %v4116
        %v4118 = vlaneseq
        %v4119 = vshrl.u32 %v4118, 7
        %v4120 = vsub.s32 %v4117, %v4119
        %v4121 = vrot.slane %v4107, %v4120
        %v4122 = vcombine.low %v3869, %v3885
        %v4123 = vcombine.high %v3869, %v3885
        %v4125 = vunpack.c.l.s4 1983009808
        %v4126 = vunpack.c.0.s8 %v4125
        %v4127 = vlaneseq
        %v4128 = vshrl.u32 %v4127, 7
        %v4129 = vsub.s32 %v4126, %v4128
        %v4130 = vrot.slane %v4122, %v4129
        %v4132 = vunpack.c.l.s4 1983009808
        %v4133 = vunpack.c.0.s8 %v4132
        %v4134 = vlaneseq
        %v4135 = vshrl.u32 %v4134, 7
        %v4136 = vsub.s32 %v4133, %v4135
        %v4137 = vrot.slane %v4123, %v4136
        %v4138 = vcombine.low %v4114, %v4130
        %v4139 = vcombine.high %v4114, %v4130
        %v4141 = vunpack.c.l.s4 1934713408
        %v4142 = vunpack.c.0.s8 %v4141
        %v4143 = vlaneseq
        %v4144 = vshrl.u32 %v4143, 7
        %v4145 = vsub.s32 %v4142, %v4144
        %v4146 = vrot.slane %v4138, %v4145
        %v4148 = vunpack.c.l.s4 1934713408
        %v4149 = vunpack.c.0.s8 %v4148
        %v4150 = vlaneseq
        %v4151 = vshrl.u32 %v4150, 7
        %v4152 = vsub.s32 %v4149, %v4151
        %v4153 = vrot.slane %v4139, %v4152
        %v4154 = vcombine.low %v4121, %v4137
        %v4155 = vcombine.high %v4121, %v4137
        %v4157 = vunpack.c.l.s4 1934713408
        %v4158 = vunpack.c.0.s8 %v4157
        %v4159 = vlaneseq
        %v4160 = vshrl.u32 %v4159, 7
        %v4161 = vsub.s32 %v4158, %v4160
        %v4162 = vrot.slane %v4154, %v4161
        %v4164 = vunpack.c.l.s4 1934713408
        %v4165 = vunpack.c.0.s8 %v4164
        %v4166 = vlaneseq
        %v4167 = vshrl.u32 %v4166, 7
        %v4168 = vsub.s32 %v4165, %v4167
        %v4169 = vrot.slane %v4155, %v4168
        %v4170 = vcombine.high %v4146, 0.0
        %v4171 = vcombine.high %v4153, 0.0
        %v4172 = vcombine.high %v4162, 0.0
        %v4173 = vcombine.high %v4169, 0.0
        %4175 = vrot.lane.b32.xlu0 %v3966, 32
        %v4176 = vpop.permute.xlu0 %4175
        %4179 = vrot.lane.b32.xlu0 %v3949, 64
        %v4180 = vpop.permute.xlu0 %4179
        %4183 = vrot.lane.b32.xlu0 %v3967, 96
        %v4184 = vpop.permute.xlu0 %4183
        %4187 = vrot.lane.b32.xlu0 %v3968, 32
        %v4188 = vpop.permute.xlu0 %4187
        %4191 = vrot.lane.b32.xlu0 %v3965, 64
        %v4192 = vpop.permute.xlu0 %4191
        %4195 = vrot.lane.b32.xlu0 %v3969, 96
        %v4196 = vpop.permute.xlu0 %4195
        %4199 = vrot.lane.b32.xlu0 %v4034, 32
        %v4200 = vpop.permute.xlu0 %4199
        %4203 = vrot.lane.b32.xlu0 %v4017, 64
        %v4204 = vpop.permute.xlu0 %4203
        %4207 = vrot.lane.b32.xlu0 %v4035, 96
        %v4208 = vpop.permute.xlu0 %4207
        %4211 = vrot.lane.b32.xlu0 %v4036, 32
        %v4212 = vpop.permute.xlu0 %4211
        %4215 = vrot.lane.b32.xlu0 %v4033, 64
        %v4216 = vpop.permute.xlu0 %4215
        %4219 = vrot.lane.b32.xlu0 %v4037, 96
        %v4220 = vpop.permute.xlu0 %4219
        %4223 = vrot.lane.b32.xlu0 %v4102, 32
        %v4224 = vpop.permute.xlu0 %4223
        %4227 = vrot.lane.b32.xlu0 %v4085, 64
        %v4228 = vpop.permute.xlu0 %4227
        %4231 = vrot.lane.b32.xlu0 %v4103, 96
        %v4232 = vpop.permute.xlu0 %4231
        %4235 = vrot.lane.b32.xlu0 %v4104, 32
        %v4236 = vpop.permute.xlu0 %4235
        %4239 = vrot.lane.b32.xlu0 %v4101, 64
        %v4240 = vpop.permute.xlu0 %4239
        %4243 = vrot.lane.b32.xlu0 %v4105, 96
        %v4244 = vpop.permute.xlu0 %4243
        %4247 = vrot.lane.b32.xlu0 %v4170, 32
        %v4248 = vpop.permute.xlu0 %4247
        %4251 = vrot.lane.b32.xlu0 %v4153, 64
        %v4252 = vpop.permute.xlu0 %4251
        %4255 = vrot.lane.b32.xlu0 %v4171, 96
        %v4256 = vpop.permute.xlu0 %4255
        %4259 = vrot.lane.b32.xlu0 %v4172, 32
        %v4260 = vpop.permute.xlu0 %4259
        %4263 = vrot.lane.b32.xlu0 %v4169, 64
        %v4264 = vpop.permute.xlu0 %4263
        %4267 = vrot.lane.b32.xlu0 %v4173, 96
        %v4268 = vpop.permute.xlu0 %4267
        %v4270 = vsel %vm557, %v3942, %v4176
        %v4271 = vsel %vm559, %v4270, %v4180
        %v4272 = vsel %vm561, %v4271, %v4184
        %v4273 = vsel %vm557, %v3958, %v4188
        %v4274 = vsel %vm559, %v4273, %v4192
        %v4275 = vsel %vm561, %v4274, %v4196
        %v4276 = vsel %vm557, %v4010, %v4200
        %v4277 = vsel %vm559, %v4276, %v4204
        %v4278 = vsel %vm561, %v4277, %v4208
        %v4279 = vsel %vm557, %v4026, %v4212
        %v4280 = vsel %vm559, %v4279, %v4216
        %v4281 = vsel %vm561, %v4280, %v4220
        %v4282 = vsel %vm557, %v4078, %v4224
        %v4283 = vsel %vm559, %v4282, %v4228
        %v4284 = vsel %vm561, %v4283, %v4232
        %v4285 = vsel %vm557, %v4094, %v4236
        %v4286 = vsel %vm559, %v4285, %v4240
        %v4287 = vsel %vm561, %v4286, %v4244
        %v4288 = vsel %vm557, %v4146, %v4248
        %v4289 = vsel %vm559, %v4288, %v4252
        %v4290 = vsel %vm561, %v4289, %v4256
        %v4291 = vsel %vm557, %v4162, %v4260
        %v4292 = vsel %vm559, %v4291, %v4264
        %v4293 = vsel %vm561, %v4292, %v4268
        %4294 = vst [vmem:[#allocation2 + $0x100] sm:$0xf] %v4272
        %4295 = vst [vmem:[#allocation2 + $0x108] sm:$0xf] %v4275
        %4296 = vst [vmem:[#allocation2 + $0x110] sm:$0xf] %v4278
        %4297 = vst [vmem:[#allocation2 + $0x118] sm:$0xf] %v4281
        %4298 = vst [vmem:[#allocation2 + $0x120] sm:$0xf] %v4284
        %4299 = vst [vmem:[#allocation2 + $0x128] sm:$0xf] %v4287
        %4300 = vst [vmem:[#allocation2 + $0x130] sm:$0xf] %v4290
        %4301 = vst [vmem:[#allocation2 + $0x138] sm:$0xf] %v4293
        %v4302 = vld [vmem:[%s1] sm:$0xff]
        %v4303 = vld [vmem:[#allocation2] sm:$0xff]
        %v4304 = vld [vmem:[#allocation2 + $0x8] sm:$0xff]
        %v4305 = vld [vmem:[#allocation2 + $0x10] sm:$0xff]
        %v4306 = vld [vmem:[#allocation2 + $0x18] sm:$0xff]
        %v4307 = vld [vmem:[#allocation2 + $0x20] sm:$0xff]
        %v4308 = vld [vmem:[#allocation2 + $0x28] sm:$0xff]
        %v4309 = vld [vmem:[#allocation2 + $0x30] sm:$0xff]
        %v4310 = vld [vmem:[#allocation2 + $0x38] sm:$0xff]
        %v4311 = vld [vmem:[#allocation2 + $0x40] sm:$0xff]
        %v4312 = vld [vmem:[#allocation2 + $0x48] sm:$0xff]
        %v4313 = vld [vmem:[#allocation2 + $0x50] sm:$0xff]
        %v4314 = vld [vmem:[#allocation2 + $0x58] sm:$0xff]
        %v4315 = vld [vmem:[#allocation2 + $0x60] sm:$0xff]
        %v4316 = vld [vmem:[#allocation2 + $0x68] sm:$0xff]
        %v4317 = vld [vmem:[#allocation2 + $0x70] sm:$0xff]
        %v4318 = vld [vmem:[#allocation2 + $0x78] sm:$0xff]
        %v4319 = vld [vmem:[#allocation2 + $0x80] sm:$0xff]
        %v4320 = vld [vmem:[#allocation2 + $0x88] sm:$0xff]
        %v4321 = vld [vmem:[#allocation2 + $0x90] sm:$0xff]
        %v4322 = vld [vmem:[#allocation2 + $0x98] sm:$0xff]
        %v4323 = vld [vmem:[#allocation2 + $0xa0] sm:$0xff]
        %v4324 = vld [vmem:[#allocation2 + $0xa8] sm:$0xff]
        %v4325 = vld [vmem:[#allocation2 + $0xb0] sm:$0xff]
        %v4326 = vld [vmem:[#allocation2 + $0xb8] sm:$0xff]
        %v4327 = vld [vmem:[#allocation2 + $0xc0] sm:$0xff]
        %v4328 = vld [vmem:[#allocation2 + $0xc8] sm:$0xff]
        %v4329 = vld [vmem:[#allocation2 + $0xd0] sm:$0xff]
        %v4330 = vld [vmem:[#allocation2 + $0xd8] sm:$0xff]
        %v4331 = vld [vmem:[#allocation2 + $0xe0] sm:$0xff]
        %v4332 = vld [vmem:[#allocation2 + $0xe8] sm:$0xff]
        %v4333 = vld [vmem:[#allocation2 + $0xf0] sm:$0xff]
        %v4334 = vld [vmem:[#allocation2 + $0xf8] sm:$0xff]
        %v4335 = vld [vmem:[#allocation2 + $0x100] sm:$0xf]
        %v4336 = vld [vmem:[#allocation2 + $0x108] sm:$0xf]
        %v4337 = vld [vmem:[#allocation2 + $0x110] sm:$0xf]
        %v4338 = vld [vmem:[#allocation2 + $0x118] sm:$0xf]
        %v4339 = vld [vmem:[#allocation2 + $0x120] sm:$0xf]
        %v4340 = vld [vmem:[#allocation2 + $0x128] sm:$0xf]
        %v4341 = vld [vmem:[#allocation2 + $0x130] sm:$0xf]
        %v4342 = vld [vmem:[#allocation2 + $0x138] sm:$0xf]
        %v4343 = vld [vmem:[%s2] sm:$0xff]
        %4345 = vset.pattern.permute.xlu0 0
        %4346 = vperm.xlu0 %4345, %v4343
        %v4347 = vpop.permute.xlu0 %4346
        %vm4349 = vcmask 293888
        %v4351 = vsel %vm4349, %v4302, 0
        %vm4353 = vcmask 1043456
        %v4355 = vsel %vm4353, %v4335, 0
        %v4358 = vsel %vm4353, %v4336, 0
        %v4361 = vsel %vm4353, %v4337, 0
        %v4364 = vsel %vm4353, %v4338, 0
        %v4367 = vsel %vm4353, %v4339, 0
        %v4370 = vsel %vm4353, %v4340, 0
        %v4373 = vsel %vm4353, %v4341, 0
        %v4376 = vsel %vm4353, %v4342, 0
        %4378 = vmatprep.subr.mxu0 0.0
        %4379 = vmatpush1.msra.mxu0 0.0
        %4380 = vmatprep.subr.mxu0 0.0
        %4381 = vmatpush1.msra.mxu0 0.0
        %4382 = vmatprep.subr.mxu0 0.0
        %4383 = vmatpush1.msra.mxu0 0.0
        %4384 = vmatprep.subr.mxu0 0.0
        %4385 = vmatpush1.msra.mxu0 0.0
        %4386 = vmatprep.subr.mxu0 0.0
        %4387 = vmatpush1.msra.mxu0 0.0
        %4388 = vmatprep.subr.mxu0 0.0
        %4389 = vmatpush1.msra.mxu0 0.0
        %4390 = vmatprep.subr.mxu0 0.0
        %4391 = vmatpush1.msra.mxu0 0.0
        %4392 = vmatprep.subr.mxu0 0.0
        %4393 = vmatpush1.msra.mxu0 0.0
        %4394 = vmatprep.subr.mxu0 0.0
        %4395 = vmatpush1.msra.mxu0 0.0
        %4396 = vmatprep.subr.mxu0 0.0
        %4397 = vmatpush1.msra.mxu0 0.0
        %4398 = vmatprep.subr.mxu0 0.0
        %4399 = vmatpush1.msra.mxu0 0.0
        %4400 = vmatprep.subr.mxu0 %v4358
        %4401 = vmatpush1.msra.mxu0 %v4355
        %4402 = vmatprep.subr.mxu0 %v4328
        %4403 = vmatpush1.msra.mxu0 %v4327
        %4404 = vmatprep.subr.mxu0 %v4320
        %4405 = vmatpush1.msra.mxu0 %v4319
        %4406 = vmatprep.subr.mxu0 %v4312
        %4407 = vmatpush1.msra.mxu0 %v4311
        %4408 = vmatprep.subr.mxu0 %v4304
        %4409 = vmatpush1.msra.mxu0 %v4303
        %4410 = vmatprep.subr.mxu0 0.0
        %4411 = vmatpush2.msra.mxu0 0.0
        %4412 = vmatprep.subr.mxu0 0.0
        %4413 = vmatpush2.msra.mxu0 0.0
        %4414 = vmatprep.subr.mxu0 0.0
        %4415 = vmatpush2.msra.mxu0 0.0
        %4416 = vmatprep.subr.mxu0 0.0
        %4417 = vmatpush2.msra.mxu0 0.0
        %4418 = vmatprep.subr.mxu0 0.0
        %4419 = vmatpush2.msra.mxu0 0.0
        %4420 = vmatprep.subr.mxu0 0.0
        %4421 = vmatpush2.msra.mxu0 0.0
        %4422 = vmatprep.subr.mxu0 0.0
        %4423 = vmatpush2.msra.mxu0 0.0
        %4424 = vmatprep.subr.mxu0 0.0
        %4425 = vmatpush2.msra.mxu0 0.0
        %4426 = vmatprep.subr.mxu0 0.0
        %4427 = vmatpush2.msra.mxu0 0.0
        %4428 = vmatprep.subr.mxu0 0.0
        %4429 = vmatpush2.msra.mxu0 0.0
        %4430 = vmatprep.subr.mxu0 0.0
        %4431 = vmatpush2.msra.mxu0 0.0
        %4432 = vmatprep.subr.mxu0 0.0
        %4433 = vmatpush2.msra.mxu0 0.0
        %4434 = vmatprep.subr.mxu0 0.0
        %4435 = vmatpush2.msra.mxu0 0.0
        %4436 = vmatprep.subr.mxu0 0.0
        %4437 = vmatpush2.msra.mxu0 0.0
        %4438 = vmatprep.subr.mxu0 0.0
        %4439 = vmatpush2.msra.mxu0 0.0
        %4440 = vmatprep.subr.mxu0 0.0
        %4441 = vmatpush2.msra.mxu0 0.0
        %4442 = vmatprep.mubr.f32.mxu0 0.0
        %4443 = vmatmul.mubr.f32.gmra.mxu0 %v4351
        %v4444 = vpop.f32.mrf.mxu0
        %v4445 = vadd.f32 %v4347, %v4444
        %v4446 = vpop.f32.mrf.mxu0
        %v4447 = vadd.f32 %v4347, %v4446
        %4448 = vdwg.mxu0
        %4449 = vmatprep.subr.mxu0 0.0
        %4450 = vmatpush1.msra.mxu0 0.0
        %4451 = vmatprep.subr.mxu0 0.0
        %4452 = vmatpush1.msra.mxu0 0.0
        %4453 = vmatprep.subr.mxu0 0.0
        %4454 = vmatpush1.msra.mxu0 0.0
        %4455 = vmatprep.subr.mxu0 0.0
        %4456 = vmatpush1.msra.mxu0 0.0
        %4457 = vmatprep.subr.mxu0 0.0
        %4458 = vmatpush1.msra.mxu0 0.0
        %4459 = vmatprep.subr.mxu0 0.0
        %4460 = vmatpush1.msra.mxu0 0.0
        %4461 = vmatprep.subr.mxu0 0.0
        %4462 = vmatpush1.msra.mxu0 0.0
        %4463 = vmatprep.subr.mxu0 0.0
        %4464 = vmatpush1.msra.mxu0 0.0
        %4465 = vmatprep.subr.mxu0 0.0
        %4466 = vmatpush1.msra.mxu0 0.0
        %4467 = vmatprep.subr.mxu0 0.0
        %4468 = vmatpush1.msra.mxu0 0.0
        %4469 = vmatprep.subr.mxu0 0.0
        %4470 = vmatpush1.msra.mxu0 0.0
        %4471 = vmatprep.subr.mxu0 %v4364
        %4472 = vmatpush1.msra.mxu0 %v4361
        %4473 = vmatprep.subr.mxu0 %v4330
        %4474 = vmatpush1.msra.mxu0 %v4329
        %4475 = vmatprep.subr.mxu0 %v4322
        %4476 = vmatpush1.msra.mxu0 %v4321
        %4477 = vmatprep.subr.mxu0 %v4314
        %4478 = vmatpush1.msra.mxu0 %v4313
        %4479 = vmatprep.subr.mxu0 %v4306
        %4480 = vmatpush1.msra.mxu0 %v4305
        %4481 = vmatprep.subr.mxu0 0.0
        %4482 = vmatpush2.msra.mxu0 0.0
        %4483 = vmatprep.subr.mxu0 0.0
        %4484 = vmatpush2.msra.mxu0 0.0
        %4485 = vmatprep.subr.mxu0 0.0
        %4486 = vmatpush2.msra.mxu0 0.0
        %4487 = vmatprep.subr.mxu0 0.0
        %4488 = vmatpush2.msra.mxu0 0.0
        %4489 = vmatprep.subr.mxu0 0.0
        %4490 = vmatpush2.msra.mxu0 0.0
        %4491 = vmatprep.subr.mxu0 0.0
        %4492 = vmatpush2.msra.mxu0 0.0
        %4493 = vmatprep.subr.mxu0 0.0
        %4494 = vmatpush2.msra.mxu0 0.0
        %4495 = vmatprep.subr.mxu0 0.0
        %4496 = vmatpush2.msra.mxu0 0.0
        %4497 = vmatprep.subr.mxu0 0.0
        %4498 = vmatpush2.msra.mxu0 0.0
        %4499 = vmatprep.subr.mxu0 0.0
        %4500 = vmatpush2.msra.mxu0 0.0
        %4501 = vmatprep.subr.mxu0 0.0
        %4502 = vmatpush2.msra.mxu0 0.0
        %4503 = vmatprep.subr.mxu0 0.0
        %4504 = vmatpush2.msra.mxu0 0.0
        %4505 = vmatprep.subr.mxu0 0.0
        %4506 = vmatpush2.msra.mxu0 0.0
        %4507 = vmatprep.subr.mxu0 0.0
        %4508 = vmatpush2.msra.mxu0 0.0
        %4509 = vmatprep.subr.mxu0 0.0
        %4510 = vmatpush2.msra.mxu0 0.0
        %4511 = vmatprep.subr.mxu0 0.0
        %4512 = vmatpush2.msra.mxu0 0.0
        %4513 = vmatprep.mubr.f32.mxu0 0.0
        %4514 = vmatmul.mubr.f32.gmra.mxu0 %v4351
        %v4515 = vpop.f32.mrf.mxu0
        %v4516 = vadd.f32 %v4347, %v4515
        %v4517 = vpop.f32.mrf.mxu0
        %v4518 = vadd.f32 %v4347, %v4517
        %4519 = vdwg.mxu0
        %4520 = vmatprep.subr.mxu0 0.0
        %4521 = vmatpush1.msra.mxu0 0.0
        %4522 = vmatprep.subr.mxu0 0.0
        %4523 = vmatpush1.msra.mxu0 0.0
        %4524 = vmatprep.subr.mxu0 0.0
        %4525 = vmatpush1.msra.mxu0 0.0
        %4526 = vmatprep.subr.mxu0 0.0
        %4527 = vmatpush1.msra.mxu0 0.0
        %4528 = vmatprep.subr.mxu0 0.0
        %4529 = vmatpush1.msra.mxu0 0.0
        %4530 = vmatprep.subr.mxu0 0.0
        %4531 = vmatpush1.msra.mxu0 0.0
        %4532 = vmatprep.subr.mxu0 0.0
        %4533 = vmatpush1.msra.mxu0 0.0
        %4534 = vmatprep.subr.mxu0 0.0
        %4535 = vmatpush1.msra.mxu0 0.0
        %4536 = vmatprep.subr.mxu0 0.0
        %4537 = vmatpush1.msra.mxu0 0.0
        %4538 = vmatprep.subr.mxu0 0.0
        %4539 = vmatpush1.msra.mxu0 0.0
        %4540 = vmatprep.subr.mxu0 0.0
        %4541 = vmatpush1.msra.mxu0 0.0
        %4542 = vmatprep.subr.mxu0 %v4370
        %4543 = vmatpush1.msra.mxu0 %v4367
        %4544 = vmatprep.subr.mxu0 %v4332
        %4545 = vmatpush1.msra.mxu0 %v4331
        %4546 = vmatprep.subr.mxu0 %v4324
        %4547 = vmatpush1.msra.mxu0 %v4323
        %4548 = vmatprep.subr.mxu0 %v4316
        %4549 = vmatpush1.msra.mxu0 %v4315
        %4550 = vmatprep.subr.mxu0 %v4308
        %4551 = vmatpush1.msra.mxu0 %v4307
        %4552 = vmatprep.subr.mxu0 0.0
        %4553 = vmatpush2.msra.mxu0 0.0
        %4554 = vmatprep.subr.mxu0 0.0
        %4555 = vmatpush2.msra.mxu0 0.0
        %4556 = vmatprep.subr.mxu0 0.0
        %4557 = vmatpush2.msra.mxu0 0.0
        %4558 = vmatprep.subr.mxu0 0.0
        %4559 = vmatpush2.msra.mxu0 0.0
        %4560 = vmatprep.subr.mxu0 0.0
        %4561 = vmatpush2.msra.mxu0 0.0
        %4562 = vmatprep.subr.mxu0 0.0
        %4563 = vmatpush2.msra.mxu0 0.0
        %4564 = vmatprep.subr.mxu0 0.0
        %4565 = vmatpush2.msra.mxu0 0.0
        %4566 = vmatprep.subr.mxu0 0.0
        %4567 = vmatpush2.msra.mxu0 0.0
        %4568 = vmatprep.subr.mxu0 0.0
        %4569 = vmatpush2.msra.mxu0 0.0
        %4570 = vmatprep.subr.mxu0 0.0
        %4571 = vmatpush2.msra.mxu0 0.0
        %4572 = vmatprep.subr.mxu0 0.0
        %4573 = vmatpush2.msra.mxu0 0.0
        %4574 = vmatprep.subr.mxu0 0.0
        %4575 = vmatpush2.msra.mxu0 0.0
        %4576 = vmatprep.subr.mxu0 0.0
        %4577 = vmatpush2.msra.mxu0 0.0
        %4578 = vmatprep.subr.mxu0 0.0
        %4579 = vmatpush2.msra.mxu0 0.0
        %4580 = vmatprep.subr.mxu0 0.0
        %4581 = vmatpush2.msra.mxu0 0.0
        %4582 = vmatprep.subr.mxu0 0.0
        %4583 = vmatpush2.msra.mxu0 0.0
        %4584 = vmatprep.mubr.f32.mxu0 0.0
        %4585 = vmatmul.mubr.f32.gmra.mxu0 %v4351
        %v4586 = vpop.f32.mrf.mxu0
        %v4587 = vadd.f32 %v4347, %v4586
        %v4588 = vpop.f32.mrf.mxu0
        %v4589 = vadd.f32 %v4347, %v4588
        %4590 = vdwg.mxu0
        %4591 = vmatprep.subr.mxu0 0.0
        %4592 = vmatpush1.msra.mxu0 0.0
        %4593 = vmatprep.subr.mxu0 0.0
        %4594 = vmatpush1.msra.mxu0 0.0
        %4595 = vmatprep.subr.mxu0 0.0
        %4596 = vmatpush1.msra.mxu0 0.0
        %4597 = vmatprep.subr.mxu0 0.0
        %4598 = vmatpush1.msra.mxu0 0.0
        %4599 = vmatprep.subr.mxu0 0.0
        %4600 = vmatpush1.msra.mxu0 0.0
        %4601 = vmatprep.subr.mxu0 0.0
        %4602 = vmatpush1.msra.mxu0 0.0
        %4603 = vmatprep.subr.mxu0 0.0
        %4604 = vmatpush1.msra.mxu0 0.0
        %4605 = vmatprep.subr.mxu0 0.0
        %4606 = vmatpush1.msra.mxu0 0.0
        %4607 = vmatprep.subr.mxu0 0.0
        %4608 = vmatpush1.msra.mxu0 0.0
        %4609 = vmatprep.subr.mxu0 0.0
        %4610 = vmatpush1.msra.mxu0 0.0
        %4611 = vmatprep.subr.mxu0 0.0
        %4612 = vmatpush1.msra.mxu0 0.0
        %4613 = vmatprep.subr.mxu0 %v4376
        %4614 = vmatpush1.msra.mxu0 %v4373
        %4615 = vmatprep.subr.mxu0 %v4334
        %4616 = vmatpush1.msra.mxu0 %v4333
        %4617 = vmatprep.subr.mxu0 %v4326
        %4618 = vmatpush1.msra.mxu0 %v4325
        %4619 = vmatprep.subr.mxu0 %v4318
        %4620 = vmatpush1.msra.mxu0 %v4317
        %4621 = vmatprep.subr.mxu0 %v4310
        %4622 = vmatpush1.msra.mxu0 %v4309
        %4623 = vmatprep.subr.mxu0 0.0
        %4624 = vmatpush2.msra.mxu0 0.0
        %4625 = vmatprep.subr.mxu0 0.0
        %4626 = vmatpush2.msra.mxu0 0.0
        %4627 = vmatprep.subr.mxu0 0.0
        %4628 = vmatpush2.msra.mxu0 0.0
        %4629 = vmatprep.subr.mxu0 0.0
        %4630 = vmatpush2.msra.mxu0 0.0
        %4631 = vmatprep.subr.mxu0 0.0
        %4632 = vmatpush2.msra.mxu0 0.0
        %4633 = vmatprep.subr.mxu0 0.0
        %4634 = vmatpush2.msra.mxu0 0.0
        %4635 = vmatprep.subr.mxu0 0.0
        %4636 = vmatpush2.msra.mxu0 0.0
        %4637 = vmatprep.subr.mxu0 0.0
        %4638 = vmatpush2.msra.mxu0 0.0
        %4639 = vmatprep.subr.mxu0 0.0
        %4640 = vmatpush2.msra.mxu0 0.0
        %4641 = vmatprep.subr.mxu0 0.0
        %4642 = vmatpush2.msra.mxu0 0.0
        %4643 = vmatprep.subr.mxu0 0.0
        %4644 = vmatpush2.msra.mxu0 0.0
        %4645 = vmatprep.subr.mxu0 0.0
        %4646 = vmatpush2.msra.mxu0 0.0
        %4647 = vmatprep.subr.mxu0 0.0
        %4648 = vmatpush2.msra.mxu0 0.0
        %4649 = vmatprep.subr.mxu0 0.0
        %4650 = vmatpush2.msra.mxu0 0.0
        %4651 = vmatprep.subr.mxu0 0.0
        %4652 = vmatpush2.msra.mxu0 0.0
        %4653 = vmatprep.subr.mxu0 0.0
        %4654 = vmatpush2.msra.mxu0 0.0
        %4655 = vmatprep.mubr.f32.mxu0 0.0
        %4656 = vmatmul.mubr.f32.gmra.mxu0 %v4351
        %v4657 = vpop.f32.mrf.mxu0
        %v4658 = vadd.f32 %v4347, %v4657
        %v4659 = vpop.f32.mrf.mxu0
        %v4660 = vadd.f32 %v4347, %v4659
        %4661 = vdwg.mxu0
        %4662 = vst [vmem:[%s163] sm:$0xff] %v4445
        %4663 = vst [vmem:[%s163 + $0x8] sm:$0xff] %v4447
        %4664 = vst [vmem:[%s163 + $0x10] sm:$0xff] %v4516
        %4665 = vst [vmem:[%s163 + $0x18] sm:$0xff] %v4518
        %4666 = vst [vmem:[%s163 + $0x20] sm:$0xff] %v4587
        %4667 = vst [vmem:[%s163 + $0x28] sm:$0xff] %v4589
        %4668 = vst [vmem:[%s163 + $0x30] sm:$0xff] %v4658
        %4669 = vst [vmem:[%s163 + $0x38] sm:$0xff] %v4660
        %s4670 = sand.u32 %s93, 1
        %s4671 = scalar_lea.sflag [#allocation4], %s4670
        %s4672 = sand.u32 %s93, 1
        %s4673 = smul.addr %s4672, 64
        %s4674 = scalar_lea.vmem [#allocation3], %s4673
        // Predicated region
        $region33: #{tpu_custom_call.1} parent=31 // pred_check
          %p4675 = pneg %p103
        $region34: #{tpu_custom_call.1} parent=31 // pred_check_branch
          %4677 = sbr.rel (%p4675) target = $region36
        $region35: #{tpu_custom_call.1} parent=31 // pred_region
          %s4679 = ssub.s32 1024, 1024
          %4680 = vsyncadd %s4671, %s4679
          %s4681 = smul.addr %s17, 8
          %s4682 = smul.addr %s4681, 128
          %s4683 = scalar_lea.hbm %s3, %s4682
          %s4685 = sshll.u32 %s4674, 4
          %s4686 = int_to_ptr.vmem [resolvable:$true] %s4685
          %4688 = dma.vmem_to_hbm [thread:$0]  %s4686, 1024, %s4683, %s4671
        $region36: #{tpu_custom_call.1} parent=31 // pred_fallthru
          _
      $region32: #{tpu_custom_call.1} parent=5 // pred_fallthru
        _
      %p4689 = scmp.le.s32.totalorder 2, %s12
      // Predicated region
      $region37: #{tpu_custom_call.1} parent=5 // pred_check
        %p4690 = pneg %p4689
      $region38: #{tpu_custom_call.1} parent=5 // pred_check_branch
        %4692 = sbr.rel (%p4690) target = $region40
      $region39: #{tpu_custom_call.1} parent=5 // pred_region
        %s4693 = ssub.s32 %s12, 2
        // Predicated region
        $region41: #{tpu_custom_call.1} parent=39 // pred_check
          %p4694 = pneg %p109
        $region42: #{tpu_custom_call.1} parent=39 // pred_check_branch
          %4696 = sbr.rel (%p4694) target = $region44
        $region43: #{tpu_custom_call.1} parent=39 // pred_region
          %s4697 = sand.u32 %s94, 1
          %s4698 = scalar_lea.sflag [#allocation4], %s4697
          %s4699 = sand.u32 %s94, 1
          %s4700 = smul.addr %s4699, 64
          %s4701 = scalar_lea.vmem [#allocation3], %s4700
          %4702 = dma.done %s4698, 1024
        $region44: #{tpu_custom_call.1} parent=39 // pred_fallthru
          _
      $region40: #{tpu_custom_call.1} parent=5 // pred_fallthru
        _
    $region6: #{tpu_custom_call.1} parent=1 // loop_footer
      %s16 = sadd.s32 1, %s12
    $region7: #{tpu_custom_call.1} parent=1 // loop_footer_branch
      %11 = sbr.rel target = $region3
    $region8: #{tpu_custom_call.1} parent=1 // loop_exit
      _
    %4703 = vsyncpa [#allocation4], 1
    %s4704 = scalar_lea.sflag [#allocation4], 1
    %4705 = vsyncpa %s4704, 1

</llo_original>
